<compile_context>
chip_gen: v5e
topology: v5e:2x2
jax: 0.10.0
libtpu: 0.0.40
codegen_flags: <defaults>
</compile_context>

<pallas_src>
import functools

import jax
import jax.numpy as jnp
from jax.experimental import pallas as pl
from jax.experimental.pallas import tpu as pltpu


def _rup(x, m):
    return ((x + m - 1) // m) * m


def _pick_tile(n, tile_max, align, max_pad_frac=0.125):
    """Tile size (multiple of `align`, <= tile_max) + padded extent for axis n."""
    nr = _rup(n, align)
    if nr <= tile_max:
        return nr, nr                      # single full-extent block, no padding
    t = tile_max
    while t > align and _rup(n, t) - nr > max(int(nr * max_pad_frac), align):
        t //= 2
    return t, _rup(n, t)


# ----------------------------------------------------------------------------
# Conv GEMM (spatial-as-M, Cout-as-N) with fused InstanceNorm stats epilogue
# ----------------------------------------------------------------------------
def _conv_gemm_stats_kernel(a_ref, b_ref, o_ref, sum_ref, sq_ref, *, cout):
    """Single-K-step conv GEMM + fused stats.

    a: (1, tm, K) bf16 patches; b: (K, Np) bf16 weights (Np = Cout padded to 128).
    o: (1, tm, cout); sum/sq: (1, 1, Np) f32 accumulators, VMEM-resident across
    the spatial-tile grid axis (axis 1, marked "arbitrary")."""
    @pl.when(pl.program_id(1) == 0)
    def _():
        sum_ref[...] = jnp.zeros_like(sum_ref)
        sq_ref[...] = jnp.zeros_like(sq_ref)

    acc = jnp.dot(a_ref[0], b_ref[...], preferred_element_type=jnp.float32)
    o_ref[0] = acc[:, :cout].astype(o_ref.dtype)
    # Padded spatial rows are zero -> contribute nothing to the stats.
    sum_ref[0] += jnp.sum(acc, axis=0, keepdims=True)
    sq_ref[0] += jnp.sum(acc * acc, axis=0, keepdims=True)


def _conv_gemm_stats_kernel_ktiled(a_ref, b_ref, o_ref, sum_ref, sq_ref,
                                   acc_ref, *, cout):
    """K-tiled variant (only used when K exceeds the full-extent budget)."""
    i = pl.program_id(1)
    k = pl.program_id(2)

    @pl.when(k == 0)
    def _():
        acc_ref[...] = jnp.zeros_like(acc_ref)

    @pl.when(jnp.logical_and(i == 0, k == 0))
    def _():
        sum_ref[...] = jnp.zeros_like(sum_ref)
        sq_ref[...] = jnp.zeros_like(sq_ref)

    acc_ref[...] += jnp.dot(a_ref[0], b_ref[...],
                            preferred_element_type=jnp.float32)

    @pl.when(k == pl.num_programs(2) - 1)
    def _():
        acc = acc_ref[...]
        o_ref[0] = acc[:, :cout].astype(o_ref.dtype)
        sum_ref[0] += jnp.sum(acc, axis=0, keepdims=True)
        sq_ref[0] += jnp.sum(acc * acc, axis=0, keepdims=True)


def conv_gemm_stats(col, wr, cout, *, out_dtype=jnp.bfloat16,
                    tm_max=256, tk_full_max=2048, tk_max=512):
    """col: (B, S, K) bf16 patches, wr: (K, Np) bf16 weights (Np % 128 == 0).

    Returns y (B, Mp, cout) `out_dtype`, sums (B, 1, Np) f32, sumsqs (B, 1, Np)
    f32 — per-(sample, channel) spatial sums of the f32 GEMM output (padded
    rows / padded channels contribute exactly zero)."""
    B, S, K = col.shape
    Kw, Np = wr.shape
    assert Kw == K and Np % 128 == 0

    tm, Mp = _pick_tile(S, tm_max, 16)     # bf16 packs 16 rows per sublane pair
    if K <= tk_full_max:
        tk, Kp = K, K                      # full-extent K: single GEMM step
    else:
        tk, Kp = _pick_tile(K, tk_max, 128)
    if (Mp, Kp) != (S, K):
        col = jnp.pad(col, ((0, 0), (0, Mp - S), (0, Kp - K)))
    if Kp != K:
        wr = jnp.pad(wr, ((0, Kp - K), (0, 0)))

    out_shape = (jax.ShapeDtypeStruct((B, Mp, cout), out_dtype),
                 jax.ShapeDtypeStruct((B, 1, Np), jnp.float32),
                 jax.ShapeDtypeStruct((B, 1, Np), jnp.float32))

    if Kp == tk:
        # Common case: single K step -> no f32 scratch, direct dot->store.
        return pl.pallas_call(
            functools.partial(_conv_gemm_stats_kernel, cout=cout),
            out_shape=out_shape,
            grid=(B, Mp // tm),
            in_specs=[pl.BlockSpec((1, tm, Kp), lambda b, i: (b, i, 0)),
                      pl.BlockSpec((Kp, Np), lambda b, i: (0, 0))],
            out_specs=(pl.BlockSpec((1, tm, cout), lambda b, i: (b, i, 0)),
                       pl.BlockSpec((1, 1, Np), lambda b, i: (b, 0, 0)),
                       pl.BlockSpec((1, 1, Np), lambda b, i: (b, 0, 0))),
            compiler_params=pltpu.CompilerParams(
                dimension_semantics=("parallel", "arbitrary")),
        )(col, wr)

    return pl.pallas_call(
        functools.partial(_conv_gemm_stats_kernel_ktiled, cout=cout),
        out_shape=out_shape,
        grid=(B, Mp // tm, Kp // tk),
        in_specs=[pl.BlockSpec((1, tm, tk), lambda b, i, k: (b, i, k)),
                  pl.BlockSpec((tk, Np), lambda b, i, k: (k, 0))],
        out_specs=(pl.BlockSpec((1, tm, cout), lambda b, i, k: (b, i, 0)),
                   pl.BlockSpec((1, 1, Np), lambda b, i, k: (b, 0, 0)),
                   pl.BlockSpec((1, 1, Np), lambda b, i, k: (b, 0, 0))),
        scratch_shapes=[pltpu.VMEM((tm, Np), jnp.float32)],
        compiler_params=pltpu.CompilerParams(
            dimension_semantics=("parallel", "arbitrary", "arbitrary")),
    )(col, wr)


# ----------------------------------------------------------------------------
# Norm apply: y = LeakyReLU(scale * x + shift), per-(sample, channel) affine
# ----------------------------------------------------------------------------
def _scale_shift_lrelu_kernel(x_ref, sc_ref, sh_ref, o_ref, *, slope):
    y = x_ref[0].astype(jnp.float32) * sc_ref[0] + sh_ref[0]
    o_ref[0] = jnp.where(y >= 0.0, y, slope * y).astype(o_ref.dtype)


def apply_norm_lrelu(y, scale, shift, *, slope=0.01, out_dtype=jnp.bfloat16,
                     tile_rows_max=8192):
    """y: (B, Mp, C) bf16; scale/shift: (B, 1, C) f32."""
    B, Mp, C = y.shape
    t = 8
    while t * 2 <= tile_rows_max and Mp % (t * 2) == 0:
        t *= 2
    return pl.pallas_call(
        functools.partial(_scale_shift_lrelu_kernel, slope=slope),
        out_shape=jax.ShapeDtypeStruct((B, Mp, C), out_dtype),
        grid=(B, Mp // t),
        in_specs=[pl.BlockSpec((1, t, C), lambda b, i: (b, i, 0)),
                  pl.BlockSpec((1, 1, C), lambda b, i: (b, 0, 0)),
                  pl.BlockSpec((1, 1, C), lambda b, i: (b, 0, 0))],
        out_specs=pl.BlockSpec((1, t, C), lambda b, i: (b, i, 0)),
        compiler_params=pltpu.CompilerParams(
            dimension_semantics=("parallel", "parallel")),
    )(y, scale, shift)


# ----------------------------------------------------------------------------
# Conv3d = channel-last im2col (bf16, XLA glue) + fused Pallas GEMM + norm
# ----------------------------------------------------------------------------
def im2col3d_cl(x, ksize, stride, pad):
    """Channel-last im2col: x (B, D, H, W, C) -> (B, Do*Ho*Wo, k^3 * C)."""
    B, D, H, W, C = x.shape
    xp = jnp.pad(x, ((0, 0), (pad[0], pad[0]), (pad[1], pad[1]),
                     (pad[2], pad[2]), (0, 0)))
    Do = (D + 2 * pad[0] - ksize[0]) // stride[0] + 1
    Ho = (H + 2 * pad[1] - ksize[1]) // stride[1] + 1
    Wo = (W + 2 * pad[2] - ksize[2]) // stride[2] + 1
    cols = []
    for kd in range(ksize[0]):
        for kh in range(ksize[1]):
            for kw in range(ksize[2]):
                cols.append(xp[:, kd:kd + Do * stride[0]:stride[0],
                               kh:kh + Ho * stride[1]:stride[1],
                               kw:kw + Wo * stride[2]:stride[2], :])
    col = jnp.stack(cols, axis=4)          # (B, Do, Ho, Wo, k^3, C)
    nk = ksize[0] * ksize[1] * ksize[2]
    return col.reshape(B, Do * Ho * Wo, nk * C), (Do, Ho, Wo)


def conv3d_inorm_lrelu(x_cl, w, gamma, beta, stride, pad, *,
                       eps=1e-5, slope=0.01, out_dtype=jnp.bfloat16):
    """One Conv3d(no bias) -> InstanceNorm3d(affine) -> LeakyReLU stage.

    x_cl: (B, D, H, W, Cin) channel-last.  The conv bias is intentionally
    omitted: InstanceNorm subtracts the per-channel spatial mean immediately
    after, so a per-channel bias cancels exactly.  This fusion is only valid
    because the norm directly follows the conv (documented invariant)."""
    Cout = w.shape[0]
    ks = tuple(w.shape[2:])
    col, (Do, Ho, Wo) = im2col3d_cl(x_cl.astype(jnp.bfloat16), ks, stride, pad)
    B, S, K = col.shape

    Np = _rup(Cout, 128)
    # Weight -> (tap-major, Cin-minor) rows matching the im2col column order.
    wr = jnp.transpose(w, (2, 3, 4, 1, 0)).reshape(K, Cout).astype(jnp.bfloat16)
    if Np != Cout:
        wr = jnp.pad(wr, ((0, 0), (0, Np - Cout)))

    y, sums, sqs = conv_gemm_stats(col, wr, Cout, out_dtype=jnp.bfloat16)

    # Finish the tiny (B, Cout) InstanceNorm statistics in XLA.
    n = jnp.float32(S)
    mean = sums[:, 0, :Cout] / n
    var = jnp.maximum(sqs[:, 0, :Cout] / n - mean * mean, 0.0)
    inv = jax.lax.rsqrt(var + eps)
    scale = gamma.astype(jnp.float32)[None, :] * inv            # (B, Cout)
    shift = beta.astype(jnp.float32)[None, :] - mean * scale    # (B, Cout)

    y = apply_norm_lrelu(y, scale[:, None, :], shift[:, None, :],
                         slope=slope, out_dtype=out_dtype)
    if y.shape[1] != S:
        y = y[:, :S]
    return y.reshape(B, Do, Ho, Wo, Cout)


# ----------------------------------------------------------------------------
# DoubleConvNormNonlinBlock forward (batched, channel-last internally)
# ----------------------------------------------------------------------------
def double_conv_block_forward(x, p, kernel_size, first_stride):
    """x: (B, Cin, D, H, W) NCDHW -> (B, Cout, D', H', W') float32.

    Conv biases p['b1'], p['b2'] are intentionally unused: each conv is
    immediately followed by InstanceNorm, which removes any per-channel
    constant, so the biases cancel exactly."""
    pad = tuple(1 if k == 3 else 0 for k in kernel_size)
    x_cl = jnp.transpose(x, (0, 2, 3, 4, 1))           # channel-last
    y = conv3d_inorm_lrelu(x_cl, p["w1"], p["g1"], p["be1"],
                           tuple(first_stride), pad, out_dtype=jnp.bfloat16)
    y = conv3d_inorm_lrelu(y, p["w2"], p["g2"], p["be2"],
                           (1, 1, 1), pad, out_dtype=jnp.float32)
    return jnp.transpose(y, (0, 4, 1, 2, 3))           # back to NCDHW


# ----------------------------------------------------------------------------
# Pure-JAX f32 reference (with conv bias, exactly as the PyTorch module)
# ----------------------------------------------------------------------------
def reference_forward(x, p, kernel_size, first_stride):
    pad = tuple(1 if k == 3 else 0 for k in kernel_size)
    pads = [(pd, pd) for pd in pad]

    def conv(z, w, b, stride):
        y = jax.lax.conv_general_dilated(
            z, w, window_strides=tuple(stride), padding=pads,
            dimension_numbers=("NCDHW", "OIDHW", "NCDHW"))
        return y + b[None, :, None, None, None]

    def inorm_lrelu(y, g, b):
        mean = y.mean(axis=(2, 3, 4), keepdims=True)
        var = y.var(axis=(2, 3, 4), keepdims=True)
        yn = (y - mean) * jax.lax.rsqrt(var + 1e-5)
        yn = yn * g[None, :, None, None, None] + b[None, :, None, None, None]
        return jnp.where(yn >= 0.0, yn, 0.01 * yn)

    y = conv(x, p["w1"], p["b1"], first_stride)
    y = inorm_lrelu(y, p["g1"], p["be1"])
    y = conv(y, p["w2"], p["b2"], (1, 1, 1))
    y = inorm_lrelu(y, p["g2"], p["be2"])
    return y


# ----------------------------------------------------------------------------
if __name__ == "__main__":
    key = jax.random.PRNGKey(0)
    B, Cin, Cout = 2, 4, 32
    D = H = W = 16
    kernel_size = (3, 3, 3)
    first_stride = (2, 2, 2)

    ks = [jax.random.fold_in(key, i) for i in range(9)]
    x = jax.random.normal(ks[0], (B, Cin, D, H, W), jnp.float32)
    bnd1 = 1.0 / float(Cin * 27) ** 0.5
    bnd2 = 1.0 / float(Cout * 27) ** 0.5
    params = dict(
        w1=jax.random.uniform(ks[1], (Cout, Cin) + kernel_size, jnp.float32, -bnd1, bnd1),
        b1=jax.random.uniform(ks[2], (Cout,), jnp.float32, -bnd1, bnd1),
        g1=jax.random.uniform(ks[3], (Cout,), jnp.float32, 0.5, 1.5),
        be1=jax.random.uniform(ks[4], (Cout,), jnp.float32, -0.5, 0.5),
        w2=jax.random.uniform(ks[5], (Cout, Cout) + kernel_size, jnp.float32, -bnd2, bnd2),
        b2=jax.random.uniform(ks[6], (Cout,), jnp.float32, -bnd2, bnd2),
        g2=jax.random.uniform(ks[7], (Cout,), jnp.float32, 0.5, 1.5),
        be2=jax.random.uniform(ks[8], (Cout,), jnp.float32, -0.5, 0.5),
    )

    fwd = jax.jit(functools.partial(double_conv_block_forward,
                                    kernel_size=kernel_size,
                                    first_stride=first_stride))
    out = fwd(x, params)
    jax.block_until_ready(out)

    Do = (D + 2 - 3) // first_stride[0] + 1
    assert out.shape == (B, Cout, Do, Do, Do), out.shape
    assert bool(jnp.all(jnp.isfinite(out)))

    # bf16 operands / activations => loose tolerance against the f32 reference.
    ref = reference_forward(x, params, kernel_size, first_stride)
    max_err = float(jnp.max(jnp.abs(out - ref)))
    mean_err = float(jnp.mean(jnp.abs(out - ref)))
    assert max_err < 0.35 and mean_err < 0.06, (max_err, mean_err)

    print("KERNEL_OK")
</pallas_src>

<mosaic_0001>
module attributes {stable_mosaic.version = 11 : i64} {
  func.func @_conv_gemm_stats_kernel(%arg0: i32, %arg1: i32, %arg2: memref<1x256x108xbf16, #tpu.memory_space<vmem>>, %arg3: memref<108x128xbf16, #tpu.memory_space<vmem>>, %arg4: memref<1x256x32xbf16, #tpu.memory_space<vmem>>, %arg5: memref<1x1x128xf32, #tpu.memory_space<vmem>>, %arg6: memref<1x1x128xf32, #tpu.memory_space<vmem>>) attributes {dimension_semantics = [#tpu.dimension_semantics<parallel>, #tpu.dimension_semantics<arbitrary>], iteration_bounds = array<i64: 2, 2>, scalar_prefetch = 0 : i64, scratch_operands = 0 : i64, tpu.core_type = #tpu.core_type<tc>, window_params = [{transform_indices = @transform_0, window_bounds = array<i64: 1, 256, 108>}, {pipeline_mode = #tpu.pipeline_mode<synchronous>, transform_indices = @transform_1, window_bounds = array<i64: 108, 128>}, {transform_indices = @transform_2, window_bounds = array<i64: 1, 256, 32>}, {transform_indices = @transform_3, window_bounds = array<i64: 1, 1, 128>}, {transform_indices = @transform_4, window_bounds = array<i64: 1, 1, 128>}]} {
    %c0_i32 = arith.constant 0 : i32
    %0 = arith.cmpi eq, %arg1, %c0_i32 : i32
    %1 = arith.extui %0 : i1 to i32
    %c0_i32_0 = arith.constant 0 : i32
    %2 = arith.cmpi ne, %1, %c0_i32_0 : i32
    scf.if %2 {
      %cst_22 = arith.constant 0.000000e+00 : f32
      %29 = vector.broadcast %cst_22 : f32 to vector<1x1x128xf32>
      %c0_23 = arith.constant 0 : index
      %c0_24 = arith.constant 0 : index
      %c0_25 = arith.constant 0 : index
      %30 = vector.load %arg5[%c0_23, %c0_24, %c0_25] : memref<1x1x128xf32, #tpu.memory_space<vmem>>, vector<1x1x128xf32>
      tpu.vector_store %arg5[%c0_23, %c0_24, %c0_25], %29 {strides = array<i32>} : memref<1x1x128xf32, #tpu.memory_space<vmem>>, vector<1x1x128xf32>,
      %cst_26 = arith.constant 0.000000e+00 : f32
      %31 = vector.broadcast %cst_26 : f32 to vector<1x1x128xf32>
      %c0_27 = arith.constant 0 : index
      %c0_28 = arith.constant 0 : index
      %c0_29 = arith.constant 0 : index
      %32 = vector.load %arg6[%c0_27, %c0_28, %c0_29] : memref<1x1x128xf32, #tpu.memory_space<vmem>>, vector<1x1x128xf32>
      tpu.vector_store %arg6[%c0_27, %c0_28, %c0_29], %31 {strides = array<i32>} : memref<1x1x128xf32, #tpu.memory_space<vmem>>, vector<1x1x128xf32>,
    } else {
    }
    %c0 = arith.constant 0 : index
    %c0_1 = arith.constant 0 : index
    %c0_2 = arith.constant 0 : index
    %3 = vector.load %arg2[%c0, %c0_1, %c0_2] : memref<1x256x108xbf16, #tpu.memory_space<vmem>>, vector<1x256x108xbf16>
    %4 = vector.shape_cast %3 : vector<1x256x108xbf16> to vector<256x108xbf16>
    %c0_3 = arith.constant 0 : index
    %c0_4 = arith.constant 0 : index
    %5 = vector.load %arg3[%c0_3, %c0_4] : memref<108x128xbf16, #tpu.memory_space<vmem>>, vector<108x128xbf16>
    %cst = arith.constant dense<0.000000e+00> : vector<256x128xf32>
    %6 = tpu.matmul %4, %5, %cst {dimension_numbers = #tpu.dot_dimension_numbers<[1], [0], [0], [1], [0, 0, 1, 1], [], []>} : vector<256x108xbf16>, vector<108x128xbf16>, vector<256x128xf32> -> vector<256x128xf32>
    %7 = vector.extract_strided_slice %6 {offsets = [0, 0], sizes = [256, 32], strides = [1, 1]} : vector<256x128xf32> to vector<256x32xf32>
    %8 = arith.truncf %7 : vector<256x32xf32> to vector<256x32xbf16>
    %c0_5 = arith.constant 0 : index
    %c0_6 = arith.constant 0 : index
    %c0_7 = arith.constant 0 : index
    %9 = vector.load %arg4[%c0_5, %c0_6, %c0_7] : memref<1x256x32xbf16, #tpu.memory_space<vmem>>, vector<1x256x32xbf16>
    %10 = vector.shape_cast %9 : vector<1x256x32xbf16> to vector<256x32xbf16>
    %11 = vector.shape_cast %8 : vector<256x32xbf16> to vector<1x256x32xbf16>
    tpu.vector_store %arg4[%c0_5, %c0_6, %c0_7], %11 {strides = array<i32>} : memref<1x256x32xbf16, #tpu.memory_space<vmem>>, vector<1x256x32xbf16>,
    %c0_8 = arith.constant 0 : index
    %c0_9 = arith.constant 0 : index
    %c0_10 = arith.constant 0 : index
    %12 = vector.load %arg5[%c0_8, %c0_9, %c0_10] : memref<1x1x128xf32, #tpu.memory_space<vmem>>, vector<1x1x128xf32>
    %13 = vector.shape_cast %12 : vector<1x1x128xf32> to vector<1x128xf32>
    %cst_11 = arith.constant dense<0.000000e+00> : vector<128xf32>
    %14 = vector.multi_reduction <add>, %6, %cst_11 [0] : vector<256x128xf32> to vector<128xf32>
    %15 = vector.shape_cast %14 : vector<128xf32> to vector<1x128xf32>
    %16 = arith.addf %13, %15 : vector<1x128xf32>
    %c0_12 = arith.constant 0 : index
    %c0_13 = arith.constant 0 : index
    %c0_14 = arith.constant 0 : index
    %17 = vector.load %arg5[%c0_12, %c0_13, %c0_14] : memref<1x1x128xf32, #tpu.memory_space<vmem>>, vector<1x1x128xf32>
    %18 = vector.shape_cast %17 : vector<1x1x128xf32> to vector<1x128xf32>
    %19 = vector.shape_cast %16 : vector<1x128xf32> to vector<1x1x128xf32>
    tpu.vector_store %arg5[%c0_12, %c0_13, %c0_14], %19 {strides = array<i32>} : memref<1x1x128xf32, #tpu.memory_space<vmem>>, vector<1x1x128xf32>,
    %c0_15 = arith.constant 0 : index
    %c0_16 = arith.constant 0 : index
    %c0_17 = arith.constant 0 : index
    %20 = vector.load %arg6[%c0_15, %c0_16, %c0_17] : memref<1x1x128xf32, #tpu.memory_space<vmem>>, vector<1x1x128xf32>
    %21 = vector.shape_cast %20 : vector<1x1x128xf32> to vector<1x128xf32>
    %22 = arith.mulf %6, %6 : vector<256x128xf32>
    %cst_18 = arith.constant dense<0.000000e+00> : vector<128xf32>
    %23 = vector.multi_reduction <add>, %22, %cst_18 [0] : vector<256x128xf32> to vector<128xf32>
    %24 = vector.shape_cast %23 : vector<128xf32> to vector<1x128xf32>
    %25 = arith.addf %21, %24 : vector<1x128xf32>
    %c0_19 = arith.constant 0 : index
    %c0_20 = arith.constant 0 : index
    %c0_21 = arith.constant 0 : index
    %26 = vector.load %arg6[%c0_19, %c0_20, %c0_21] : memref<1x1x128xf32, #tpu.memory_space<vmem>>, vector<1x1x128xf32>
    %27 = vector.shape_cast %26 : vector<1x1x128xf32> to vector<1x128xf32>
    %28 = vector.shape_cast %25 : vector<1x128xf32> to vector<1x1x128xf32>
    tpu.vector_store %arg6[%c0_19, %c0_20, %c0_21], %28 {strides = array<i32>} : memref<1x1x128xf32, #tpu.memory_space<vmem>>, vector<1x1x128xf32>,
    return
  }
  func.func @transform_0(%arg0: i32, %arg1: i32) -> (i32, i32, i32) {
    %c0_i32 = arith.constant 0 : i32
    %c0_i32_0 = arith.constant 0 : i32
    return %arg0, %arg1, %c0_i32 : i32, i32, i32
  }
  func.func @transform_1(%arg0: i32, %arg1: i32) -> (i32, i32) {
    %c0_i32 = arith.constant 0 : i32
    %c0_i32_0 = arith.constant 0 : i32
    %c0_i32_1 = arith.constant 0 : i32
    return %c0_i32, %c0_i32_0 : i32, i32
  }
  func.func @transform_2(%arg0: i32, %arg1: i32) -> (i32, i32, i32) {
    %c0_i32 = arith.constant 0 : i32
    %c0_i32_0 = arith.constant 0 : i32
    return %arg0, %arg1, %c0_i32 : i32, i32, i32
  }
  func.func @transform_3(%arg0: i32, %arg1: i32) -> (i32, i32, i32) {
    %c0_i32 = arith.constant 0 : i32
    %c0_i32_0 = arith.constant 0 : i32
    %c0_i32_1 = arith.constant 0 : i32
    return %arg0, %c0_i32, %c0_i32_0 : i32, i32, i32
  }
  func.func @transform_4(%arg0: i32, %arg1: i32) -> (i32, i32, i32) {
    %c0_i32 = arith.constant 0 : i32
    %c0_i32_0 = arith.constant 0 : i32
    %c0_i32_1 = arith.constant 0 : i32
    return %arg0, %c0_i32, %c0_i32_0 : i32, i32, i32
  }
}

module attributes {stable_mosaic.version = 11 : i64} {
  func.func @_scale_shift_lrelu_kernel(%arg0: i32, %arg1: i32, %arg2: memref<1x512x32xbf16, #tpu.memory_space<vmem>>, %arg3: memref<1x1x32xf32, #tpu.memory_space<vmem>>, %arg4: memref<1x1x32xf32, #tpu.memory_space<vmem>>, %arg5: memref<1x512x32xbf16, #tpu.memory_space<vmem>>) attributes {dimension_semantics = [#tpu.dimension_semantics<parallel>, #tpu.dimension_semantics<parallel>], iteration_bounds = array<i64: 2, 1>, scalar_prefetch = 0 : i64, scratch_operands = 0 : i64, tpu.core_type = #tpu.core_type<tc>, window_params = [{transform_indices = @transform_0, window_bounds = array<i64: 1, 512, 32>}, {transform_indices = @transform_1, window_bounds = array<i64: 1, 1, 32>}, {transform_indices = @transform_2, window_bounds = array<i64: 1, 1, 32>}, {transform_indices = @transform_3, window_bounds = array<i64: 1, 512, 32>}]} {
    %c0 = arith.constant 0 : index
    %c0_0 = arith.constant 0 : index
    %c0_1 = arith.constant 0 : index
    %0 = vector.load %arg2[%c0, %c0_0, %c0_1] : memref<1x512x32xbf16, #tpu.memory_space<vmem>>, vector<1x512x32xbf16>
    %1 = vector.shape_cast %0 : vector<1x512x32xbf16> to vector<512x32xbf16>
    %2 = arith.extf %1 : vector<512x32xbf16> to vector<512x32xf32>
    %c0_2 = arith.constant 0 : index
    %c0_3 = arith.constant 0 : index
    %c0_4 = arith.constant 0 : index
    %3 = vector.load %arg3[%c0_2, %c0_3, %c0_4] : memref<1x1x32xf32, #tpu.memory_space<vmem>>, vector<1x1x32xf32>
    %4 = vector.shape_cast %3 : vector<1x1x32xf32> to vector<1x32xf32>
    %5 = vector.broadcast %4 : vector<1x32xf32> to vector<512x32xf32>
    %6 = arith.mulf %2, %5 : vector<512x32xf32>
    %c0_5 = arith.constant 0 : index
    %c0_6 = arith.constant 0 : index
    %c0_7 = arith.constant 0 : index
    %7 = vector.load %arg4[%c0_5, %c0_6, %c0_7] : memref<1x1x32xf32, #tpu.memory_space<vmem>>, vector<1x1x32xf32>
    %8 = vector.shape_cast %7 : vector<1x1x32xf32> to vector<1x32xf32>
    %9 = vector.broadcast %8 : vector<1x32xf32> to vector<512x32xf32>
    %10 = arith.addf %6, %9 : vector<512x32xf32>
    %cst = arith.constant 0.000000e+00 : f32
    %11 = vector.broadcast %cst : f32 to vector<512x32xf32>
    %12 = arith.cmpf oge, %10, %11 : vector<512x32xf32>
    %cst_8 = arith.constant 0.00999999977 : f32
    %13 = vector.broadcast %cst_8 : f32 to vector<512x32xf32>
    %14 = arith.mulf %13, %10 : vector<512x32xf32>
    %15 = arith.select %12, %10, %14 : vector<512x32xi1>, vector<512x32xf32>
    %16 = arith.truncf %15 : vector<512x32xf32> to vector<512x32xbf16>
    %c0_9 = arith.constant 0 : index
    %c0_10 = arith.constant 0 : index
    %c0_11 = arith.constant 0 : index
    %17 = vector.load %arg5[%c0_9, %c0_10, %c0_11] : memref<1x512x32xbf16, #tpu.memory_space<vmem>>, vector<1x512x32xbf16>
    %18 = vector.shape_cast %17 : vector<1x512x32xbf16> to vector<512x32xbf16>
    %19 = vector.shape_cast %16 : vector<512x32xbf16> to vector<1x512x32xbf16>
    tpu.vector_store %arg5[%c0_9, %c0_10, %c0_11], %19 {strides = array<i32>} : memref<1x512x32xbf16, #tpu.memory_space<vmem>>, vector<1x512x32xbf16>,
    return
  }
  func.func @transform_0(%arg0: i32, %arg1: i32) -> (i32, i32, i32) {
    %c0_i32 = arith.constant 0 : i32
    %c0_i32_0 = arith.constant 0 : i32
    return %arg0, %arg1, %c0_i32 : i32, i32, i32
  }
  func.func @transform_1(%arg0: i32, %arg1: i32) -> (i32, i32, i32) {
    %c0_i32 = arith.constant 0 : i32
    %c0_i32_0 = arith.constant 0 : i32
    %c0_i32_1 = arith.constant 0 : i32
    return %arg0, %c0_i32, %c0_i32_0 : i32, i32, i32
  }
  func.func @transform_2(%arg0: i32, %arg1: i32) -> (i32, i32, i32) {
    %c0_i32 = arith.constant 0 : i32
    %c0_i32_0 = arith.constant 0 : i32
    %c0_i32_1 = arith.constant 0 : i32
    return %arg0, %c0_i32, %c0_i32_0 : i32, i32, i32
  }
  func.func @transform_3(%arg0: i32, %arg1: i32) -> (i32, i32, i32) {
    %c0_i32 = arith.constant 0 : i32
    %c0_i32_0 = arith.constant 0 : i32
    return %arg0, %arg1, %c0_i32 : i32, i32, i32
  }
}

module attributes {stable_mosaic.version = 11 : i64} {
  func.func @_conv_gemm_stats_kernel(%arg0: i32, %arg1: i32, %arg2: memref<1x256x864xbf16, #tpu.memory_space<vmem>>, %arg3: memref<864x128xbf16, #tpu.memory_space<vmem>>, %arg4: memref<1x256x32xbf16, #tpu.memory_space<vmem>>, %arg5: memref<1x1x128xf32, #tpu.memory_space<vmem>>, %arg6: memref<1x1x128xf32, #tpu.memory_space<vmem>>) attributes {dimension_semantics = [#tpu.dimension_semantics<parallel>, #tpu.dimension_semantics<arbitrary>], iteration_bounds = array<i64: 2, 2>, scalar_prefetch = 0 : i64, scratch_operands = 0 : i64, tpu.core_type = #tpu.core_type<tc>, window_params = [{transform_indices = @transform_0, window_bounds = array<i64: 1, 256, 864>}, {pipeline_mode = #tpu.pipeline_mode<synchronous>, transform_indices = @transform_1, window_bounds = array<i64: 864, 128>}, {transform_indices = @transform_2, window_bounds = array<i64: 1, 256, 32>}, {transform_indices = @transform_3, window_bounds = array<i64: 1, 1, 128>}, {transform_indices = @transform_4, window_bounds = array<i64: 1, 1, 128>}]} {
    %c0_i32 = arith.constant 0 : i32
    %0 = arith.cmpi eq, %arg1, %c0_i32 : i32
    %1 = arith.extui %0 : i1 to i32
    %c0_i32_0 = arith.constant 0 : i32
    %2 = arith.cmpi ne, %1, %c0_i32_0 : i32
    scf.if %2 {
      %cst_22 = arith.constant 0.000000e+00 : f32
      %29 = vector.broadcast %cst_22 : f32 to vector<1x1x128xf32>
      %c0_23 = arith.constant 0 : index
      %c0_24 = arith.constant 0 : index
      %c0_25 = arith.constant 0 : index
      %30 = vector.load %arg5[%c0_23, %c0_24, %c0_25] : memref<1x1x128xf32, #tpu.memory_space<vmem>>, vector<1x1x128xf32>
      tpu.vector_store %arg5[%c0_23, %c0_24, %c0_25], %29 {strides = array<i32>} : memref<1x1x128xf32, #tpu.memory_space<vmem>>, vector<1x1x128xf32>,
      %cst_26 = arith.constant 0.000000e+00 : f32
      %31 = vector.broadcast %cst_26 : f32 to vector<1x1x128xf32>
      %c0_27 = arith.constant 0 : index
      %c0_28 = arith.constant 0 : index
      %c0_29 = arith.constant 0 : index
      %32 = vector.load %arg6[%c0_27, %c0_28, %c0_29] : memref<1x1x128xf32, #tpu.memory_space<vmem>>, vector<1x1x128xf32>
      tpu.vector_store %arg6[%c0_27, %c0_28, %c0_29], %31 {strides = array<i32>} : memref<1x1x128xf32, #tpu.memory_space<vmem>>, vector<1x1x128xf32>,
    } else {
    }
    %c0 = arith.constant 0 : index
    %c0_1 = arith.constant 0 : index
    %c0_2 = arith.constant 0 : index
    %3 = vector.load %arg2[%c0, %c0_1, %c0_2] : memref<1x256x864xbf16, #tpu.memory_space<vmem>>, vector<1x256x864xbf16>
    %4 = vector.shape_cast %3 : vector<1x256x864xbf16> to vector<256x864xbf16>
    %c0_3 = arith.constant 0 : index
    %c0_4 = arith.constant 0 : index
    %5 = vector.load %arg3[%c0_3, %c0_4] : memref<864x128xbf16, #tpu.memory_space<vmem>>, vector<864x128xbf16>
    %cst = arith.constant dense<0.000000e+00> : vector<256x128xf32>
    %6 = tpu.matmul %4, %5, %cst {dimension_numbers = #tpu.dot_dimension_numbers<[1], [0], [0], [1], [0, 0, 1, 1], [], []>} : vector<256x864xbf16>, vector<864x128xbf16>, vector<256x128xf32> -> vector<256x128xf32>
    %7 = vector.extract_strided_slice %6 {offsets = [0, 0], sizes = [256, 32], strides = [1, 1]} : vector<256x128xf32> to vector<256x32xf32>
    %8 = arith.truncf %7 : vector<256x32xf32> to vector<256x32xbf16>
    %c0_5 = arith.constant 0 : index
    %c0_6 = arith.constant 0 : index
    %c0_7 = arith.constant 0 : index
    %9 = vector.load %arg4[%c0_5, %c0_6, %c0_7] : memref<1x256x32xbf16, #tpu.memory_space<vmem>>, vector<1x256x32xbf16>
    %10 = vector.shape_cast %9 : vector<1x256x32xbf16> to vector<256x32xbf16>
    %11 = vector.shape_cast %8 : vector<256x32xbf16> to vector<1x256x32xbf16>
    tpu.vector_store %arg4[%c0_5, %c0_6, %c0_7], %11 {strides = array<i32>} : memref<1x256x32xbf16, #tpu.memory_space<vmem>>, vector<1x256x32xbf16>,
    %c0_8 = arith.constant 0 : index
    %c0_9 = arith.constant 0 : index
    %c0_10 = arith.constant 0 : index
    %12 = vector.load %arg5[%c0_8, %c0_9, %c0_10] : memref<1x1x128xf32, #tpu.memory_space<vmem>>, vector<1x1x128xf32>
    %13 = vector.shape_cast %12 : vector<1x1x128xf32> to vector<1x128xf32>
    %cst_11 = arith.constant dense<0.000000e+00> : vector<128xf32>
    %14 = vector.multi_reduction <add>, %6, %cst_11 [0] : vector<256x128xf32> to vector<128xf32>
    %15 = vector.shape_cast %14 : vector<128xf32> to vector<1x128xf32>
    %16 = arith.addf %13, %15 : vector<1x128xf32>
    %c0_12 = arith.constant 0 : index
    %c0_13 = arith.constant 0 : index
    %c0_14 = arith.constant 0 : index
    %17 = vector.load %arg5[%c0_12, %c0_13, %c0_14] : memref<1x1x128xf32, #tpu.memory_space<vmem>>, vector<1x1x128xf32>
    %18 = vector.shape_cast %17 : vector<1x1x128xf32> to vector<1x128xf32>
    %19 = vector.shape_cast %16 : vector<1x128xf32> to vector<1x1x128xf32>
    tpu.vector_store %arg5[%c0_12, %c0_13, %c0_14], %19 {strides = array<i32>} : memref<1x1x128xf32, #tpu.memory_space<vmem>>, vector<1x1x128xf32>,
    %c0_15 = arith.constant 0 : index
    %c0_16 = arith.constant 0 : index
    %c0_17 = arith.constant 0 : index
    %20 = vector.load %arg6[%c0_15, %c0_16, %c0_17] : memref<1x1x128xf32, #tpu.memory_space<vmem>>, vector<1x1x128xf32>
    %21 = vector.shape_cast %20 : vector<1x1x128xf32> to vector<1x128xf32>
    %22 = arith.mulf %6, %6 : vector<256x128xf32>
    %cst_18 = arith.constant dense<0.000000e+00> : vector<128xf32>
    %23 = vector.multi_reduction <add>, %22, %cst_18 [0] : vector<256x128xf32> to vector<128xf32>
    %24 = vector.shape_cast %23 : vector<128xf32> to vector<1x128xf32>
    %25 = arith.addf %21, %24 : vector<1x128xf32>
    %c0_19 = arith.constant 0 : index
    %c0_20 = arith.constant 0 : index
    %c0_21 = arith.constant 0 : index
    %26 = vector.load %arg6[%c0_19, %c0_20, %c0_21] : memref<1x1x128xf32, #tpu.memory_space<vmem>>, vector<1x1x128xf32>
    %27 = vector.shape_cast %26 : vector<1x1x128xf32> to vector<1x128xf32>
    %28 = vector.shape_cast %25 : vector<1x128xf32> to vector<1x1x128xf32>
    tpu.vector_store %arg6[%c0_19, %c0_20, %c0_21], %28 {strides = array<i32>} : memref<1x1x128xf32, #tpu.memory_space<vmem>>, vector<1x1x128xf32>,
    return
  }
  func.func @transform_0(%arg0: i32, %arg1: i32) -> (i32, i32, i32) {
    %c0_i32 = arith.constant 0 : i32
    %c0_i32_0 = arith.constant 0 : i32
    return %arg0, %arg1, %c0_i32 : i32, i32, i32
  }
  func.func @transform_1(%arg0: i32, %arg1: i32) -> (i32, i32) {
    %c0_i32 = arith.constant 0 : i32
    %c0_i32_0 = arith.constant 0 : i32
    %c0_i32_1 = arith.constant 0 : i32
    return %c0_i32, %c0_i32_0 : i32, i32
  }
  func.func @transform_2(%arg0: i32, %arg1: i32) -> (i32, i32, i32) {
    %c0_i32 = arith.constant 0 : i32
    %c0_i32_0 = arith.constant 0 : i32
    return %arg0, %arg1, %c0_i32 : i32, i32, i32
  }
  func.func @transform_3(%arg0: i32, %arg1: i32) -> (i32, i32, i32) {
    %c0_i32 = arith.constant 0 : i32
    %c0_i32_0 = arith.constant 0 : i32
    %c0_i32_1 = arith.constant 0 : i32
    return %arg0, %c0_i32, %c0_i32_0 : i32, i32, i32
  }
  func.func @transform_4(%arg0: i32, %arg1: i32) -> (i32, i32, i32) {
    %c0_i32 = arith.constant 0 : i32
    %c0_i32_0 = arith.constant 0 : i32
    %c0_i32_1 = arith.constant 0 : i32
    return %arg0, %c0_i32, %c0_i32_0 : i32, i32, i32
  }
}

module attributes {stable_mosaic.version = 11 : i64} {
  func.func @_scale_shift_lrelu_kernel(%arg0: i32, %arg1: i32, %arg2: memref<1x512x32xbf16, #tpu.memory_space<vmem>>, %arg3: memref<1x1x32xf32, #tpu.memory_space<vmem>>, %arg4: memref<1x1x32xf32, #tpu.memory_space<vmem>>, %arg5: memref<1x512x32xf32, #tpu.memory_space<vmem>>) attributes {dimension_semantics = [#tpu.dimension_semantics<parallel>, #tpu.dimension_semantics<parallel>], iteration_bounds = array<i64: 2, 1>, scalar_prefetch = 0 : i64, scratch_operands = 0 : i64, tpu.core_type = #tpu.core_type<tc>, window_params = [{transform_indices = @transform_0, window_bounds = array<i64: 1, 512, 32>}, {transform_indices = @transform_1, window_bounds = array<i64: 1, 1, 32>}, {transform_indices = @transform_2, window_bounds = array<i64: 1, 1, 32>}, {transform_indices = @transform_3, window_bounds = array<i64: 1, 512, 32>}]} {
    %c0 = arith.constant 0 : index
    %c0_0 = arith.constant 0 : index
    %c0_1 = arith.constant 0 : index
    %0 = vector.load %arg2[%c0, %c0_0, %c0_1] : memref<1x512x32xbf16, #tpu.memory_space<vmem>>, vector<1x512x32xbf16>
    %1 = vector.shape_cast %0 : vector<1x512x32xbf16> to vector<512x32xbf16>
    %2 = arith.extf %1 : vector<512x32xbf16> to vector<512x32xf32>
    %c0_2 = arith.constant 0 : index
    %c0_3 = arith.constant 0 : index
    %c0_4 = arith.constant 0 : index
    %3 = vector.load %arg3[%c0_2, %c0_3, %c0_4] : memref<1x1x32xf32, #tpu.memory_space<vmem>>, vector<1x1x32xf32>
    %4 = vector.shape_cast %3 : vector<1x1x32xf32> to vector<1x32xf32>
    %5 = vector.broadcast %4 : vector<1x32xf32> to vector<512x32xf32>
    %6 = arith.mulf %2, %5 : vector<512x32xf32>
    %c0_5 = arith.constant 0 : index
    %c0_6 = arith.constant 0 : index
    %c0_7 = arith.constant 0 : index
    %7 = vector.load %arg4[%c0_5, %c0_6, %c0_7] : memref<1x1x32xf32, #tpu.memory_space<vmem>>, vector<1x1x32xf32>
    %8 = vector.shape_cast %7 : vector<1x1x32xf32> to vector<1x32xf32>
    %9 = vector.broadcast %8 : vector<1x32xf32> to vector<512x32xf32>
    %10 = arith.addf %6, %9 : vector<512x32xf32>
    %cst = arith.constant 0.000000e+00 : f32
    %11 = vector.broadcast %cst : f32 to vector<512x32xf32>
    %12 = arith.cmpf oge, %10, %11 : vector<512x32xf32>
    %cst_8 = arith.constant 0.00999999977 : f32
    %13 = vector.broadcast %cst_8 : f32 to vector<512x32xf32>
    %14 = arith.mulf %13, %10 : vector<512x32xf32>
    %15 = arith.select %12, %10, %14 : vector<512x32xi1>, vector<512x32xf32>
    %c0_9 = arith.constant 0 : index
    %c0_10 = arith.constant 0 : index
    %c0_11 = arith.constant 0 : index
    %16 = vector.load %arg5[%c0_9, %c0_10, %c0_11] : memref<1x512x32xf32, #tpu.memory_space<vmem>>, vector<1x512x32xf32>
    %17 = vector.shape_cast %16 : vector<1x512x32xf32> to vector<512x32xf32>
    %18 = vector.shape_cast %15 : vector<512x32xf32> to vector<1x512x32xf32>
    tpu.vector_store %arg5[%c0_9, %c0_10, %c0_11], %18 {strides = array<i32>} : memref<1x512x32xf32, #tpu.memory_space<vmem>>, vector<1x512x32xf32>,
    return
  }
  func.func @transform_0(%arg0: i32, %arg1: i32) -> (i32, i32, i32) {
    %c0_i32 = arith.constant 0 : i32
    %c0_i32_0 = arith.constant 0 : i32
    return %arg0, %arg1, %c0_i32 : i32, i32, i32
  }
  func.func @transform_1(%arg0: i32, %arg1: i32) -> (i32, i32, i32) {
    %c0_i32 = arith.constant 0 : i32
    %c0_i32_0 = arith.constant 0 : i32
    %c0_i32_1 = arith.constant 0 : i32
    return %arg0, %c0_i32, %c0_i32_0 : i32, i32, i32
  }
  func.func @transform_2(%arg0: i32, %arg1: i32) -> (i32, i32, i32) {
    %c0_i32 = arith.constant 0 : i32
    %c0_i32_0 = arith.constant 0 : i32
    %c0_i32_1 = arith.constant 0 : i32
    return %arg0, %c0_i32, %c0_i32_0 : i32, i32, i32
  }
  func.func @transform_3(%arg0: i32, %arg1: i32) -> (i32, i32, i32) {
    %c0_i32 = arith.constant 0 : i32
    %c0_i32_0 = arith.constant 0 : i32
    return %arg0, %arg1, %c0_i32 : i32, i32, i32
  }
}

</mosaic_0001>

<llo_original>
// kernel: double_conv_block_forward.4
$region0: #{double_conv_block_forward.4}
  #allocation0 [shape = 'u32[]', space=smem, size = 0x4, offset = 0x4, fixed_abs, tag = 'smem constant byte address 0x4 - core index']
  #allocation1 [shape = 'u32[72,128]{1,0:T(1,128)}', space=vmem, size = 0x9000, scoped, tag = 'internal scratch']
  %s0 = inlined_call_operand.vmem [shape: bf16[2,512,108], index: 0, kind: input, shape index: {}]
  %s1 = inlined_call_operand.vmem [shape: bf16[108,128], index: 1, kind: input, shape index: {}]
  %s2 = inlined_call_operand.vmem [shape: bf16[2,512,32], index: 2, kind: output, shape index: {0}]
  %s3 = inlined_call_operand.vmem [shape: f32[2,1,128], index: 3, kind: output, shape index: {1}]
  %s4 = inlined_call_operand.vmem [shape: f32[2,1,128], index: 4, kind: output, shape index: {2}]
  %5 = xla_tuple %s2, %s3, %s4
  %s6 = sld [smem:[#allocation0]]
  $region61: #{double_conv_block_forward.4} parent=0
    _
  %s8 = ssub.s32 1, %s6
  %s9 = scalar_select 0, %s8, %s6
  loop: start=0, step=1, limit=6
  $region2: #{double_conv_block_forward.4} parent=0 // loop_pre_header
    _
  $region3: #{double_conv_block_forward.4} parent=0 // loop_header
    %s11 = sphi 0, %s15
    %p12 = scmp.ge.s32.totalorder %s11, 6
    %s18 = sphi 0, %s30
    %s19 = sphi 0, %s26
    %s20 = sphi 0, %s18
    %s21 = sphi 0, %s19
    %s22 = sphi 0, %s20
    %s23 = sphi 0, %s21
    %s35 = sphi 0, %s37
    %s38 = sphi 0, %s35
    %s39 = sphi 0, %s38
    %s55 = sphi 0, %s39
    %s59 = sphi 0, %s59
    %s61 = sphi 0, %s59
    %s62 = sphi 0, %s61
    %s76 = sphi 0, %s62
    %s84 = sphi 0, %s86
    %s87 = sphi 0, %s84
    %s88 = sphi 0, %s87
    %s104 = sphi 0, %s88
    %s110 = sphi 0, %s112
    %s113 = sphi 0, %s110
    %s114 = sphi 0, %s113
    %s130 = sphi 0, %s114
    %s136 = sphi 0, %s138
    %s139 = sphi 0, %s136
    %s140 = sphi 0, %s139
    %s156 = sphi 0, %s140
  $region4: #{double_conv_block_forward.4} parent=0 // loop_header_branch
    %14 = sbr.rel (%p12) target = $region8
  $region5: #{double_conv_block_forward.4} parent=0 // loop_body
    %s16 = ssub.s32 %s11, 1
    %s17 = ssub.s32 %s11, 2
    %s24 = sadd.s32 1, %s19
    %p25 = scmp.ge.s32.totalorder %s24, 2
    %s26 = scalar_select %p25, 0, %s24
    %s27 = sadd.s32 1, %s18
    %s28 = scalar_select %p25, %s27, %s18
    %p29 = scmp.ge.s32.totalorder %s28, 2
    %s30 = scalar_select %p29, 0, %s28
    %s31 = ssub.s32 %s18, %s30
    %s32 = ssub.s32 %s19, %s26
    %s33 = sor.u32 %s31, %s32
    %p34 = scmp.eq.s32.totalorder %s33, 0
    %s36 = sadd.s32 %s35, 1
    %s37 = scalar_select %p34, %s35, %s36
    %p40 = pneg %p34
    %p41 = scmp.eq.s32.totalorder %s11, 3
    %p42 = por %p40, %p41
    %p43 = scmp.ne.s32.totalorder %s35, %s38
    %p44 = scmp.eq.s32.totalorder %s11, 0
    %p45 = por %p43, %p44
    %p46 = scmp.ne.s32.totalorder %s35, %s38
    %p47 = scmp.eq.s32.totalorder %s16, 3
    %p48 = por %p46, %p47
    %p49 = scmp.ne.s32.totalorder %s38, %s39
    %p50 = scmp.eq.s32.totalorder %s16, 0
    %p51 = por %p49, %p50
    %p52 = scmp.ne.s32.totalorder %s38, %s39
    %p53 = scmp.eq.s32.totalorder %s17, 3
    %p54 = por %p52, %p53
    %p56 = scmp.ne.s32.totalorder %s39, %s55
    %p57 = scmp.eq.s32.totalorder %s17, 0
    %p58 = por %p56, %p57
    %s60 = sadd.s32 %s59, 1
    %p63 = scmp.eq.s32.totalorder %s11, 3
    %p64 = scmp.ne.s32.totalorder %s59, %s61
    %p65 = scmp.eq.s32.totalorder %s11, 0
    %p66 = por %p64, %p65
    %p67 = scmp.ne.s32.totalorder %s59, %s61
    %p68 = scmp.eq.s32.totalorder %s16, 3
    %p69 = por %p67, %p68
    %p70 = scmp.ne.s32.totalorder %s61, %s62
    %p71 = scmp.eq.s32.totalorder %s16, 0
    %p72 = por %p70, %p71
    %p73 = scmp.ne.s32.totalorder %s61, %s62
    %p74 = scmp.eq.s32.totalorder %s17, 3
    %p75 = por %p73, %p74
    %p77 = scmp.ne.s32.totalorder %s62, %s76
    %p78 = scmp.eq.s32.totalorder %s17, 0
    %p79 = por %p77, %p78
    %s80 = ssub.s32 %s18, %s30
    %s81 = ssub.s32 %s19, %s26
    %s82 = sor.u32 %s80, %s81
    %p83 = scmp.eq.s32.totalorder %s82, 0
    %s85 = sadd.s32 %s84, 1
    %s86 = scalar_select %p83, %s84, %s85
    %p89 = pneg %p83
    %p90 = scmp.eq.s32.totalorder %s11, 3
    %p91 = por %p89, %p90
    %p92 = scmp.ne.s32.totalorder %s84, %s87
    %p93 = scmp.eq.s32.totalorder %s11, 0
    %p94 = por %p92, %p93
    %p95 = scmp.ne.s32.totalorder %s84, %s87
    %p96 = scmp.eq.s32.totalorder %s16, 3
    %p97 = por %p95, %p96
    %p98 = scmp.ne.s32.totalorder %s87, %s88
    %p99 = scmp.eq.s32.totalorder %s16, 0
    %p100 = por %p98, %p99
    %p101 = scmp.ne.s32.totalorder %s87, %s88
    %p102 = scmp.eq.s32.totalorder %s17, 3
    %p103 = por %p101, %p102
    %p105 = scmp.ne.s32.totalorder %s88, %s104
    %p106 = scmp.eq.s32.totalorder %s17, 0
    %p107 = por %p105, %p106
    %s108 = ssub.s32 %s18, %s30
    %p109 = scmp.eq.s32.totalorder %s108, 0
    %s111 = sadd.s32 %s110, 1
    %s112 = scalar_select %p109, %s110, %s111
    %p115 = pneg %p109
    %p116 = scmp.eq.s32.totalorder %s11, 3
    %p117 = por %p115, %p116
    %p118 = scmp.ne.s32.totalorder %s110, %s113
    %p119 = scmp.eq.s32.totalorder %s11, 0
    %p120 = por %p118, %p119
    %p121 = scmp.ne.s32.totalorder %s110, %s113
    %p122 = scmp.eq.s32.totalorder %s16, 3
    %p123 = por %p121, %p122
    %p124 = scmp.ne.s32.totalorder %s113, %s114
    %p125 = scmp.eq.s32.totalorder %s16, 0
    %p126 = por %p124, %p125
    %p127 = scmp.ne.s32.totalorder %s113, %s114
    %p128 = scmp.eq.s32.totalorder %s17, 3
    %p129 = por %p127, %p128
    %p131 = scmp.ne.s32.totalorder %s114, %s130
    %p132 = scmp.eq.s32.totalorder %s17, 0
    %p133 = por %p131, %p132
    %s134 = ssub.s32 %s18, %s30
    %p135 = scmp.eq.s32.totalorder %s134, 0
    %s137 = sadd.s32 %s136, 1
    %s138 = scalar_select %p135, %s136, %s137
    %p141 = pneg %p135
    %p142 = scmp.eq.s32.totalorder %s11, 3
    %p143 = por %p141, %p142
    %p144 = scmp.ne.s32.totalorder %s136, %s139
    %p145 = scmp.eq.s32.totalorder %s11, 0
    %p146 = por %p144, %p145
    %p147 = scmp.ne.s32.totalorder %s136, %s139
    %p148 = scmp.eq.s32.totalorder %s16, 3
    %p149 = por %p147, %p148
    %p150 = scmp.ne.s32.totalorder %s139, %s140
    %p151 = scmp.eq.s32.totalorder %s16, 0
    %p152 = por %p150, %p151
    %p153 = scmp.ne.s32.totalorder %s139, %s140
    %p154 = scmp.eq.s32.totalorder %s17, 3
    %p155 = por %p153, %p154
    %p157 = scmp.ne.s32.totalorder %s140, %s156
    %p158 = scmp.eq.s32.totalorder %s17, 0
    %p159 = por %p157, %p158
    %p160 = scmp.le.s32.totalorder 1, %s11
    %p161 = scmp.lt.s32.totalorder %s11, 5
    %p162 = pnand %p160, %p161
    %p163 = pneg %p162
    // Predicated region
    $region9: #{double_conv_block_forward.4} parent=5 // pred_check
      _
    $region10: #{double_conv_block_forward.4} parent=5 // pred_check_branch
      %165 = sbr.rel (%p162) target = $region12
    $region11: #{double_conv_block_forward.4} parent=5 // pred_region
      %s166 = ssub.s32 %s11, 1
      // Predicated region
      $region13: #{double_conv_block_forward.4} parent=11 // pred_check
        %p167 = pneg %p72
      $region14: #{double_conv_block_forward.4} parent=11 // pred_check_branch
        %169 = sbr.rel (%p167) target = $region16
      $region15: #{double_conv_block_forward.4} parent=11 // pred_region
        _
      $region16: #{double_conv_block_forward.4} parent=11 // pred_fallthru
        _
    $region12: #{double_conv_block_forward.4} parent=5 // pred_fallthru
      _
    %p170 = scmp.lt.s32.totalorder %s11, 4
    // Predicated region
    $region17: #{double_conv_block_forward.4} parent=5 // pred_check
      %p171 = pneg %p170
    $region18: #{double_conv_block_forward.4} parent=5 // pred_check_branch
      %173 = sbr.rel (%p171) target = $region20
    $region19: #{double_conv_block_forward.4} parent=5 // pred_region
      // Predicated region
      $region21: #{double_conv_block_forward.4} parent=19 // pred_check
        %p174 = pneg %p45
      $region22: #{double_conv_block_forward.4} parent=19 // pred_check_branch
        %176 = sbr.rel (%p174) target = $region24
      $region23: #{double_conv_block_forward.4} parent=19 // pred_region
        %s177 = smul.u32 32, %s19
        %p178 = scmp.lt.s32.totalorder %s18, 1
        %s179 = scalar_select %p178, %s18, 1
        %p180 = scmp.lt.s32.totalorder %s177, 63
        %s181 = scalar_select %p180, %s177, 63
        %s182 = smul.addr %s179, 64
        %s183 = sadd.s32 %s181, %s182
        %s184 = smul.addr %s183, 4
        %s185 = scalar_lea.vmem %s0, %s184
        %s186 = smul.u32 32, %s19
      $region24: #{double_conv_block_forward.4} parent=19 // pred_fallthru
        _
    $region20: #{double_conv_block_forward.4} parent=5 // pred_fallthru
      _
    %p187 = scmp.le.s32.totalorder 1, %s11
    %p188 = scmp.lt.s32.totalorder %s11, 5
    %p189 = pnand %p187, %p188
    %p190 = pneg %p189
    // Predicated region
    $region25: #{double_conv_block_forward.4} parent=5 // pred_check
      _
    $region26: #{double_conv_block_forward.4} parent=5 // pred_check_branch
      %192 = sbr.rel (%p189) target = $region28
    $region27: #{double_conv_block_forward.4} parent=5 // pred_region
      %s193 = ssub.s32 %s11, 1
      %s194 = smul.u32 32, %s21
      %p195 = scmp.lt.s32.totalorder %s20, 1
      %s196 = scalar_select %p195, %s20, 1
      %p197 = scmp.lt.s32.totalorder %s194, 63
      %s198 = scalar_select %p197, %s194, 63
      %s199 = smul.addr %s196, 64
      %s200 = sadd.s32 %s198, %s199
      %s201 = smul.addr %s200, 4
      %s202 = scalar_lea.vmem %s0, %s201
      %p203 = pneg %p51
      %p204 = pneg %p48
      %p205 = pneg %p72
      %p206 = pneg %p69
      %p207 = pneg %p100
      %p208 = pneg %p97
      %s209 = smul.u32 32, %s21
      %p210 = scmp.lt.s32.totalorder %s20, 1
      %s211 = scalar_select %p210, %s20, 1
      %p212 = scmp.lt.s32.totalorder %s209, 63
      %s213 = scalar_select %p212, %s209, 63
      %s214 = smul.addr %s211, 64
      %s215 = sadd.s32 %s213, %s214
      %s216 = smul.addr %s215, 4
      %s217 = scalar_lea.vmem %s2, %s216
      %p218 = pneg %p126
      %p219 = pneg %p123
      %p220 = scmp.lt.s32.totalorder %s20, 1
      %s221 = scalar_select %p220, %s20, 1
      %s222 = scalar_lea.vmem %s3, %s221
      %p223 = pneg %p152
      %p224 = pneg %p149
      %p225 = scmp.lt.s32.totalorder %s20, 1
      %s226 = scalar_select %p225, %s20, 1
      %s227 = scalar_lea.vmem %s4, %s226
      %s228 = smul.u32 32, %s21
      %p229 = scmp.lt.s32.totalorder %s20, 1
      %s230 = scalar_select %p229, %s20, 1
      %p231 = scmp.lt.s32.totalorder %s228, 63
      %s232 = scalar_select %p231, %s228, 63
      %s233 = smul.addr %s230, 64
      %s234 = sadd.s32 %s232, %s233
      %s235 = smul.addr %s234, 4
      %s236 = scalar_lea.vmem %s0, %s235
      %s237 = smul.u32 32, %s21
      %s238 = smul.u32 32, %s21
      %p239 = scmp.lt.s32.totalorder %s20, 1
      %s240 = scalar_select %p239, %s20, 1
      %p241 = scmp.lt.s32.totalorder %s238, 63
      %s242 = scalar_select %p241, %s238, 63
      %s243 = smul.addr %s240, 64
      %s244 = sadd.s32 %s242, %s243
      %s245 = smul.addr %s244, 4
      %s246 = scalar_lea.vmem %s2, %s245
      %s247 = smul.u32 32, %s21
      %p248 = scmp.lt.s32.totalorder %s20, 1
      %s249 = scalar_select %p248, %s20, 1
      %s250 = scalar_lea.vmem %s3, %s249
      %p251 = scmp.lt.s32.totalorder %s20, 1
      %s252 = scalar_select %p251, %s20, 1
      %s253 = scalar_lea.vmem %s4, %s252
      %p255 = scmp.eq.s32.totalorder %s21, 0
      // Predicated region
      $region29: #{double_conv_block_forward.4} parent=27 // pred_check
        %p256 = pneg %p255
      $region30: #{double_conv_block_forward.4} parent=27 // pred_check_branch
        %258 = sbr.rel (%p256) target = $region32
      $region31: #{double_conv_block_forward.4} parent=27 // pred_region
        %259 = vst [vmem:[%s250] sm:$0x1] 0.0
        %260 = vst [vmem:[%s253] sm:$0x1] 0.0
      $region32: #{double_conv_block_forward.4} parent=27 // pred_fallthru
        _
      %v261 = vld [vmem:[%s236] sm:$0xf]
      %v262 = vld [vmem:[%s236 + $0x4] sm:$0xf]
      %v263 = vld [vmem:[%s236 + $0x8] sm:$0xf]
      %v264 = vld [vmem:[%s236 + $0xc] sm:$0xf]
      %v265 = vld [vmem:[%s236 + $0x10] sm:$0xf]
      %v266 = vld [vmem:[%s236 + $0x14] sm:$0xf]
      %v267 = vld [vmem:[%s236 + $0x18] sm:$0xf]
      %v268 = vld [vmem:[%s236 + $0x1c] sm:$0xf]
      %v269 = vld [vmem:[%s236 + $0x20] sm:$0xf]
      %v270 = vld [vmem:[%s236 + $0x24] sm:$0xf]
      %v271 = vld [vmem:[%s236 + $0x28] sm:$0xf]
      %v272 = vld [vmem:[%s236 + $0x2c] sm:$0xf]
      %v273 = vld [vmem:[%s236 + $0x30] sm:$0xf]
      %v274 = vld [vmem:[%s236 + $0x34] sm:$0xf]
      %v275 = vld [vmem:[%s236 + $0x38] sm:$0xf]
      %v276 = vld [vmem:[%s236 + $0x3c] sm:$0xf]
      %v277 = vld [vmem:[%s236 + $0x40] sm:$0xf]
      %v278 = vld [vmem:[%s236 + $0x44] sm:$0xf]
      %v279 = vld [vmem:[%s236 + $0x48] sm:$0xf]
      %v280 = vld [vmem:[%s236 + $0x4c] sm:$0xf]
      %v281 = vld [vmem:[%s236 + $0x50] sm:$0xf]
      %v282 = vld [vmem:[%s236 + $0x54] sm:$0xf]
      %v283 = vld [vmem:[%s236 + $0x58] sm:$0xf]
      %v284 = vld [vmem:[%s236 + $0x5c] sm:$0xf]
      %v285 = vld [vmem:[%s236 + $0x60] sm:$0xf]
      %v286 = vld [vmem:[%s236 + $0x64] sm:$0xf]
      %v287 = vld [vmem:[%s236 + $0x68] sm:$0xf]
      %v288 = vld [vmem:[%s236 + $0x6c] sm:$0xf]
      %v289 = vld [vmem:[%s236 + $0x70] sm:$0xf]
      %v290 = vld [vmem:[%s236 + $0x74] sm:$0xf]
      %v291 = vld [vmem:[%s236 + $0x78] sm:$0xf]
      %v292 = vld [vmem:[%s236 + $0x7c] sm:$0xf]
      %v293 = vld [vmem:[%s1] sm:$0xf]
      %v294 = vld [vmem:[%s1 + $0x4] sm:$0xf]
      %v295 = vld [vmem:[%s1 + $0x8] sm:$0xf]
      %v296 = vld [vmem:[%s1 + $0xc] sm:$0xf]
      %v297 = vld [vmem:[%s1 + $0x10] sm:$0xf]
      %v298 = vld [vmem:[%s1 + $0x14] sm:$0xf]
      %v299 = vld [vmem:[%s1 + $0x18] sm:$0xf]
      %v300 = vld [vmem:[%s1 + $0x1c] sm:$0xf]
      %v301 = vld [vmem:[%s1 + $0x20] sm:$0xf]
      %v302 = vld [vmem:[%s1 + $0x24] sm:$0xf]
      %v303 = vld [vmem:[%s1 + $0x28] sm:$0xf]
      %v304 = vld [vmem:[%s1 + $0x2c] sm:$0xf]
      %v305 = vld [vmem:[%s1 + $0x30] sm:$0xf]
      %v306 = vld [vmem:[%s1 + $0x34] sm:$0x3]
      %v339 = vunpack.c.l.b16 %v261
      %v340 = vunpack.c.l.b16 %v262
      %v341 = vunpack.c.l.b16 %v263
      %v342 = vunpack.c.l.b16 %v264
      %v343 = vunpack.c.l.b16 %v265
      %v344 = vunpack.c.l.b16 %v266
      %v345 = vunpack.c.l.b16 %v267
      %v346 = vunpack.c.l.b16 %v268
      %v347 = vunpack.c.l.b16 %v269
      %v348 = vunpack.c.l.b16 %v270
      %v349 = vunpack.c.l.b16 %v271
      %v350 = vunpack.c.l.b16 %v272
      %v351 = vunpack.c.l.b16 %v273
      %v352 = vunpack.c.l.b16 %v274
      %v353 = vunpack.c.l.b16 %v275
      %v354 = vunpack.c.l.b16 %v276
      %v355 = vunpack.c.l.b16 %v277
      %v356 = vunpack.c.l.b16 %v278
      %v357 = vunpack.c.l.b16 %v279
      %v358 = vunpack.c.l.b16 %v280
      %v359 = vunpack.c.l.b16 %v281
      %v360 = vunpack.c.l.b16 %v282
      %v361 = vunpack.c.l.b16 %v283
      %v362 = vunpack.c.l.b16 %v284
      %v363 = vunpack.c.l.b16 %v285
      %v364 = vunpack.c.l.b16 %v286
      %v365 = vunpack.c.l.b16 %v287
      %v366 = vunpack.c.l.b16 %v288
      %v367 = vunpack.c.l.b16 %v289
      %v368 = vunpack.c.l.b16 %v290
      %v369 = vunpack.c.l.b16 %v291
      %v370 = vunpack.c.l.b16 %v292
      %v371 = vpack.c.b16 %v340, %v339
      %v372 = vpack.c.b16 %v342, %v341
      %v373 = vpack.c.b16 %v344, %v343
      %v374 = vpack.c.b16 %v346, %v345
      %v375 = vpack.c.b16 %v348, %v347
      %v376 = vpack.c.b16 %v350, %v349
      %v377 = vpack.c.b16 %v352, %v351
      %v378 = vpack.c.b16 %v354, %v353
      %v379 = vpack.c.b16 %v356, %v355
      %v380 = vpack.c.b16 %v358, %v357
      %v381 = vpack.c.b16 %v360, %v359
      %v382 = vpack.c.b16 %v362, %v361
      %v383 = vpack.c.b16 %v364, %v363
      %v384 = vpack.c.b16 %v366, %v365
      %v385 = vpack.c.b16 %v368, %v367
      %v386 = vpack.c.b16 %v370, %v369
      %v401 = vunpack.c.l.b16 %v293
      %v402 = vunpack.c.l.b16 %v294
      %v403 = vunpack.c.l.b16 %v295
      %v404 = vunpack.c.l.b16 %v296
      %v405 = vunpack.c.l.b16 %v297
      %v406 = vunpack.c.l.b16 %v298
      %v407 = vunpack.c.l.b16 %v299
      %v408 = vunpack.c.l.b16 %v300
      %v409 = vunpack.c.l.b16 %v301
      %v410 = vunpack.c.l.b16 %v302
      %v411 = vunpack.c.l.b16 %v303
      %v412 = vunpack.c.l.b16 %v304
      %v413 = vunpack.c.l.b16 %v305
      %v414 = vunpack.c.l.b16 %v306
      %v415 = vpack.c.b16 %v402, %v401
      %v416 = vpack.c.b16 %v404, %v403
      %v417 = vpack.c.b16 %v406, %v405
      %v418 = vpack.c.b16 %v408, %v407
      %v419 = vpack.c.b16 %v410, %v409
      %v420 = vpack.c.b16 %v412, %v411
      %v421 = vpack.c.b16 %v414, %v413
      %vm428 = vcmask 883712
      %v430 = vsel %vm428, %v371, 0
      %v433 = vsel %vm428, %v372, 0
      %v436 = vsel %vm428, %v373, 0
      %v439 = vsel %vm428, %v374, 0
      %v442 = vsel %vm428, %v375, 0
      %v445 = vsel %vm428, %v376, 0
      %v448 = vsel %vm428, %v377, 0
      %v451 = vsel %vm428, %v378, 0
      %v454 = vsel %vm428, %v379, 0
      %v457 = vsel %vm428, %v380, 0
      %v460 = vsel %vm428, %v381, 0
      %v463 = vsel %vm428, %v382, 0
      %v466 = vsel %vm428, %v383, 0
      %v469 = vsel %vm428, %v384, 0
      %v472 = vsel %vm428, %v385, 0
      %v475 = vsel %vm428, %v386, 0
      %vm477 = vcmask 1045504
      %v479 = vsel %vm477, %v421, 0
      %481 = vmatpush.bf16.msra.mxu0 0
      %482 = vmatpush.bf16.msra.mxu0 %v479
      %483 = vmatpush.bf16.msra.mxu0 %v420
      %484 = vmatpush.bf16.msra.mxu0 %v419
      %485 = vmatpush.bf16.msra.mxu0 %v418
      %486 = vmatpush.bf16.msra.mxu0 %v417
      %487 = vmatpush.bf16.msra.mxu0 %v416
      %488 = vmatpush.bf16.msra.mxu0 %v415
      %489 = vmatmul.bf16.gmra.mxu0 %v430
      %v490 = vpop.f32.mrf.mxu0
      %v491 = vadd.f32 0.0, %v490
      %v492 = vpop.f32.mrf.mxu0
      %v493 = vadd.f32 0.0, %v492
      %494 = vmatmul.bf16.gmra.mxu0 %v433
      %v495 = vpop.f32.mrf.mxu0
      %v496 = vadd.f32 0.0, %v495
      %v497 = vpop.f32.mrf.mxu0
      %v498 = vadd.f32 0.0, %v497
      %499 = vmatmul.bf16.gmra.mxu0 %v436
      %v500 = vpop.f32.mrf.mxu0
      %v501 = vadd.f32 0.0, %v500
      %v502 = vpop.f32.mrf.mxu0
      %v503 = vadd.f32 0.0, %v502
      %504 = vmatmul.bf16.gmra.mxu0 %v439
      %v505 = vpop.f32.mrf.mxu0
      %v506 = vadd.f32 0.0, %v505
      %v507 = vpop.f32.mrf.mxu0
      %v508 = vadd.f32 0.0, %v507
      %509 = vmatmul.bf16.gmra.mxu0 %v442
      %v510 = vpop.f32.mrf.mxu0
      %v511 = vadd.f32 0.0, %v510
      %v512 = vpop.f32.mrf.mxu0
      %v513 = vadd.f32 0.0, %v512
      %514 = vmatmul.bf16.gmra.mxu0 %v445
      %v515 = vpop.f32.mrf.mxu0
      %v516 = vadd.f32 0.0, %v515
      %v517 = vpop.f32.mrf.mxu0
      %v518 = vadd.f32 0.0, %v517
      %519 = vmatmul.bf16.gmra.mxu0 %v448
      %v520 = vpop.f32.mrf.mxu0
      %v521 = vadd.f32 0.0, %v520
      %v522 = vpop.f32.mrf.mxu0
      %v523 = vadd.f32 0.0, %v522
      %524 = vmatmul.bf16.gmra.mxu0 %v451
      %v525 = vpop.f32.mrf.mxu0
      %v526 = vadd.f32 0.0, %v525
      %v527 = vpop.f32.mrf.mxu0
      %v528 = vadd.f32 0.0, %v527
      %529 = vmatmul.bf16.gmra.mxu0 %v454
      %v530 = vpop.f32.mrf.mxu0
      %v531 = vadd.f32 0.0, %v530
      %v532 = vpop.f32.mrf.mxu0
      %v533 = vadd.f32 0.0, %v532
      %534 = vmatmul.bf16.gmra.mxu0 %v457
      %v535 = vpop.f32.mrf.mxu0
      %v536 = vadd.f32 0.0, %v535
      %v537 = vpop.f32.mrf.mxu0
      %v538 = vadd.f32 0.0, %v537
      %539 = vmatmul.bf16.gmra.mxu0 %v460
      %v540 = vpop.f32.mrf.mxu0
      %v541 = vadd.f32 0.0, %v540
      %v542 = vpop.f32.mrf.mxu0
      %v543 = vadd.f32 0.0, %v542
      %544 = vmatmul.bf16.gmra.mxu0 %v463
      %v545 = vpop.f32.mrf.mxu0
      %v546 = vadd.f32 0.0, %v545
      %v547 = vpop.f32.mrf.mxu0
      %v548 = vadd.f32 0.0, %v547
      %549 = vmatmul.bf16.gmra.mxu0 %v466
      %v550 = vpop.f32.mrf.mxu0
      %v551 = vadd.f32 0.0, %v550
      %v552 = vpop.f32.mrf.mxu0
      %v553 = vadd.f32 0.0, %v552
      %554 = vmatmul.bf16.gmra.mxu0 %v469
      %v555 = vpop.f32.mrf.mxu0
      %v556 = vadd.f32 0.0, %v555
      %v557 = vpop.f32.mrf.mxu0
      %v558 = vadd.f32 0.0, %v557
      %559 = vmatmul.bf16.gmra.mxu0 %v472
      %v560 = vpop.f32.mrf.mxu0
      %v561 = vadd.f32 0.0, %v560
      %v562 = vpop.f32.mrf.mxu0
      %v563 = vadd.f32 0.0, %v562
      %564 = vmatmul.bf16.gmra.mxu0 %v475
      %v565 = vpop.f32.mrf.mxu0
      %v566 = vadd.f32 0.0, %v565
      %v567 = vpop.f32.mrf.mxu0
      %v568 = vadd.f32 0.0, %v567
      %569 = vdwg.mxu0
      %v570 = vpack.c.bf16 %v491, %v491
      %v571 = vpack.c.bf16 %v493, %v493
      %v572 = vpack.c.bf16 %v496, %v496
      %v573 = vpack.c.bf16 %v498, %v498
      %v574 = vpack.c.bf16 %v501, %v501
      %v575 = vpack.c.bf16 %v503, %v503
      %v576 = vpack.c.bf16 %v506, %v506
      %v577 = vpack.c.bf16 %v508, %v508
      %v578 = vpack.c.bf16 %v511, %v511
      %v579 = vpack.c.bf16 %v513, %v513
      %v580 = vpack.c.bf16 %v516, %v516
      %v581 = vpack.c.bf16 %v518, %v518
      %v582 = vpack.c.bf16 %v521, %v521
      %v583 = vpack.c.bf16 %v523, %v523
      %v584 = vpack.c.bf16 %v526, %v526
      %v585 = vpack.c.bf16 %v528, %v528
      %v586 = vpack.c.bf16 %v531, %v531
      %v587 = vpack.c.bf16 %v533, %v533
      %v588 = vpack.c.bf16 %v536, %v536
      %v589 = vpack.c.bf16 %v538, %v538
      %v590 = vpack.c.bf16 %v541, %v541
      %v591 = vpack.c.bf16 %v543, %v543
      %v592 = vpack.c.bf16 %v546, %v546
      %v593 = vpack.c.bf16 %v548, %v548
      %v594 = vpack.c.bf16 %v551, %v551
      %v595 = vpack.c.bf16 %v553, %v553
      %v596 = vpack.c.bf16 %v556, %v556
      %v597 = vpack.c.bf16 %v558, %v558
      %v598 = vpack.c.bf16 %v561, %v561
      %v599 = vpack.c.bf16 %v563, %v563
      %v600 = vpack.c.bf16 %v566, %v566
      %v601 = vpack.c.bf16 %v568, %v568
      %vm602 = vcmask 257024
      %603 = vst.msk [vmem:[%s246] sm:$0xf] %vm602, %v570
      %604 = vst.msk [vmem:[%s246 + $0x4] sm:$0xf] %vm602, %v571
      %605 = vst.msk [vmem:[%s246 + $0x8] sm:$0xf] %vm602, %v572
      %606 = vst.msk [vmem:[%s246 + $0xc] sm:$0xf] %vm602, %v573
      %607 = vst.msk [vmem:[%s246 + $0x10] sm:$0xf] %vm602, %v574
      %608 = vst.msk [vmem:[%s246 + $0x14] sm:$0xf] %vm602, %v575
      %609 = vst.msk [vmem:[%s246 + $0x18] sm:$0xf] %vm602, %v576
      %610 = vst.msk [vmem:[%s246 + $0x1c] sm:$0xf] %vm602, %v577
      %611 = vst.msk [vmem:[%s246 + $0x20] sm:$0xf] %vm602, %v578
      %612 = vst.msk [vmem:[%s246 + $0x24] sm:$0xf] %vm602, %v579
      %613 = vst.msk [vmem:[%s246 + $0x28] sm:$0xf] %vm602, %v580
      %614 = vst.msk [vmem:[%s246 + $0x2c] sm:$0xf] %vm602, %v581
      %615 = vst.msk [vmem:[%s246 + $0x30] sm:$0xf] %vm602, %v582
      %616 = vst.msk [vmem:[%s246 + $0x34] sm:$0xf] %vm602, %v583
      %617 = vst.msk [vmem:[%s246 + $0x38] sm:$0xf] %vm602, %v584
      %618 = vst.msk [vmem:[%s246 + $0x3c] sm:$0xf] %vm602, %v585
      %619 = vst.msk [vmem:[%s246 + $0x40] sm:$0xf] %vm602, %v586
      %620 = vst.msk [vmem:[%s246 + $0x44] sm:$0xf] %vm602, %v587
      %621 = vst.msk [vmem:[%s246 + $0x48] sm:$0xf] %vm602, %v588
      %622 = vst.msk [vmem:[%s246 + $0x4c] sm:$0xf] %vm602, %v589
      %623 = vst.msk [vmem:[%s246 + $0x50] sm:$0xf] %vm602, %v590
      %624 = vst.msk [vmem:[%s246 + $0x54] sm:$0xf] %vm602, %v591
      %625 = vst.msk [vmem:[%s246 + $0x58] sm:$0xf] %vm602, %v592
      %626 = vst.msk [vmem:[%s246 + $0x5c] sm:$0xf] %vm602, %v593
      %627 = vst.msk [vmem:[%s246 + $0x60] sm:$0xf] %vm602, %v594
      %628 = vst.msk [vmem:[%s246 + $0x64] sm:$0xf] %vm602, %v595
      %629 = vst.msk [vmem:[%s246 + $0x68] sm:$0xf] %vm602, %v596
      %630 = vst.msk [vmem:[%s246 + $0x6c] sm:$0xf] %vm602, %v597
      %631 = vst.msk [vmem:[%s246 + $0x70] sm:$0xf] %vm602, %v598
      %632 = vst.msk [vmem:[%s246 + $0x74] sm:$0xf] %vm602, %v599
      %633 = vst.msk [vmem:[%s246 + $0x78] sm:$0xf] %vm602, %v600
      %634 = vst.msk [vmem:[%s246 + $0x7c] sm:$0xf] %vm602, %v601
      %v635 = vld [vmem:[%s250] sm:$0x1]
      %v636 = vadd.f32 %v491, %v493
      %v637 = vadd.f32 %v636, %v496
      %v638 = vadd.f32 %v637, %v498
      %v639 = vadd.f32 %v638, %v501
      %v640 = vadd.f32 %v639, %v503
      %v641 = vadd.f32 %v640, %v506
      %v642 = vadd.f32 %v641, %v508
      %v643 = vadd.f32 %v642, %v511
      %v644 = vadd.f32 %v643, %v513
      %v645 = vadd.f32 %v644, %v516
      %v646 = vadd.f32 %v645, %v518
      %v647 = vadd.f32 %v646, %v521
      %v648 = vadd.f32 %v647, %v523
      %v649 = vadd.f32 %v648, %v526
      %v650 = vadd.f32 %v649, %v528
      %v651 = vadd.f32 %v650, %v531
      %v652 = vadd.f32 %v651, %v533
      %v653 = vadd.f32 %v652, %v536
      %v654 = vadd.f32 %v653, %v538
      %v655 = vadd.f32 %v654, %v541
      %v656 = vadd.f32 %v655, %v543
      %v657 = vadd.f32 %v656, %v546
      %v658 = vadd.f32 %v657, %v548
      %v659 = vadd.f32 %v658, %v551
      %v660 = vadd.f32 %v659, %v553
      %v661 = vadd.f32 %v660, %v556
      %v662 = vadd.f32 %v661, %v558
      %v663 = vadd.f32 %v662, %v561
      %v664 = vadd.f32 %v663, %v563
      %v665 = vadd.f32 %v664, %v566
      %v666 = vadd.f32 %v665, %v568
      %v667 = vrot.slane %v666, 4
      %v668 = vadd.f32 %v666, %v667
      %v669 = vrot.slane %v668, 2
      %v670 = vadd.f32 %v668, %v669
      %v671 = vrot.slane %v670, 1
      %v672 = vadd.f32 %v670, %v671
      %v673 = vadd.f32 %v635, %v672
      %674 = vst [vmem:[%s250] sm:$0x1] %v673
      %v675 = vld [vmem:[%s253] sm:$0x1]
      %v676 = vmul.f32 %v491, %v491
      %v677 = vmul.f32 %v493, %v493
      %v678 = vmul.f32 %v496, %v496
      %v679 = vmul.f32 %v498, %v498
      %v680 = vmul.f32 %v501, %v501
      %v681 = vmul.f32 %v503, %v503
      %v682 = vmul.f32 %v506, %v506
      %v683 = vmul.f32 %v508, %v508
      %v684 = vmul.f32 %v511, %v511
      %v685 = vmul.f32 %v513, %v513
      %v686 = vmul.f32 %v516, %v516
      %v687 = vmul.f32 %v518, %v518
      %v688 = vmul.f32 %v521, %v521
      %v689 = vmul.f32 %v523, %v523
      %v690 = vmul.f32 %v526, %v526
      %v691 = vmul.f32 %v528, %v528
      %v692 = vmul.f32 %v531, %v531
      %v693 = vmul.f32 %v533, %v533
      %v694 = vmul.f32 %v536, %v536
      %v695 = vmul.f32 %v538, %v538
      %v696 = vmul.f32 %v541, %v541
      %v697 = vmul.f32 %v543, %v543
      %v698 = vmul.f32 %v546, %v546
      %v699 = vmul.f32 %v548, %v548
      %v700 = vmul.f32 %v551, %v551
      %v701 = vmul.f32 %v553, %v553
      %v702 = vmul.f32 %v556, %v556
      %v703 = vmul.f32 %v558, %v558
      %v704 = vmul.f32 %v561, %v561
      %v705 = vmul.f32 %v563, %v563
      %v706 = vmul.f32 %v566, %v566
      %v707 = vmul.f32 %v568, %v568
      %v708 = vadd.f32 %v676, %v677
      %v709 = vadd.f32 %v708, %v678
      %v710 = vadd.f32 %v709, %v679
      %v711 = vadd.f32 %v710, %v680
      %v712 = vadd.f32 %v711, %v681
      %v713 = vadd.f32 %v712, %v682
      %v714 = vadd.f32 %v713, %v683
      %v715 = vadd.f32 %v714, %v684
      %v716 = vadd.f32 %v715, %v685
      %v717 = vadd.f32 %v716, %v686
      %v718 = vadd.f32 %v717, %v687
      %v719 = vadd.f32 %v718, %v688
      %v720 = vadd.f32 %v719, %v689
      %v721 = vadd.f32 %v720, %v690
      %v722 = vadd.f32 %v721, %v691
      %v723 = vadd.f32 %v722, %v692
      %v724 = vadd.f32 %v723, %v693
      %v725 = vadd.f32 %v724, %v694
      %v726 = vadd.f32 %v725, %v695
      %v727 = vadd.f32 %v726, %v696
      %v728 = vadd.f32 %v727, %v697
      %v729 = vadd.f32 %v728, %v698
      %v730 = vadd.f32 %v729, %v699
      %v731 = vadd.f32 %v730, %v700
      %v732 = vadd.f32 %v731, %v701
      %v733 = vadd.f32 %v732, %v702
      %v734 = vadd.f32 %v733, %v703
      %v735 = vadd.f32 %v734, %v704
      %v736 = vadd.f32 %v735, %v705
      %v737 = vadd.f32 %v736, %v706
      %v738 = vadd.f32 %v737, %v707
      %v739 = vrot.slane %v738, 4
      %v740 = vadd.f32 %v738, %v739
      %v741 = vrot.slane %v740, 2
      %v742 = vadd.f32 %v740, %v741
      %v743 = vrot.slane %v742, 1
      %v744 = vadd.f32 %v742, %v743
      %v745 = vadd.f32 %v675, %v744
      %746 = vst [vmem:[%s253] sm:$0x1] %v745
      %s747 = smul.u32 32, %s21
      %p748 = scmp.lt.s32.totalorder %s20, 1
      %s749 = scalar_select %p748, %s20, 1
      %p750 = scmp.lt.s32.totalorder %s747, 63
      %s751 = scalar_select %p750, %s747, 63
      %s752 = smul.addr %s749, 64
      %s753 = sadd.s32 %s751, %s752
      %s754 = smul.addr %s753, 4
      %s755 = scalar_lea.vmem %s2, %s754
      %p756 = scmp.lt.s32.totalorder %s20, 1
      %s757 = scalar_select %p756, %s20, 1
      %s758 = scalar_lea.vmem %s3, %s757
      %p759 = scmp.lt.s32.totalorder %s20, 1
      %s760 = scalar_select %p759, %s20, 1
      %s761 = scalar_lea.vmem %s4, %s760
      // Predicated region
      $region33: #{double_conv_block_forward.4} parent=27 // pred_check
        %p762 = pneg %p97
      $region34: #{double_conv_block_forward.4} parent=27 // pred_check_branch
        %764 = sbr.rel (%p762) target = $region36
      $region35: #{double_conv_block_forward.4} parent=27 // pred_region
        %s765 = smul.u32 32, %s21
      $region36: #{double_conv_block_forward.4} parent=27 // pred_fallthru
        _
      // Predicated region
      $region37: #{double_conv_block_forward.4} parent=27 // pred_check
        %p766 = pneg %p123
      $region38: #{double_conv_block_forward.4} parent=27 // pred_check_branch
        %768 = sbr.rel (%p766) target = $region40
      $region39: #{double_conv_block_forward.4} parent=27 // pred_region
        _
      $region40: #{double_conv_block_forward.4} parent=27 // pred_fallthru
        _
      // Predicated region
      $region41: #{double_conv_block_forward.4} parent=27 // pred_check
        %p769 = pneg %p149
      $region42: #{double_conv_block_forward.4} parent=27 // pred_check_branch
        %771 = sbr.rel (%p769) target = $region44
      $region43: #{double_conv_block_forward.4} parent=27 // pred_region
        _
      $region44: #{double_conv_block_forward.4} parent=27 // pred_fallthru
        _
    $region28: #{double_conv_block_forward.4} parent=5 // pred_fallthru
      _
    %p772 = scmp.le.s32.totalorder 2, %s11
    // Predicated region
    $region45: #{double_conv_block_forward.4} parent=5 // pred_check
      %p773 = pneg %p772
    $region46: #{double_conv_block_forward.4} parent=5 // pred_check_branch
      %775 = sbr.rel (%p773) target = $region48
    $region47: #{double_conv_block_forward.4} parent=5 // pred_region
      %s776 = ssub.s32 %s11, 2
      // Predicated region
      $region49: #{double_conv_block_forward.4} parent=47 // pred_check
        %p777 = pneg %p103
      $region50: #{double_conv_block_forward.4} parent=47 // pred_check_branch
        %779 = sbr.rel (%p777) target = $region52
      $region51: #{double_conv_block_forward.4} parent=47 // pred_region
        %s780 = smul.u32 32, %s23
        %p781 = scmp.lt.s32.totalorder %s22, 1
        %s782 = scalar_select %p781, %s22, 1
        %p783 = scmp.lt.s32.totalorder %s780, 63
        %s784 = scalar_select %p783, %s780, 63
        %s785 = smul.addr %s782, 64
        %s786 = sadd.s32 %s784, %s785
        %s787 = smul.addr %s786, 4
        %s788 = scalar_lea.vmem %s2, %s787
      $region52: #{double_conv_block_forward.4} parent=47 // pred_fallthru
        _
      // Predicated region
      $region53: #{double_conv_block_forward.4} parent=47 // pred_check
        %p789 = pneg %p129
      $region54: #{double_conv_block_forward.4} parent=47 // pred_check_branch
        %791 = sbr.rel (%p789) target = $region56
      $region55: #{double_conv_block_forward.4} parent=47 // pred_region
        %p792 = scmp.lt.s32.totalorder %s22, 1
        %s793 = scalar_select %p792, %s22, 1
        %s794 = scalar_lea.vmem %s3, %s793
      $region56: #{double_conv_block_forward.4} parent=47 // pred_fallthru
        _
      // Predicated region
      $region57: #{double_conv_block_forward.4} parent=47 // pred_check
        %p795 = pneg %p155
      $region58: #{double_conv_block_forward.4} parent=47 // pred_check_branch
        %797 = sbr.rel (%p795) target = $region60
      $region59: #{double_conv_block_forward.4} parent=47 // pred_region
        %p798 = scmp.lt.s32.totalorder %s22, 1
        %s799 = scalar_select %p798, %s22, 1
        %s800 = scalar_lea.vmem %s4, %s799
      $region60: #{double_conv_block_forward.4} parent=47 // pred_fallthru
        _
    $region48: #{double_conv_block_forward.4} parent=5 // pred_fallthru
      _
  $region6: #{double_conv_block_forward.4} parent=0 // loop_footer
    %s15 = sadd.s32 1, %s11
  $region7: #{double_conv_block_forward.4} parent=0 // loop_footer_branch
    %10 = sbr.rel target = $region3
  $region8: #{double_conv_block_forward.4} parent=0 // loop_exit
    _

// kernel: double_conv_block_forward.5
$region0: #{double_conv_block_forward.5}
  #allocation0 [shape = 'u32[]', space=smem, size = 0x4, offset = 0x4, fixed_abs, tag = 'smem constant byte address 0x4 - core index']
  #allocation1 [shape = 'u32[72,128]{1,0:T(1,128)}', space=vmem, size = 0x9000, scoped, tag = 'internal scratch']
  %s0 = inlined_call_operand.vmem [shape: bf16[2,512,32], index: 0, kind: input, shape index: {}]
  %s1 = inlined_call_operand.vmem [shape: f32[2,1,32], index: 1, kind: input, shape index: {}]
  %s2 = inlined_call_operand.vmem [shape: f32[2,1,32], index: 2, kind: input, shape index: {}]
  %s3 = inlined_call_operand.vmem [shape: bf16[2,512,32], index: 3, kind: output, shape index: {}]
  %s4 = sld [smem:[#allocation0]]
  $region45: #{double_conv_block_forward.5} parent=0
    _
  %s6 = ssub.s32 1, %s4
  %s7 = scalar_select 0, %s6, %s4
  loop: start=0, step=1, limit=4
  $region2: #{double_conv_block_forward.5} parent=0 // loop_pre_header
    _
  $region3: #{double_conv_block_forward.5} parent=0 // loop_header
    %s9 = sphi 0, %s13
    %p10 = scmp.ge.s32.totalorder %s9, 4
    %s16 = sphi 0, %s28
    %s17 = sphi 0, %s24
    %s18 = sphi 0, %s16
    %s19 = sphi 0, %s17
    %s20 = sphi 0, %s18
    %s21 = sphi 0, %s19
    %s33 = sphi 0, %s35
    %s36 = sphi 0, %s33
    %s37 = sphi 0, %s36
    %s53 = sphi 0, %s37
    %s59 = sphi 0, %s61
    %s62 = sphi 0, %s59
    %s63 = sphi 0, %s62
    %s79 = sphi 0, %s63
    %s85 = sphi 0, %s87
    %s88 = sphi 0, %s85
    %s89 = sphi 0, %s88
    %s105 = sphi 0, %s89
    %s113 = sphi 0, %s115
    %s116 = sphi 0, %s113
    %s117 = sphi 0, %s116
    %s133 = sphi 0, %s117
  $region4: #{double_conv_block_forward.5} parent=0 // loop_header_branch
    %12 = sbr.rel (%p10) target = $region8
  $region5: #{double_conv_block_forward.5} parent=0 // loop_body
    %s14 = ssub.s32 %s9, 1
    %s15 = ssub.s32 %s9, 2
    %s22 = sadd.s32 1, %s17
    %p23 = scmp.ge.s32.totalorder %s22, 1
    %s24 = scalar_select %p23, 0, %s22
    %s25 = sadd.s32 1, %s16
    %s26 = scalar_select %p23, %s25, %s16
    %p27 = scmp.ge.s32.totalorder %s26, 2
    %s28 = scalar_select %p27, 0, %s26
    %s29 = ssub.s32 %s16, %s28
    %s30 = ssub.s32 %s17, %s24
    %s31 = sor.u32 %s29, %s30
    %p32 = scmp.eq.s32.totalorder %s31, 0
    %s34 = sadd.s32 %s33, 1
    %s35 = scalar_select %p32, %s33, %s34
    %p38 = pneg %p32
    %p39 = scmp.eq.s32.totalorder %s9, 1
    %p40 = por %p38, %p39
    %p41 = scmp.ne.s32.totalorder %s33, %s36
    %p42 = scmp.eq.s32.totalorder %s9, 0
    %p43 = por %p41, %p42
    %p44 = scmp.ne.s32.totalorder %s33, %s36
    %p45 = scmp.eq.s32.totalorder %s14, 1
    %p46 = por %p44, %p45
    %p47 = scmp.ne.s32.totalorder %s36, %s37
    %p48 = scmp.eq.s32.totalorder %s14, 0
    %p49 = por %p47, %p48
    %p50 = scmp.ne.s32.totalorder %s36, %s37
    %p51 = scmp.eq.s32.totalorder %s15, 1
    %p52 = por %p50, %p51
    %p54 = scmp.ne.s32.totalorder %s37, %s53
    %p55 = scmp.eq.s32.totalorder %s15, 0
    %p56 = por %p54, %p55
    %s57 = ssub.s32 %s16, %s28
    %p58 = scmp.eq.s32.totalorder %s57, 0
    %s60 = sadd.s32 %s59, 1
    %s61 = scalar_select %p58, %s59, %s60
    %p64 = pneg %p58
    %p65 = scmp.eq.s32.totalorder %s9, 1
    %p66 = por %p64, %p65
    %p67 = scmp.ne.s32.totalorder %s59, %s62
    %p68 = scmp.eq.s32.totalorder %s9, 0
    %p69 = por %p67, %p68
    %p70 = scmp.ne.s32.totalorder %s59, %s62
    %p71 = scmp.eq.s32.totalorder %s14, 1
    %p72 = por %p70, %p71
    %p73 = scmp.ne.s32.totalorder %s62, %s63
    %p74 = scmp.eq.s32.totalorder %s14, 0
    %p75 = por %p73, %p74
    %p76 = scmp.ne.s32.totalorder %s62, %s63
    %p77 = scmp.eq.s32.totalorder %s15, 1
    %p78 = por %p76, %p77
    %p80 = scmp.ne.s32.totalorder %s63, %s79
    %p81 = scmp.eq.s32.totalorder %s15, 0
    %p82 = por %p80, %p81
    %s83 = ssub.s32 %s16, %s28
    %p84 = scmp.eq.s32.totalorder %s83, 0
    %s86 = sadd.s32 %s85, 1
    %s87 = scalar_select %p84, %s85, %s86
    %p90 = pneg %p84
    %p91 = scmp.eq.s32.totalorder %s9, 1
    %p92 = por %p90, %p91
    %p93 = scmp.ne.s32.totalorder %s85, %s88
    %p94 = scmp.eq.s32.totalorder %s9, 0
    %p95 = por %p93, %p94
    %p96 = scmp.ne.s32.totalorder %s85, %s88
    %p97 = scmp.eq.s32.totalorder %s14, 1
    %p98 = por %p96, %p97
    %p99 = scmp.ne.s32.totalorder %s88, %s89
    %p100 = scmp.eq.s32.totalorder %s14, 0
    %p101 = por %p99, %p100
    %p102 = scmp.ne.s32.totalorder %s88, %s89
    %p103 = scmp.eq.s32.totalorder %s15, 1
    %p104 = por %p102, %p103
    %p106 = scmp.ne.s32.totalorder %s89, %s105
    %p107 = scmp.eq.s32.totalorder %s15, 0
    %p108 = por %p106, %p107
    %s109 = ssub.s32 %s16, %s28
    %s110 = ssub.s32 %s17, %s24
    %s111 = sor.u32 %s109, %s110
    %p112 = scmp.eq.s32.totalorder %s111, 0
    %s114 = sadd.s32 %s113, 1
    %s115 = scalar_select %p112, %s113, %s114
    %p118 = pneg %p112
    %p119 = scmp.eq.s32.totalorder %s9, 1
    %p120 = por %p118, %p119
    %p121 = scmp.ne.s32.totalorder %s113, %s116
    %p122 = scmp.eq.s32.totalorder %s9, 0
    %p123 = por %p121, %p122
    %p124 = scmp.ne.s32.totalorder %s113, %s116
    %p125 = scmp.eq.s32.totalorder %s14, 1
    %p126 = por %p124, %p125
    %p127 = scmp.ne.s32.totalorder %s116, %s117
    %p128 = scmp.eq.s32.totalorder %s14, 0
    %p129 = por %p127, %p128
    %p130 = scmp.ne.s32.totalorder %s116, %s117
    %p131 = scmp.eq.s32.totalorder %s15, 1
    %p132 = por %p130, %p131
    %p134 = scmp.ne.s32.totalorder %s117, %s133
    %p135 = scmp.eq.s32.totalorder %s15, 0
    %p136 = por %p134, %p135
    %p137 = scmp.le.s32.totalorder 1, %s9
    %p138 = scmp.lt.s32.totalorder %s9, 3
    %p139 = pnand %p137, %p138
    %p140 = pneg %p139
    // Predicated region
    $region9: #{double_conv_block_forward.5} parent=5 // pred_check
      _
    $region10: #{double_conv_block_forward.5} parent=5 // pred_check_branch
      %142 = sbr.rel (%p139) target = $region12
    $region11: #{double_conv_block_forward.5} parent=5 // pred_region
      %s143 = ssub.s32 %s9, 1
    $region12: #{double_conv_block_forward.5} parent=5 // pred_fallthru
      _
    %p144 = scmp.lt.s32.totalorder %s9, 2
    // Predicated region
    $region13: #{double_conv_block_forward.5} parent=5 // pred_check
      %p145 = pneg %p144
    $region14: #{double_conv_block_forward.5} parent=5 // pred_check_branch
      %147 = sbr.rel (%p145) target = $region16
    $region15: #{double_conv_block_forward.5} parent=5 // pred_region
      // Predicated region
      $region17: #{double_conv_block_forward.5} parent=15 // pred_check
        %p148 = pneg %p43
      $region18: #{double_conv_block_forward.5} parent=15 // pred_check_branch
        %150 = sbr.rel (%p148) target = $region20
      $region19: #{double_conv_block_forward.5} parent=15 // pred_region
        %s151 = smul.u32 64, %s17
        %p152 = scmp.lt.s32.totalorder %s16, 1
        %s153 = scalar_select %p152, %s16, 1
        %p154 = scmp.lt.s32.totalorder %s151, 63
        %s155 = scalar_select %p154, %s151, 63
        %s156 = smul.addr %s153, 64
        %s157 = sadd.s32 %s155, %s156
        %s158 = smul.addr %s157, 4
        %s159 = scalar_lea.vmem %s0, %s158
        %s160 = smul.u32 64, %s17
      $region20: #{double_conv_block_forward.5} parent=15 // pred_fallthru
        _
      // Predicated region
      $region21: #{double_conv_block_forward.5} parent=15 // pred_check
        %p161 = pneg %p69
      $region22: #{double_conv_block_forward.5} parent=15 // pred_check_branch
        %163 = sbr.rel (%p161) target = $region24
      $region23: #{double_conv_block_forward.5} parent=15 // pred_region
        %p164 = scmp.lt.s32.totalorder %s16, 1
        %s165 = scalar_select %p164, %s16, 1
        %s166 = scalar_lea.vmem %s1, %s165
      $region24: #{double_conv_block_forward.5} parent=15 // pred_fallthru
        _
      // Predicated region
      $region25: #{double_conv_block_forward.5} parent=15 // pred_check
        %p167 = pneg %p95
      $region26: #{double_conv_block_forward.5} parent=15 // pred_check_branch
        %169 = sbr.rel (%p167) target = $region28
      $region27: #{double_conv_block_forward.5} parent=15 // pred_region
        %p170 = scmp.lt.s32.totalorder %s16, 1
        %s171 = scalar_select %p170, %s16, 1
        %s172 = scalar_lea.vmem %s2, %s171
      $region28: #{double_conv_block_forward.5} parent=15 // pred_fallthru
        _
    $region16: #{double_conv_block_forward.5} parent=5 // pred_fallthru
      _
    %p173 = scmp.le.s32.totalorder 1, %s9
    %p174 = scmp.lt.s32.totalorder %s9, 3
    %p175 = pnand %p173, %p174
    %p176 = pneg %p175
    // Predicated region
    $region29: #{double_conv_block_forward.5} parent=5 // pred_check
      _
    $region30: #{double_conv_block_forward.5} parent=5 // pred_check_branch
      %178 = sbr.rel (%p175) target = $region32
    $region31: #{double_conv_block_forward.5} parent=5 // pred_region
      %s179 = ssub.s32 %s9, 1
      %s180 = smul.u32 64, %s19
      %p181 = scmp.lt.s32.totalorder %s18, 1
      %s182 = scalar_select %p181, %s18, 1
      %p183 = scmp.lt.s32.totalorder %s180, 63
      %s184 = scalar_select %p183, %s180, 63
      %s185 = smul.addr %s182, 64
      %s186 = sadd.s32 %s184, %s185
      %s187 = smul.addr %s186, 4
      %s188 = scalar_lea.vmem %s0, %s187
      %p189 = pneg %p49
      %p190 = pneg %p46
      %p191 = scmp.lt.s32.totalorder %s18, 1
      %s192 = scalar_select %p191, %s18, 1
      %s193 = scalar_lea.vmem %s1, %s192
      %p194 = pneg %p75
      %p195 = pneg %p72
      %p196 = scmp.lt.s32.totalorder %s18, 1
      %s197 = scalar_select %p196, %s18, 1
      %s198 = scalar_lea.vmem %s2, %s197
      %p199 = pneg %p101
      %p200 = pneg %p98
      %p201 = pneg %p129
      %p202 = pneg %p126
      %s203 = smul.u32 64, %s19
      %p204 = scmp.lt.s32.totalorder %s18, 1
      %s205 = scalar_select %p204, %s18, 1
      %p206 = scmp.lt.s32.totalorder %s203, 63
      %s207 = scalar_select %p206, %s203, 63
      %s208 = smul.addr %s205, 64
      %s209 = sadd.s32 %s207, %s208
      %s210 = smul.addr %s209, 4
      %s211 = scalar_lea.vmem %s3, %s210
      %s212 = smul.u32 64, %s19
      %p213 = scmp.lt.s32.totalorder %s18, 1
      %s214 = scalar_select %p213, %s18, 1
      %p215 = scmp.lt.s32.totalorder %s212, 63
      %s216 = scalar_select %p215, %s212, 63
      %s217 = smul.addr %s214, 64
      %s218 = sadd.s32 %s216, %s217
      %s219 = smul.addr %s218, 4
      %s220 = scalar_lea.vmem %s0, %s219
      %s221 = smul.u32 64, %s19
      %p222 = scmp.lt.s32.totalorder %s18, 1
      %s223 = scalar_select %p222, %s18, 1
      %s224 = scalar_lea.vmem %s1, %s223
      %p225 = scmp.lt.s32.totalorder %s18, 1
      %s226 = scalar_select %p225, %s18, 1
      %s227 = scalar_lea.vmem %s2, %s226
      %s228 = smul.u32 64, %s19
      %p229 = scmp.lt.s32.totalorder %s18, 1
      %s230 = scalar_select %p229, %s18, 1
      %p231 = scmp.lt.s32.totalorder %s228, 63
      %s232 = scalar_select %p231, %s228, 63
      %s233 = smul.addr %s230, 64
      %s234 = sadd.s32 %s232, %s233
      %s235 = smul.addr %s234, 4
      %s236 = scalar_lea.vmem %s3, %s235
      %s237 = smul.u32 64, %s19
      %v238 = vld [vmem:[%s220] sm:$0xf]
      %v239 = vld [vmem:[%s220 + $0x4] sm:$0xf]
      %v240 = vld [vmem:[%s220 + $0x8] sm:$0xf]
      %v241 = vld [vmem:[%s220 + $0xc] sm:$0xf]
      %v242 = vld [vmem:[%s220 + $0x10] sm:$0xf]
      %v243 = vld [vmem:[%s220 + $0x14] sm:$0xf]
      %v244 = vld [vmem:[%s220 + $0x18] sm:$0xf]
      %v245 = vld [vmem:[%s220 + $0x1c] sm:$0xf]
      %v246 = vld [vmem:[%s220 + $0x20] sm:$0xf]
      %v247 = vld [vmem:[%s220 + $0x24] sm:$0xf]
      %v248 = vld [vmem:[%s220 + $0x28] sm:$0xf]
      %v249 = vld [vmem:[%s220 + $0x2c] sm:$0xf]
      %v250 = vld [vmem:[%s220 + $0x30] sm:$0xf]
      %v251 = vld [vmem:[%s220 + $0x34] sm:$0xf]
      %v252 = vld [vmem:[%s220 + $0x38] sm:$0xf]
      %v253 = vld [vmem:[%s220 + $0x3c] sm:$0xf]
      %v254 = vld [vmem:[%s220 + $0x40] sm:$0xf]
      %v255 = vld [vmem:[%s220 + $0x44] sm:$0xf]
      %v256 = vld [vmem:[%s220 + $0x48] sm:$0xf]
      %v257 = vld [vmem:[%s220 + $0x4c] sm:$0xf]
      %v258 = vld [vmem:[%s220 + $0x50] sm:$0xf]
      %v259 = vld [vmem:[%s220 + $0x54] sm:$0xf]
      %v260 = vld [vmem:[%s220 + $0x58] sm:$0xf]
      %v261 = vld [vmem:[%s220 + $0x5c] sm:$0xf]
      %v262 = vld [vmem:[%s220 + $0x60] sm:$0xf]
      %v263 = vld [vmem:[%s220 + $0x64] sm:$0xf]
      %v264 = vld [vmem:[%s220 + $0x68] sm:$0xf]
      %v265 = vld [vmem:[%s220 + $0x6c] sm:$0xf]
      %v266 = vld [vmem:[%s220 + $0x70] sm:$0xf]
      %v267 = vld [vmem:[%s220 + $0x74] sm:$0xf]
      %v268 = vld [vmem:[%s220 + $0x78] sm:$0xf]
      %v269 = vld [vmem:[%s220 + $0x7c] sm:$0xf]
      %v270 = vld [vmem:[%s220 + $0x80] sm:$0xf]
      %v271 = vld [vmem:[%s220 + $0x84] sm:$0xf]
      %v272 = vld [vmem:[%s220 + $0x88] sm:$0xf]
      %v273 = vld [vmem:[%s220 + $0x8c] sm:$0xf]
      %v274 = vld [vmem:[%s220 + $0x90] sm:$0xf]
      %v275 = vld [vmem:[%s220 + $0x94] sm:$0xf]
      %v276 = vld [vmem:[%s220 + $0x98] sm:$0xf]
      %v277 = vld [vmem:[%s220 + $0x9c] sm:$0xf]
      %v278 = vld [vmem:[%s220 + $0xa0] sm:$0xf]
      %v279 = vld [vmem:[%s220 + $0xa4] sm:$0xf]
      %v280 = vld [vmem:[%s220 + $0xa8] sm:$0xf]
      %v281 = vld [vmem:[%s220 + $0xac] sm:$0xf]
      %v282 = vld [vmem:[%s220 + $0xb0] sm:$0xf]
      %v283 = vld [vmem:[%s220 + $0xb4] sm:$0xf]
      %v284 = vld [vmem:[%s220 + $0xb8] sm:$0xf]
      %v285 = vld [vmem:[%s220 + $0xbc] sm:$0xf]
      %v286 = vld [vmem:[%s220 + $0xc0] sm:$0xf]
      %v287 = vld [vmem:[%s220 + $0xc4] sm:$0xf]
      %v288 = vld [vmem:[%s220 + $0xc8] sm:$0xf]
      %v289 = vld [vmem:[%s220 + $0xcc] sm:$0xf]
      %v290 = vld [vmem:[%s220 + $0xd0] sm:$0xf]
      %v291 = vld [vmem:[%s220 + $0xd4] sm:$0xf]
      %v292 = vld [vmem:[%s220 + $0xd8] sm:$0xf]
      %v293 = vld [vmem:[%s220 + $0xdc] sm:$0xf]
      %v294 = vld [vmem:[%s220 + $0xe0] sm:$0xf]
      %v295 = vld [vmem:[%s220 + $0xe4] sm:$0xf]
      %v296 = vld [vmem:[%s220 + $0xe8] sm:$0xf]
      %v297 = vld [vmem:[%s220 + $0xec] sm:$0xf]
      %v298 = vld [vmem:[%s220 + $0xf0] sm:$0xf]
      %v299 = vld [vmem:[%s220 + $0xf4] sm:$0xf]
      %v300 = vld [vmem:[%s220 + $0xf8] sm:$0xf]
      %v301 = vld [vmem:[%s220 + $0xfc] sm:$0xf]
      %v302 = vunpack.c.l.bf16 %v238
      %v303 = vunpack.c.l.bf16 %v239
      %v304 = vunpack.c.l.bf16 %v240
      %v305 = vunpack.c.l.bf16 %v241
      %v306 = vunpack.c.l.bf16 %v242
      %v307 = vunpack.c.l.bf16 %v243
      %v308 = vunpack.c.l.bf16 %v244
      %v309 = vunpack.c.l.bf16 %v245
      %v310 = vunpack.c.l.bf16 %v246
      %v311 = vunpack.c.l.bf16 %v247
      %v312 = vunpack.c.l.bf16 %v248
      %v313 = vunpack.c.l.bf16 %v249
      %v314 = vunpack.c.l.bf16 %v250
      %v315 = vunpack.c.l.bf16 %v251
      %v316 = vunpack.c.l.bf16 %v252
      %v317 = vunpack.c.l.bf16 %v253
      %v318 = vunpack.c.l.bf16 %v254
      %v319 = vunpack.c.l.bf16 %v255
      %v320 = vunpack.c.l.bf16 %v256
      %v321 = vunpack.c.l.bf16 %v257
      %v322 = vunpack.c.l.bf16 %v258
      %v323 = vunpack.c.l.bf16 %v259
      %v324 = vunpack.c.l.bf16 %v260
      %v325 = vunpack.c.l.bf16 %v261
      %v326 = vunpack.c.l.bf16 %v262
      %v327 = vunpack.c.l.bf16 %v263
      %v328 = vunpack.c.l.bf16 %v264
      %v329 = vunpack.c.l.bf16 %v265
      %v330 = vunpack.c.l.bf16 %v266
      %v331 = vunpack.c.l.bf16 %v267
      %v332 = vunpack.c.l.bf16 %v268
      %v333 = vunpack.c.l.bf16 %v269
      %v334 = vunpack.c.l.bf16 %v270
      %v335 = vunpack.c.l.bf16 %v271
      %v336 = vunpack.c.l.bf16 %v272
      %v337 = vunpack.c.l.bf16 %v273
      %v338 = vunpack.c.l.bf16 %v274
      %v339 = vunpack.c.l.bf16 %v275
      %v340 = vunpack.c.l.bf16 %v276
      %v341 = vunpack.c.l.bf16 %v277
      %v342 = vunpack.c.l.bf16 %v278
      %v343 = vunpack.c.l.bf16 %v279
      %v344 = vunpack.c.l.bf16 %v280
      %v345 = vunpack.c.l.bf16 %v281
      %v346 = vunpack.c.l.bf16 %v282
      %v347 = vunpack.c.l.bf16 %v283
      %v348 = vunpack.c.l.bf16 %v284
      %v349 = vunpack.c.l.bf16 %v285
      %v350 = vunpack.c.l.bf16 %v286
      %v351 = vunpack.c.l.bf16 %v287
      %v352 = vunpack.c.l.bf16 %v288
      %v353 = vunpack.c.l.bf16 %v289
      %v354 = vunpack.c.l.bf16 %v290
      %v355 = vunpack.c.l.bf16 %v291
      %v356 = vunpack.c.l.bf16 %v292
      %v357 = vunpack.c.l.bf16 %v293
      %v358 = vunpack.c.l.bf16 %v294
      %v359 = vunpack.c.l.bf16 %v295
      %v360 = vunpack.c.l.bf16 %v296
      %v361 = vunpack.c.l.bf16 %v297
      %v362 = vunpack.c.l.bf16 %v298
      %v363 = vunpack.c.l.bf16 %v299
      %v364 = vunpack.c.l.bf16 %v300
      %v365 = vunpack.c.l.bf16 %v301
      %v366 = vld [vmem:[%s224] sm:$0x1]
      %v368 = vperm.slane %v366, 0
      %v370 = vmul.f32 %v302, %v368
      %v371 = vmul.f32 %v303, %v368
      %v372 = vmul.f32 %v304, %v368
      %v373 = vmul.f32 %v305, %v368
      %v374 = vmul.f32 %v306, %v368
      %v375 = vmul.f32 %v307, %v368
      %v376 = vmul.f32 %v308, %v368
      %v377 = vmul.f32 %v309, %v368
      %v378 = vmul.f32 %v310, %v368
      %v379 = vmul.f32 %v311, %v368
      %v380 = vmul.f32 %v312, %v368
      %v381 = vmul.f32 %v313, %v368
      %v382 = vmul.f32 %v314, %v368
      %v383 = vmul.f32 %v315, %v368
      %v384 = vmul.f32 %v316, %v368
      %v385 = vmul.f32 %v317, %v368
      %v386 = vmul.f32 %v318, %v368
      %v387 = vmul.f32 %v319, %v368
      %v388 = vmul.f32 %v320, %v368
      %v389 = vmul.f32 %v321, %v368
      %v390 = vmul.f32 %v322, %v368
      %v391 = vmul.f32 %v323, %v368
      %v392 = vmul.f32 %v324, %v368
      %v393 = vmul.f32 %v325, %v368
      %v394 = vmul.f32 %v326, %v368
      %v395 = vmul.f32 %v327, %v368
      %v396 = vmul.f32 %v328, %v368
      %v397 = vmul.f32 %v329, %v368
      %v398 = vmul.f32 %v330, %v368
      %v399 = vmul.f32 %v331, %v368
      %v400 = vmul.f32 %v332, %v368
      %v401 = vmul.f32 %v333, %v368
      %v402 = vmul.f32 %v334, %v368
      %v403 = vmul.f32 %v335, %v368
      %v404 = vmul.f32 %v336, %v368
      %v405 = vmul.f32 %v337, %v368
      %v406 = vmul.f32 %v338, %v368
      %v407 = vmul.f32 %v339, %v368
      %v408 = vmul.f32 %v340, %v368
      %v409 = vmul.f32 %v341, %v368
      %v410 = vmul.f32 %v342, %v368
      %v411 = vmul.f32 %v343, %v368
      %v412 = vmul.f32 %v344, %v368
      %v413 = vmul.f32 %v345, %v368
      %v414 = vmul.f32 %v346, %v368
      %v415 = vmul.f32 %v347, %v368
      %v416 = vmul.f32 %v348, %v368
      %v417 = vmul.f32 %v349, %v368
      %v418 = vmul.f32 %v350, %v368
      %v419 = vmul.f32 %v351, %v368
      %v420 = vmul.f32 %v352, %v368
      %v421 = vmul.f32 %v353, %v368
      %v422 = vmul.f32 %v354, %v368
      %v423 = vmul.f32 %v355, %v368
      %v424 = vmul.f32 %v356, %v368
      %v425 = vmul.f32 %v357, %v368
      %v426 = vmul.f32 %v358, %v368
      %v427 = vmul.f32 %v359, %v368
      %v428 = vmul.f32 %v360, %v368
      %v429 = vmul.f32 %v361, %v368
      %v430 = vmul.f32 %v362, %v368
      %v431 = vmul.f32 %v363, %v368
      %v432 = vmul.f32 %v364, %v368
      %v433 = vmul.f32 %v365, %v368
      %v434 = vld [vmem:[%s227] sm:$0x1]
      %v436 = vperm.slane %v434, 0
      %v438 = vadd.f32 %v370, %v436
      %v439 = vadd.f32 %v371, %v436
      %v440 = vadd.f32 %v372, %v436
      %v441 = vadd.f32 %v373, %v436
      %v442 = vadd.f32 %v374, %v436
      %v443 = vadd.f32 %v375, %v436
      %v444 = vadd.f32 %v376, %v436
      %v445 = vadd.f32 %v377, %v436
      %v446 = vadd.f32 %v378, %v436
      %v447 = vadd.f32 %v379, %v436
      %v448 = vadd.f32 %v380, %v436
      %v449 = vadd.f32 %v381, %v436
      %v450 = vadd.f32 %v382, %v436
      %v451 = vadd.f32 %v383, %v436
      %v452 = vadd.f32 %v384, %v436
      %v453 = vadd.f32 %v385, %v436
      %v454 = vadd.f32 %v386, %v436
      %v455 = vadd.f32 %v387, %v436
      %v456 = vadd.f32 %v388, %v436
      %v457 = vadd.f32 %v389, %v436
      %v458 = vadd.f32 %v390, %v436
      %v459 = vadd.f32 %v391, %v436
      %v460 = vadd.f32 %v392, %v436
      %v461 = vadd.f32 %v393, %v436
      %v462 = vadd.f32 %v394, %v436
      %v463 = vadd.f32 %v395, %v436
      %v464 = vadd.f32 %v396, %v436
      %v465 = vadd.f32 %v397, %v436
      %v466 = vadd.f32 %v398, %v436
      %v467 = vadd.f32 %v399, %v436
      %v468 = vadd.f32 %v400, %v436
      %v469 = vadd.f32 %v401, %v436
      %v470 = vadd.f32 %v402, %v436
      %v471 = vadd.f32 %v403, %v436
      %v472 = vadd.f32 %v404, %v436
      %v473 = vadd.f32 %v405, %v436
      %v474 = vadd.f32 %v406, %v436
      %v475 = vadd.f32 %v407, %v436
      %v476 = vadd.f32 %v408, %v436
      %v477 = vadd.f32 %v409, %v436
      %v478 = vadd.f32 %v410, %v436
      %v479 = vadd.f32 %v411, %v436
      %v480 = vadd.f32 %v412, %v436
      %v481 = vadd.f32 %v413, %v436
      %v482 = vadd.f32 %v414, %v436
      %v483 = vadd.f32 %v415, %v436
      %v484 = vadd.f32 %v416, %v436
      %v485 = vadd.f32 %v417, %v436
      %v486 = vadd.f32 %v418, %v436
      %v487 = vadd.f32 %v419, %v436
      %v488 = vadd.f32 %v420, %v436
      %v489 = vadd.f32 %v421, %v436
      %v490 = vadd.f32 %v422, %v436
      %v491 = vadd.f32 %v423, %v436
      %v492 = vadd.f32 %v424, %v436
      %v493 = vadd.f32 %v425, %v436
      %v494 = vadd.f32 %v426, %v436
      %v495 = vadd.f32 %v427, %v436
      %v496 = vadd.f32 %v428, %v436
      %v497 = vadd.f32 %v429, %v436
      %v498 = vadd.f32 %v430, %v436
      %v499 = vadd.f32 %v431, %v436
      %v500 = vadd.f32 %v432, %v436
      %v501 = vadd.f32 %v433, %v436
      %vm502 = vcmp.ge.f32.partialorder %v438, 0.0
      %vm503 = vcmp.ge.f32.partialorder %v439, 0.0
      %vm504 = vcmp.ge.f32.partialorder %v440, 0.0
      %vm505 = vcmp.ge.f32.partialorder %v441, 0.0
      %vm506 = vcmp.ge.f32.partialorder %v442, 0.0
      %vm507 = vcmp.ge.f32.partialorder %v443, 0.0
      %vm508 = vcmp.ge.f32.partialorder %v444, 0.0
      %vm509 = vcmp.ge.f32.partialorder %v445, 0.0
      %vm510 = vcmp.ge.f32.partialorder %v446, 0.0
      %vm511 = vcmp.ge.f32.partialorder %v447, 0.0
      %vm512 = vcmp.ge.f32.partialorder %v448, 0.0
      %vm513 = vcmp.ge.f32.partialorder %v449, 0.0
      %vm514 = vcmp.ge.f32.partialorder %v450, 0.0
      %vm515 = vcmp.ge.f32.partialorder %v451, 0.0
      %vm516 = vcmp.ge.f32.partialorder %v452, 0.0
      %vm517 = vcmp.ge.f32.partialorder %v453, 0.0
      %vm518 = vcmp.ge.f32.partialorder %v454, 0.0
      %vm519 = vcmp.ge.f32.partialorder %v455, 0.0
      %vm520 = vcmp.ge.f32.partialorder %v456, 0.0
      %vm521 = vcmp.ge.f32.partialorder %v457, 0.0
      %vm522 = vcmp.ge.f32.partialorder %v458, 0.0
      %vm523 = vcmp.ge.f32.partialorder %v459, 0.0
      %vm524 = vcmp.ge.f32.partialorder %v460, 0.0
      %vm525 = vcmp.ge.f32.partialorder %v461, 0.0
      %vm526 = vcmp.ge.f32.partialorder %v462, 0.0
      %vm527 = vcmp.ge.f32.partialorder %v463, 0.0
      %vm528 = vcmp.ge.f32.partialorder %v464, 0.0
      %vm529 = vcmp.ge.f32.partialorder %v465, 0.0
      %vm530 = vcmp.ge.f32.partialorder %v466, 0.0
      %vm531 = vcmp.ge.f32.partialorder %v467, 0.0
      %vm532 = vcmp.ge.f32.partialorder %v468, 0.0
      %vm533 = vcmp.ge.f32.partialorder %v469, 0.0
      %vm534 = vcmp.ge.f32.partialorder %v470, 0.0
      %vm535 = vcmp.ge.f32.partialorder %v471, 0.0
      %vm536 = vcmp.ge.f32.partialorder %v472, 0.0
      %vm537 = vcmp.ge.f32.partialorder %v473, 0.0
      %vm538 = vcmp.ge.f32.partialorder %v474, 0.0
      %vm539 = vcmp.ge.f32.partialorder %v475, 0.0
      %vm540 = vcmp.ge.f32.partialorder %v476, 0.0
      %vm541 = vcmp.ge.f32.partialorder %v477, 0.0
      %vm542 = vcmp.ge.f32.partialorder %v478, 0.0
      %vm543 = vcmp.ge.f32.partialorder %v479, 0.0
      %vm544 = vcmp.ge.f32.partialorder %v480, 0.0
      %vm545 = vcmp.ge.f32.partialorder %v481, 0.0
      %vm546 = vcmp.ge.f32.partialorder %v482, 0.0
      %vm547 = vcmp.ge.f32.partialorder %v483, 0.0
      %vm548 = vcmp.ge.f32.partialorder %v484, 0.0
      %vm549 = vcmp.ge.f32.partialorder %v485, 0.0
      %vm550 = vcmp.ge.f32.partialorder %v486, 0.0
      %vm551 = vcmp.ge.f32.partialorder %v487, 0.0
      %vm552 = vcmp.ge.f32.partialorder %v488, 0.0
      %vm553 = vcmp.ge.f32.partialorder %v489, 0.0
      %vm554 = vcmp.ge.f32.partialorder %v490, 0.0
      %vm555 = vcmp.ge.f32.partialorder %v491, 0.0
      %vm556 = vcmp.ge.f32.partialorder %v492, 0.0
      %vm557 = vcmp.ge.f32.partialorder %v493, 0.0
      %vm558 = vcmp.ge.f32.partialorder %v494, 0.0
      %vm559 = vcmp.ge.f32.partialorder %v495, 0.0
      %vm560 = vcmp.ge.f32.partialorder %v496, 0.0
      %vm561 = vcmp.ge.f32.partialorder %v497, 0.0
      %vm562 = vcmp.ge.f32.partialorder %v498, 0.0
      %vm563 = vcmp.ge.f32.partialorder %v499, 0.0
      %vm564 = vcmp.ge.f32.partialorder %v500, 0.0
      %vm565 = vcmp.ge.f32.partialorder %v501, 0.0
      %v566 = vmul.f32 %v438, 0.01
      %v567 = vmul.f32 %v439, 0.01
      %v568 = vmul.f32 %v440, 0.01
      %v569 = vmul.f32 %v441, 0.01
      %v570 = vmul.f32 %v442, 0.01
      %v571 = vmul.f32 %v443, 0.01
      %v572 = vmul.f32 %v444, 0.01
      %v573 = vmul.f32 %v445, 0.01
      %v574 = vmul.f32 %v446, 0.01
      %v575 = vmul.f32 %v447, 0.01
      %v576 = vmul.f32 %v448, 0.01
      %v577 = vmul.f32 %v449, 0.01
      %v578 = vmul.f32 %v450, 0.01
      %v579 = vmul.f32 %v451, 0.01
      %v580 = vmul.f32 %v452, 0.01
      %v581 = vmul.f32 %v453, 0.01
      %v582 = vmul.f32 %v454, 0.01
      %v583 = vmul.f32 %v455, 0.01
      %v584 = vmul.f32 %v456, 0.01
      %v585 = vmul.f32 %v457, 0.01
      %v586 = vmul.f32 %v458, 0.01
      %v587 = vmul.f32 %v459, 0.01
      %v588 = vmul.f32 %v460, 0.01
      %v589 = vmul.f32 %v461, 0.01
      %v590 = vmul.f32 %v462, 0.01
      %v591 = vmul.f32 %v463, 0.01
      %v592 = vmul.f32 %v464, 0.01
      %v593 = vmul.f32 %v465, 0.01
      %v594 = vmul.f32 %v466, 0.01
      %v595 = vmul.f32 %v467, 0.01
      %v596 = vmul.f32 %v468, 0.01
      %v597 = vmul.f32 %v469, 0.01
      %v598 = vmul.f32 %v470, 0.01
      %v599 = vmul.f32 %v471, 0.01
      %v600 = vmul.f32 %v472, 0.01
      %v601 = vmul.f32 %v473, 0.01
      %v602 = vmul.f32 %v474, 0.01
      %v603 = vmul.f32 %v475, 0.01
      %v604 = vmul.f32 %v476, 0.01
      %v605 = vmul.f32 %v477, 0.01
      %v606 = vmul.f32 %v478, 0.01
      %v607 = vmul.f32 %v479, 0.01
      %v608 = vmul.f32 %v480, 0.01
      %v609 = vmul.f32 %v481, 0.01
      %v610 = vmul.f32 %v482, 0.01
      %v611 = vmul.f32 %v483, 0.01
      %v612 = vmul.f32 %v484, 0.01
      %v613 = vmul.f32 %v485, 0.01
      %v614 = vmul.f32 %v486, 0.01
      %v615 = vmul.f32 %v487, 0.01
      %v616 = vmul.f32 %v488, 0.01
      %v617 = vmul.f32 %v489, 0.01
      %v618 = vmul.f32 %v490, 0.01
      %v619 = vmul.f32 %v491, 0.01
      %v620 = vmul.f32 %v492, 0.01
      %v621 = vmul.f32 %v493, 0.01
      %v622 = vmul.f32 %v494, 0.01
      %v623 = vmul.f32 %v495, 0.01
      %v624 = vmul.f32 %v496, 0.01
      %v625 = vmul.f32 %v497, 0.01
      %v626 = vmul.f32 %v498, 0.01
      %v627 = vmul.f32 %v499, 0.01
      %v628 = vmul.f32 %v500, 0.01
      %v629 = vmul.f32 %v501, 0.01
      %v630 = vsel %vm502, %v438, %v566
      %v631 = vsel %vm503, %v439, %v567
      %v632 = vsel %vm504, %v440, %v568
      %v633 = vsel %vm505, %v441, %v569
      %v634 = vsel %vm506, %v442, %v570
      %v635 = vsel %vm507, %v443, %v571
      %v636 = vsel %vm508, %v444, %v572
      %v637 = vsel %vm509, %v445, %v573
      %v638 = vsel %vm510, %v446, %v574
      %v639 = vsel %vm511, %v447, %v575
      %v640 = vsel %vm512, %v448, %v576
      %v641 = vsel %vm513, %v449, %v577
      %v642 = vsel %vm514, %v450, %v578
      %v643 = vsel %vm515, %v451, %v579
      %v644 = vsel %vm516, %v452, %v580
      %v645 = vsel %vm517, %v453, %v581
      %v646 = vsel %vm518, %v454, %v582
      %v647 = vsel %vm519, %v455, %v583
      %v648 = vsel %vm520, %v456, %v584
      %v649 = vsel %vm521, %v457, %v585
      %v650 = vsel %vm522, %v458, %v586
      %v651 = vsel %vm523, %v459, %v587
      %v652 = vsel %vm524, %v460, %v588
      %v653 = vsel %vm525, %v461, %v589
      %v654 = vsel %vm526, %v462, %v590
      %v655 = vsel %vm527, %v463, %v591
      %v656 = vsel %vm528, %v464, %v592
      %v657 = vsel %vm529, %v465, %v593
      %v658 = vsel %vm530, %v466, %v594
      %v659 = vsel %vm531, %v467, %v595
      %v660 = vsel %vm532, %v468, %v596
      %v661 = vsel %vm533, %v469, %v597
      %v662 = vsel %vm534, %v470, %v598
      %v663 = vsel %vm535, %v471, %v599
      %v664 = vsel %vm536, %v472, %v600
      %v665 = vsel %vm537, %v473, %v601
      %v666 = vsel %vm538, %v474, %v602
      %v667 = vsel %vm539, %v475, %v603
      %v668 = vsel %vm540, %v476, %v604
      %v669 = vsel %vm541, %v477, %v605
      %v670 = vsel %vm542, %v478, %v606
      %v671 = vsel %vm543, %v479, %v607
      %v672 = vsel %vm544, %v480, %v608
      %v673 = vsel %vm545, %v481, %v609
      %v674 = vsel %vm546, %v482, %v610
      %v675 = vsel %vm547, %v483, %v611
      %v676 = vsel %vm548, %v484, %v612
      %v677 = vsel %vm549, %v485, %v613
      %v678 = vsel %vm550, %v486, %v614
      %v679 = vsel %vm551, %v487, %v615
      %v680 = vsel %vm552, %v488, %v616
      %v681 = vsel %vm553, %v489, %v617
      %v682 = vsel %vm554, %v490, %v618
      %v683 = vsel %vm555, %v491, %v619
      %v684 = vsel %vm556, %v492, %v620
      %v685 = vsel %vm557, %v493, %v621
      %v686 = vsel %vm558, %v494, %v622
      %v687 = vsel %vm559, %v495, %v623
      %v688 = vsel %vm560, %v496, %v624
      %v689 = vsel %vm561, %v497, %v625
      %v690 = vsel %vm562, %v498, %v626
      %v691 = vsel %vm563, %v499, %v627
      %v692 = vsel %vm564, %v500, %v628
      %v693 = vsel %vm565, %v501, %v629
      %v694 = vpack.c.bf16 %v630, %v630
      %v695 = vpack.c.bf16 %v631, %v631
      %v696 = vpack.c.bf16 %v632, %v632
      %v697 = vpack.c.bf16 %v633, %v633
      %v698 = vpack.c.bf16 %v634, %v634
      %v699 = vpack.c.bf16 %v635, %v635
      %v700 = vpack.c.bf16 %v636, %v636
      %v701 = vpack.c.bf16 %v637, %v637
      %v702 = vpack.c.bf16 %v638, %v638
      %v703 = vpack.c.bf16 %v639, %v639
      %v704 = vpack.c.bf16 %v640, %v640
      %v705 = vpack.c.bf16 %v641, %v641
      %v706 = vpack.c.bf16 %v642, %v642
      %v707 = vpack.c.bf16 %v643, %v643
      %v708 = vpack.c.bf16 %v644, %v644
      %v709 = vpack.c.bf16 %v645, %v645
      %v710 = vpack.c.bf16 %v646, %v646
      %v711 = vpack.c.bf16 %v647, %v647
      %v712 = vpack.c.bf16 %v648, %v648
      %v713 = vpack.c.bf16 %v649, %v649
      %v714 = vpack.c.bf16 %v650, %v650
      %v715 = vpack.c.bf16 %v651, %v651
      %v716 = vpack.c.bf16 %v652, %v652
      %v717 = vpack.c.bf16 %v653, %v653
      %v718 = vpack.c.bf16 %v654, %v654
      %v719 = vpack.c.bf16 %v655, %v655
      %v720 = vpack.c.bf16 %v656, %v656
      %v721 = vpack.c.bf16 %v657, %v657
      %v722 = vpack.c.bf16 %v658, %v658
      %v723 = vpack.c.bf16 %v659, %v659
      %v724 = vpack.c.bf16 %v660, %v660
      %v725 = vpack.c.bf16 %v661, %v661
      %v726 = vpack.c.bf16 %v662, %v662
      %v727 = vpack.c.bf16 %v663, %v663
      %v728 = vpack.c.bf16 %v664, %v664
      %v729 = vpack.c.bf16 %v665, %v665
      %v730 = vpack.c.bf16 %v666, %v666
      %v731 = vpack.c.bf16 %v667, %v667
      %v732 = vpack.c.bf16 %v668, %v668
      %v733 = vpack.c.bf16 %v669, %v669
      %v734 = vpack.c.bf16 %v670, %v670
      %v735 = vpack.c.bf16 %v671, %v671
      %v736 = vpack.c.bf16 %v672, %v672
      %v737 = vpack.c.bf16 %v673, %v673
      %v738 = vpack.c.bf16 %v674, %v674
      %v739 = vpack.c.bf16 %v675, %v675
      %v740 = vpack.c.bf16 %v676, %v676
      %v741 = vpack.c.bf16 %v677, %v677
      %v742 = vpack.c.bf16 %v678, %v678
      %v743 = vpack.c.bf16 %v679, %v679
      %v744 = vpack.c.bf16 %v680, %v680
      %v745 = vpack.c.bf16 %v681, %v681
      %v746 = vpack.c.bf16 %v682, %v682
      %v747 = vpack.c.bf16 %v683, %v683
      %v748 = vpack.c.bf16 %v684, %v684
      %v749 = vpack.c.bf16 %v685, %v685
      %v750 = vpack.c.bf16 %v686, %v686
      %v751 = vpack.c.bf16 %v687, %v687
      %v752 = vpack.c.bf16 %v688, %v688
      %v753 = vpack.c.bf16 %v689, %v689
      %v754 = vpack.c.bf16 %v690, %v690
      %v755 = vpack.c.bf16 %v691, %v691
      %v756 = vpack.c.bf16 %v692, %v692
      %v757 = vpack.c.bf16 %v693, %v693
      %vm758 = vcmask 257024
      %759 = vst.msk [vmem:[%s236] sm:$0xf] %vm758, %v694
      %760 = vst.msk [vmem:[%s236 + $0x4] sm:$0xf] %vm758, %v695
      %761 = vst.msk [vmem:[%s236 + $0x8] sm:$0xf] %vm758, %v696
      %762 = vst.msk [vmem:[%s236 + $0xc] sm:$0xf] %vm758, %v697
      %763 = vst.msk [vmem:[%s236 + $0x10] sm:$0xf] %vm758, %v698
      %764 = vst.msk [vmem:[%s236 + $0x14] sm:$0xf] %vm758, %v699
      %765 = vst.msk [vmem:[%s236 + $0x18] sm:$0xf] %vm758, %v700
      %766 = vst.msk [vmem:[%s236 + $0x1c] sm:$0xf] %vm758, %v701
      %767 = vst.msk [vmem:[%s236 + $0x20] sm:$0xf] %vm758, %v702
      %768 = vst.msk [vmem:[%s236 + $0x24] sm:$0xf] %vm758, %v703
      %769 = vst.msk [vmem:[%s236 + $0x28] sm:$0xf] %vm758, %v704
      %770 = vst.msk [vmem:[%s236 + $0x2c] sm:$0xf] %vm758, %v705
      %771 = vst.msk [vmem:[%s236 + $0x30] sm:$0xf] %vm758, %v706
      %772 = vst.msk [vmem:[%s236 + $0x34] sm:$0xf] %vm758, %v707
      %773 = vst.msk [vmem:[%s236 + $0x38] sm:$0xf] %vm758, %v708
      %774 = vst.msk [vmem:[%s236 + $0x3c] sm:$0xf] %vm758, %v709
      %775 = vst.msk [vmem:[%s236 + $0x40] sm:$0xf] %vm758, %v710
      %776 = vst.msk [vmem:[%s236 + $0x44] sm:$0xf] %vm758, %v711
      %777 = vst.msk [vmem:[%s236 + $0x48] sm:$0xf] %vm758, %v712
      %778 = vst.msk [vmem:[%s236 + $0x4c] sm:$0xf] %vm758, %v713
      %779 = vst.msk [vmem:[%s236 + $0x50] sm:$0xf] %vm758, %v714
      %780 = vst.msk [vmem:[%s236 + $0x54] sm:$0xf] %vm758, %v715
      %781 = vst.msk [vmem:[%s236 + $0x58] sm:$0xf] %vm758, %v716
      %782 = vst.msk [vmem:[%s236 + $0x5c] sm:$0xf] %vm758, %v717
      %783 = vst.msk [vmem:[%s236 + $0x60] sm:$0xf] %vm758, %v718
      %784 = vst.msk [vmem:[%s236 + $0x64] sm:$0xf] %vm758, %v719
      %785 = vst.msk [vmem:[%s236 + $0x68] sm:$0xf] %vm758, %v720
      %786 = vst.msk [vmem:[%s236 + $0x6c] sm:$0xf] %vm758, %v721
      %787 = vst.msk [vmem:[%s236 + $0x70] sm:$0xf] %vm758, %v722
      %788 = vst.msk [vmem:[%s236 + $0x74] sm:$0xf] %vm758, %v723
      %789 = vst.msk [vmem:[%s236 + $0x78] sm:$0xf] %vm758, %v724
      %790 = vst.msk [vmem:[%s236 + $0x7c] sm:$0xf] %vm758, %v725
      %791 = vst.msk [vmem:[%s236 + $0x80] sm:$0xf] %vm758, %v726
      %792 = vst.msk [vmem:[%s236 + $0x84] sm:$0xf] %vm758, %v727
      %793 = vst.msk [vmem:[%s236 + $0x88] sm:$0xf] %vm758, %v728
      %794 = vst.msk [vmem:[%s236 + $0x8c] sm:$0xf] %vm758, %v729
      %795 = vst.msk [vmem:[%s236 + $0x90] sm:$0xf] %vm758, %v730
      %796 = vst.msk [vmem:[%s236 + $0x94] sm:$0xf] %vm758, %v731
      %797 = vst.msk [vmem:[%s236 + $0x98] sm:$0xf] %vm758, %v732
      %798 = vst.msk [vmem:[%s236 + $0x9c] sm:$0xf] %vm758, %v733
      %799 = vst.msk [vmem:[%s236 + $0xa0] sm:$0xf] %vm758, %v734
      %800 = vst.msk [vmem:[%s236 + $0xa4] sm:$0xf] %vm758, %v735
      %801 = vst.msk [vmem:[%s236 + $0xa8] sm:$0xf] %vm758, %v736
      %802 = vst.msk [vmem:[%s236 + $0xac] sm:$0xf] %vm758, %v737
      %803 = vst.msk [vmem:[%s236 + $0xb0] sm:$0xf] %vm758, %v738
      %804 = vst.msk [vmem:[%s236 + $0xb4] sm:$0xf] %vm758, %v739
      %805 = vst.msk [vmem:[%s236 + $0xb8] sm:$0xf] %vm758, %v740
      %806 = vst.msk [vmem:[%s236 + $0xbc] sm:$0xf] %vm758, %v741
      %807 = vst.msk [vmem:[%s236 + $0xc0] sm:$0xf] %vm758, %v742
      %808 = vst.msk [vmem:[%s236 + $0xc4] sm:$0xf] %vm758, %v743
      %809 = vst.msk [vmem:[%s236 + $0xc8] sm:$0xf] %vm758, %v744
      %810 = vst.msk [vmem:[%s236 + $0xcc] sm:$0xf] %vm758, %v745
      %811 = vst.msk [vmem:[%s236 + $0xd0] sm:$0xf] %vm758, %v746
      %812 = vst.msk [vmem:[%s236 + $0xd4] sm:$0xf] %vm758, %v747
      %813 = vst.msk [vmem:[%s236 + $0xd8] sm:$0xf] %vm758, %v748
      %814 = vst.msk [vmem:[%s236 + $0xdc] sm:$0xf] %vm758, %v749
      %815 = vst.msk [vmem:[%s236 + $0xe0] sm:$0xf] %vm758, %v750
      %816 = vst.msk [vmem:[%s236 + $0xe4] sm:$0xf] %vm758, %v751
      %817 = vst.msk [vmem:[%s236 + $0xe8] sm:$0xf] %vm758, %v752
      %818 = vst.msk [vmem:[%s236 + $0xec] sm:$0xf] %vm758, %v753
      %819 = vst.msk [vmem:[%s236 + $0xf0] sm:$0xf] %vm758, %v754
      %820 = vst.msk [vmem:[%s236 + $0xf4] sm:$0xf] %vm758, %v755
      %821 = vst.msk [vmem:[%s236 + $0xf8] sm:$0xf] %vm758, %v756
      %822 = vst.msk [vmem:[%s236 + $0xfc] sm:$0xf] %vm758, %v757
      %s823 = smul.u32 64, %s19
      %p824 = scmp.lt.s32.totalorder %s18, 1
      %s825 = scalar_select %p824, %s18, 1
      %p826 = scmp.lt.s32.totalorder %s823, 63
      %s827 = scalar_select %p826, %s823, 63
      %s828 = smul.addr %s825, 64
      %s829 = sadd.s32 %s827, %s828
      %s830 = smul.addr %s829, 4
      %s831 = scalar_lea.vmem %s3, %s830
      // Predicated region
      $region33: #{double_conv_block_forward.5} parent=31 // pred_check
        %p832 = pneg %p126
      $region34: #{double_conv_block_forward.5} parent=31 // pred_check_branch
        %834 = sbr.rel (%p832) target = $region36
      $region35: #{double_conv_block_forward.5} parent=31 // pred_region
        %s835 = smul.u32 64, %s19
      $region36: #{double_conv_block_forward.5} parent=31 // pred_fallthru
        _
    $region32: #{double_conv_block_forward.5} parent=5 // pred_fallthru
      _
    %p836 = scmp.le.s32.totalorder 2, %s9
    // Predicated region
    $region37: #{double_conv_block_forward.5} parent=5 // pred_check
      %p837 = pneg %p836
    $region38: #{double_conv_block_forward.5} parent=5 // pred_check_branch
      %839 = sbr.rel (%p837) target = $region40
    $region39: #{double_conv_block_forward.5} parent=5 // pred_region
      %s840 = ssub.s32 %s9, 2
      // Predicated region
      $region41: #{double_conv_block_forward.5} parent=39 // pred_check
        %p841 = pneg %p132
      $region42: #{double_conv_block_forward.5} parent=39 // pred_check_branch
        %843 = sbr.rel (%p841) target = $region44
      $region43: #{double_conv_block_forward.5} parent=39 // pred_region
        %s844 = smul.u32 64, %s21
        %p845 = scmp.lt.s32.totalorder %s20, 1
        %s846 = scalar_select %p845, %s20, 1
        %p847 = scmp.lt.s32.totalorder %s844, 63
        %s848 = scalar_select %p847, %s844, 63
        %s849 = smul.addr %s846, 64
        %s850 = sadd.s32 %s848, %s849
        %s851 = smul.addr %s850, 4
        %s852 = scalar_lea.vmem %s3, %s851
      $region44: #{double_conv_block_forward.5} parent=39 // pred_fallthru
        _
    $region40: #{double_conv_block_forward.5} parent=5 // pred_fallthru
      _
  $region6: #{double_conv_block_forward.5} parent=0 // loop_footer
    %s13 = sadd.s32 1, %s9
  $region7: #{double_conv_block_forward.5} parent=0 // loop_footer_branch
    %8 = sbr.rel target = $region3
  $region8: #{double_conv_block_forward.5} parent=0 // loop_exit
    _

// kernel: double_conv_block_forward.7
$region0: #{double_conv_block_forward.7}
  #allocation0 [shape = 'u32[]', space=smem, size = 0x4, offset = 0x4, fixed_abs, tag = 'smem constant byte address 0x4 - core index']
  #allocation1 [shape = 'u32[72,128]{1,0:T(1,128)}', space=vmem, size = 0x9000, scoped, tag = 'internal scratch']
  %s0 = inlined_call_operand.vmem [shape: bf16[2,512,32], index: 0, kind: input, shape index: {}]
  %s1 = inlined_call_operand.vmem [shape: f32[2,1,32], index: 1, kind: input, shape index: {}]
  %s2 = inlined_call_operand.vmem [shape: f32[2,1,32], index: 2, kind: input, shape index: {}]
  %s3 = inlined_call_operand.hbm [shape: f32[2,512,32], index: 3, kind: output, shape index: {}]
  %s4 = sld [smem:[#allocation0]]
  $region45: #{double_conv_block_forward.7} parent=0
    _
  %s6 = ssub.s32 1, %s4
  %s7 = scalar_select 0, %s6, %s4
  $region1: #{double_conv_block_forward.7} parent=0
    #allocation2 [shape = 'u8[524288]{0}', space=vmem, size = 0x80000, scoped, tag = 'output window, operand 0']
    #allocation3 [shape = 's32[2]{0}', space=sflag, size = 0x8, scoped, tag = 'scoped memory for double_conv_block_forward.7']
    %8 = vsyncpa [#allocation3], 0
    %s9 = scalar_lea.sflag [#allocation3], 1
    %10 = vsyncpa %s9, 0
    loop: start=0, step=1, limit=4
    $region2: #{double_conv_block_forward.7} parent=1 // loop_pre_header
      _
    $region3: #{double_conv_block_forward.7} parent=1 // loop_header
      %s12 = sphi 0, %s16
      %p13 = scmp.ge.s32.totalorder %s12, 4
      %s19 = sphi 0, %s31
      %s20 = sphi 0, %s27
      %s21 = sphi 0, %s19
      %s22 = sphi 0, %s20
      %s23 = sphi 0, %s21
      %s24 = sphi 0, %s22
      %s36 = sphi 0, %s38
      %s39 = sphi 0, %s36
      %s40 = sphi 0, %s39
      %s56 = sphi 0, %s40
      %s62 = sphi 0, %s64
      %s65 = sphi 0, %s62
      %s66 = sphi 0, %s65
      %s82 = sphi 0, %s66
      %s88 = sphi 0, %s90
      %s91 = sphi 0, %s88
      %s92 = sphi 0, %s91
      %s108 = sphi 0, %s92
      %s116 = sphi 0, %s118
      %s119 = sphi 0, %s116
      %s120 = sphi 0, %s119
      %s136 = sphi 0, %s120
    $region4: #{double_conv_block_forward.7} parent=1 // loop_header_branch
      %15 = sbr.rel (%p13) target = $region8
    $region5: #{double_conv_block_forward.7} parent=1 // loop_body
      %s17 = ssub.s32 %s12, 1
      %s18 = ssub.s32 %s12, 2
      %s25 = sadd.s32 1, %s20
      %p26 = scmp.ge.s32.totalorder %s25, 1
      %s27 = scalar_select %p26, 0, %s25
      %s28 = sadd.s32 1, %s19
      %s29 = scalar_select %p26, %s28, %s19
      %p30 = scmp.ge.s32.totalorder %s29, 2
      %s31 = scalar_select %p30, 0, %s29
      %s32 = ssub.s32 %s19, %s31
      %s33 = ssub.s32 %s20, %s27
      %s34 = sor.u32 %s32, %s33
      %p35 = scmp.eq.s32.totalorder %s34, 0
      %s37 = sadd.s32 %s36, 1
      %s38 = scalar_select %p35, %s36, %s37
      %p41 = pneg %p35
      %p42 = scmp.eq.s32.totalorder %s12, 1
      %p43 = por %p41, %p42
      %p44 = scmp.ne.s32.totalorder %s36, %s39
      %p45 = scmp.eq.s32.totalorder %s12, 0
      %p46 = por %p44, %p45
      %p47 = scmp.ne.s32.totalorder %s36, %s39
      %p48 = scmp.eq.s32.totalorder %s17, 1
      %p49 = por %p47, %p48
      %p50 = scmp.ne.s32.totalorder %s39, %s40
      %p51 = scmp.eq.s32.totalorder %s17, 0
      %p52 = por %p50, %p51
      %p53 = scmp.ne.s32.totalorder %s39, %s40
      %p54 = scmp.eq.s32.totalorder %s18, 1
      %p55 = por %p53, %p54
      %p57 = scmp.ne.s32.totalorder %s40, %s56
      %p58 = scmp.eq.s32.totalorder %s18, 0
      %p59 = por %p57, %p58
      %s60 = ssub.s32 %s19, %s31
      %p61 = scmp.eq.s32.totalorder %s60, 0
      %s63 = sadd.s32 %s62, 1
      %s64 = scalar_select %p61, %s62, %s63
      %p67 = pneg %p61
      %p68 = scmp.eq.s32.totalorder %s12, 1
      %p69 = por %p67, %p68
      %p70 = scmp.ne.s32.totalorder %s62, %s65
      %p71 = scmp.eq.s32.totalorder %s12, 0
      %p72 = por %p70, %p71
      %p73 = scmp.ne.s32.totalorder %s62, %s65
      %p74 = scmp.eq.s32.totalorder %s17, 1
      %p75 = por %p73, %p74
      %p76 = scmp.ne.s32.totalorder %s65, %s66
      %p77 = scmp.eq.s32.totalorder %s17, 0
      %p78 = por %p76, %p77
      %p79 = scmp.ne.s32.totalorder %s65, %s66
      %p80 = scmp.eq.s32.totalorder %s18, 1
      %p81 = por %p79, %p80
      %p83 = scmp.ne.s32.totalorder %s66, %s82
      %p84 = scmp.eq.s32.totalorder %s18, 0
      %p85 = por %p83, %p84
      %s86 = ssub.s32 %s19, %s31
      %p87 = scmp.eq.s32.totalorder %s86, 0
      %s89 = sadd.s32 %s88, 1
      %s90 = scalar_select %p87, %s88, %s89
      %p93 = pneg %p87
      %p94 = scmp.eq.s32.totalorder %s12, 1
      %p95 = por %p93, %p94
      %p96 = scmp.ne.s32.totalorder %s88, %s91
      %p97 = scmp.eq.s32.totalorder %s12, 0
      %p98 = por %p96, %p97
      %p99 = scmp.ne.s32.totalorder %s88, %s91
      %p100 = scmp.eq.s32.totalorder %s17, 1
      %p101 = por %p99, %p100
      %p102 = scmp.ne.s32.totalorder %s91, %s92
      %p103 = scmp.eq.s32.totalorder %s17, 0
      %p104 = por %p102, %p103
      %p105 = scmp.ne.s32.totalorder %s91, %s92
      %p106 = scmp.eq.s32.totalorder %s18, 1
      %p107 = por %p105, %p106
      %p109 = scmp.ne.s32.totalorder %s92, %s108
      %p110 = scmp.eq.s32.totalorder %s18, 0
      %p111 = por %p109, %p110
      %s112 = ssub.s32 %s19, %s31
      %s113 = ssub.s32 %s20, %s27
      %s114 = sor.u32 %s112, %s113
      %p115 = scmp.eq.s32.totalorder %s114, 0
      %s117 = sadd.s32 %s116, 1
      %s118 = scalar_select %p115, %s116, %s117
      %p121 = pneg %p115
      %p122 = scmp.eq.s32.totalorder %s12, 1
      %p123 = por %p121, %p122
      %p124 = scmp.ne.s32.totalorder %s116, %s119
      %p125 = scmp.eq.s32.totalorder %s12, 0
      %p126 = por %p124, %p125
      %p127 = scmp.ne.s32.totalorder %s116, %s119
      %p128 = scmp.eq.s32.totalorder %s17, 1
      %p129 = por %p127, %p128
      %p130 = scmp.ne.s32.totalorder %s119, %s120
      %p131 = scmp.eq.s32.totalorder %s17, 0
      %p132 = por %p130, %p131
      %p133 = scmp.ne.s32.totalorder %s119, %s120
      %p134 = scmp.eq.s32.totalorder %s18, 1
      %p135 = por %p133, %p134
      %p137 = scmp.ne.s32.totalorder %s120, %s136
      %p138 = scmp.eq.s32.totalorder %s18, 0
      %p139 = por %p137, %p138
      %p140 = scmp.le.s32.totalorder 1, %s12
      %p141 = scmp.lt.s32.totalorder %s12, 3
      %p142 = pnand %p140, %p141
      %p143 = pneg %p142
      // Predicated region
      $region9: #{double_conv_block_forward.7} parent=5 // pred_check
        _
      $region10: #{double_conv_block_forward.7} parent=5 // pred_check_branch
        %145 = sbr.rel (%p142) target = $region12
      $region11: #{double_conv_block_forward.7} parent=5 // pred_region
        %s146 = ssub.s32 %s12, 1
      $region12: #{double_conv_block_forward.7} parent=5 // pred_fallthru
        _
      %p147 = scmp.lt.s32.totalorder %s12, 2
      // Predicated region
      $region13: #{double_conv_block_forward.7} parent=5 // pred_check
        %p148 = pneg %p147
      $region14: #{double_conv_block_forward.7} parent=5 // pred_check_branch
        %150 = sbr.rel (%p148) target = $region16
      $region15: #{double_conv_block_forward.7} parent=5 // pred_region
        // Predicated region
        $region17: #{double_conv_block_forward.7} parent=15 // pred_check
          %p151 = pneg %p46
        $region18: #{double_conv_block_forward.7} parent=15 // pred_check_branch
          %153 = sbr.rel (%p151) target = $region20
        $region19: #{double_conv_block_forward.7} parent=15 // pred_region
          %s154 = smul.u32 64, %s20
          %p155 = scmp.lt.s32.totalorder %s19, 1
          %s156 = scalar_select %p155, %s19, 1
          %p157 = scmp.lt.s32.totalorder %s154, 63
          %s158 = scalar_select %p157, %s154, 63
          %s159 = smul.addr %s156, 64
          %s160 = sadd.s32 %s158, %s159
          %s161 = smul.addr %s160, 4
          %s162 = scalar_lea.vmem %s0, %s161
          %s163 = smul.u32 64, %s20
        $region20: #{double_conv_block_forward.7} parent=15 // pred_fallthru
          _
        // Predicated region
        $region21: #{double_conv_block_forward.7} parent=15 // pred_check
          %p164 = pneg %p72
        $region22: #{double_conv_block_forward.7} parent=15 // pred_check_branch
          %166 = sbr.rel (%p164) target = $region24
        $region23: #{double_conv_block_forward.7} parent=15 // pred_region
          %p167 = scmp.lt.s32.totalorder %s19, 1
          %s168 = scalar_select %p167, %s19, 1
          %s169 = scalar_lea.vmem %s1, %s168
        $region24: #{double_conv_block_forward.7} parent=15 // pred_fallthru
          _
        // Predicated region
        $region25: #{double_conv_block_forward.7} parent=15 // pred_check
          %p170 = pneg %p98
        $region26: #{double_conv_block_forward.7} parent=15 // pred_check_branch
          %172 = sbr.rel (%p170) target = $region28
        $region27: #{double_conv_block_forward.7} parent=15 // pred_region
          %p173 = scmp.lt.s32.totalorder %s19, 1
          %s174 = scalar_select %p173, %s19, 1
          %s175 = scalar_lea.vmem %s2, %s174
        $region28: #{double_conv_block_forward.7} parent=15 // pred_fallthru
          _
      $region16: #{double_conv_block_forward.7} parent=5 // pred_fallthru
        _
      %p176 = scmp.le.s32.totalorder 1, %s12
      %p177 = scmp.lt.s32.totalorder %s12, 3
      %p178 = pnand %p176, %p177
      %p179 = pneg %p178
      // Predicated region
      $region29: #{double_conv_block_forward.7} parent=5 // pred_check
        _
      $region30: #{double_conv_block_forward.7} parent=5 // pred_check_branch
        %181 = sbr.rel (%p178) target = $region32
      $region31: #{double_conv_block_forward.7} parent=5 // pred_region
        %s182 = ssub.s32 %s12, 1
        %s183 = smul.u32 64, %s22
        %p184 = scmp.lt.s32.totalorder %s21, 1
        %s185 = scalar_select %p184, %s21, 1
        %p186 = scmp.lt.s32.totalorder %s183, 63
        %s187 = scalar_select %p186, %s183, 63
        %s188 = smul.addr %s185, 64
        %s189 = sadd.s32 %s187, %s188
        %s190 = smul.addr %s189, 4
        %s191 = scalar_lea.vmem %s0, %s190
        %p192 = pneg %p52
        %p193 = pneg %p49
        %p194 = scmp.lt.s32.totalorder %s21, 1
        %s195 = scalar_select %p194, %s21, 1
        %s196 = scalar_lea.vmem %s1, %s195
        %p197 = pneg %p78
        %p198 = pneg %p75
        %p199 = scmp.lt.s32.totalorder %s21, 1
        %s200 = scalar_select %p199, %s21, 1
        %s201 = scalar_lea.vmem %s2, %s200
        %p202 = pneg %p104
        %p203 = pneg %p101
        %p204 = pneg %p132
        %p205 = pneg %p129
        %s206 = sand.u32 %s119, 1
        %s207 = scalar_lea.sflag [#allocation3], %s206
        %s208 = sand.u32 %s119, 1
        %s209 = smul.addr %s208, 512
        %s210 = scalar_lea.vmem [#allocation2], %s209
        %s211 = smul.u32 64, %s22
        %p212 = scmp.lt.s32.totalorder %s21, 1
        %s213 = scalar_select %p212, %s21, 1
        %p214 = scmp.lt.s32.totalorder %s211, 63
        %s215 = scalar_select %p214, %s211, 63
        %s216 = smul.addr %s213, 64
        %s217 = sadd.s32 %s215, %s216
        %s218 = smul.addr %s217, 4
        %s219 = scalar_lea.vmem %s0, %s218
        %s220 = smul.u32 64, %s22
        %p221 = scmp.lt.s32.totalorder %s21, 1
        %s222 = scalar_select %p221, %s21, 1
        %s223 = scalar_lea.vmem %s1, %s222
        %p224 = scmp.lt.s32.totalorder %s21, 1
        %s225 = scalar_select %p224, %s21, 1
        %s226 = scalar_lea.vmem %s2, %s225
        %s227 = smul.u32 64, %s22
        %v228 = vld [vmem:[%s219] sm:$0xf]
        %v229 = vld [vmem:[%s219 + $0x4] sm:$0xf]
        %v230 = vld [vmem:[%s219 + $0x8] sm:$0xf]
        %v231 = vld [vmem:[%s219 + $0xc] sm:$0xf]
        %v232 = vld [vmem:[%s219 + $0x10] sm:$0xf]
        %v233 = vld [vmem:[%s219 + $0x14] sm:$0xf]
        %v234 = vld [vmem:[%s219 + $0x18] sm:$0xf]
        %v235 = vld [vmem:[%s219 + $0x1c] sm:$0xf]
        %v236 = vld [vmem:[%s219 + $0x20] sm:$0xf]
        %v237 = vld [vmem:[%s219 + $0x24] sm:$0xf]
        %v238 = vld [vmem:[%s219 + $0x28] sm:$0xf]
        %v239 = vld [vmem:[%s219 + $0x2c] sm:$0xf]
        %v240 = vld [vmem:[%s219 + $0x30] sm:$0xf]
        %v241 = vld [vmem:[%s219 + $0x34] sm:$0xf]
        %v242 = vld [vmem:[%s219 + $0x38] sm:$0xf]
        %v243 = vld [vmem:[%s219 + $0x3c] sm:$0xf]
        %v244 = vld [vmem:[%s219 + $0x40] sm:$0xf]
        %v245 = vld [vmem:[%s219 + $0x44] sm:$0xf]
        %v246 = vld [vmem:[%s219 + $0x48] sm:$0xf]
        %v247 = vld [vmem:[%s219 + $0x4c] sm:$0xf]
        %v248 = vld [vmem:[%s219 + $0x50] sm:$0xf]
        %v249 = vld [vmem:[%s219 + $0x54] sm:$0xf]
        %v250 = vld [vmem:[%s219 + $0x58] sm:$0xf]
        %v251 = vld [vmem:[%s219 + $0x5c] sm:$0xf]
        %v252 = vld [vmem:[%s219 + $0x60] sm:$0xf]
        %v253 = vld [vmem:[%s219 + $0x64] sm:$0xf]
        %v254 = vld [vmem:[%s219 + $0x68] sm:$0xf]
        %v255 = vld [vmem:[%s219 + $0x6c] sm:$0xf]
        %v256 = vld [vmem:[%s219 + $0x70] sm:$0xf]
        %v257 = vld [vmem:[%s219 + $0x74] sm:$0xf]
        %v258 = vld [vmem:[%s219 + $0x78] sm:$0xf]
        %v259 = vld [vmem:[%s219 + $0x7c] sm:$0xf]
        %v260 = vld [vmem:[%s219 + $0x80] sm:$0xf]
        %v261 = vld [vmem:[%s219 + $0x84] sm:$0xf]
        %v262 = vld [vmem:[%s219 + $0x88] sm:$0xf]
        %v263 = vld [vmem:[%s219 + $0x8c] sm:$0xf]
        %v264 = vld [vmem:[%s219 + $0x90] sm:$0xf]
        %v265 = vld [vmem:[%s219 + $0x94] sm:$0xf]
        %v266 = vld [vmem:[%s219 + $0x98] sm:$0xf]
        %v267 = vld [vmem:[%s219 + $0x9c] sm:$0xf]
        %v268 = vld [vmem:[%s219 + $0xa0] sm:$0xf]
        %v269 = vld [vmem:[%s219 + $0xa4] sm:$0xf]
        %v270 = vld [vmem:[%s219 + $0xa8] sm:$0xf]
        %v271 = vld [vmem:[%s219 + $0xac] sm:$0xf]
        %v272 = vld [vmem:[%s219 + $0xb0] sm:$0xf]
        %v273 = vld [vmem:[%s219 + $0xb4] sm:$0xf]
        %v274 = vld [vmem:[%s219 + $0xb8] sm:$0xf]
        %v275 = vld [vmem:[%s219 + $0xbc] sm:$0xf]
        %v276 = vld [vmem:[%s219 + $0xc0] sm:$0xf]
        %v277 = vld [vmem:[%s219 + $0xc4] sm:$0xf]
        %v278 = vld [vmem:[%s219 + $0xc8] sm:$0xf]
        %v279 = vld [vmem:[%s219 + $0xcc] sm:$0xf]
        %v280 = vld [vmem:[%s219 + $0xd0] sm:$0xf]
        %v281 = vld [vmem:[%s219 + $0xd4] sm:$0xf]
        %v282 = vld [vmem:[%s219 + $0xd8] sm:$0xf]
        %v283 = vld [vmem:[%s219 + $0xdc] sm:$0xf]
        %v284 = vld [vmem:[%s219 + $0xe0] sm:$0xf]
        %v285 = vld [vmem:[%s219 + $0xe4] sm:$0xf]
        %v286 = vld [vmem:[%s219 + $0xe8] sm:$0xf]
        %v287 = vld [vmem:[%s219 + $0xec] sm:$0xf]
        %v288 = vld [vmem:[%s219 + $0xf0] sm:$0xf]
        %v289 = vld [vmem:[%s219 + $0xf4] sm:$0xf]
        %v290 = vld [vmem:[%s219 + $0xf8] sm:$0xf]
        %v291 = vld [vmem:[%s219 + $0xfc] sm:$0xf]
        %v292 = vunpack.c.l.bf16 %v228
        %v293 = vunpack.c.l.bf16 %v229
        %v294 = vunpack.c.l.bf16 %v230
        %v295 = vunpack.c.l.bf16 %v231
        %v296 = vunpack.c.l.bf16 %v232
        %v297 = vunpack.c.l.bf16 %v233
        %v298 = vunpack.c.l.bf16 %v234
        %v299 = vunpack.c.l.bf16 %v235
        %v300 = vunpack.c.l.bf16 %v236
        %v301 = vunpack.c.l.bf16 %v237
        %v302 = vunpack.c.l.bf16 %v238
        %v303 = vunpack.c.l.bf16 %v239
        %v304 = vunpack.c.l.bf16 %v240
        %v305 = vunpack.c.l.bf16 %v241
        %v306 = vunpack.c.l.bf16 %v242
        %v307 = vunpack.c.l.bf16 %v243
        %v308 = vunpack.c.l.bf16 %v244
        %v309 = vunpack.c.l.bf16 %v245
        %v310 = vunpack.c.l.bf16 %v246
        %v311 = vunpack.c.l.bf16 %v247
        %v312 = vunpack.c.l.bf16 %v248
        %v313 = vunpack.c.l.bf16 %v249
        %v314 = vunpack.c.l.bf16 %v250
        %v315 = vunpack.c.l.bf16 %v251
        %v316 = vunpack.c.l.bf16 %v252
        %v317 = vunpack.c.l.bf16 %v253
        %v318 = vunpack.c.l.bf16 %v254
        %v319 = vunpack.c.l.bf16 %v255
        %v320 = vunpack.c.l.bf16 %v256
        %v321 = vunpack.c.l.bf16 %v257
        %v322 = vunpack.c.l.bf16 %v258
        %v323 = vunpack.c.l.bf16 %v259
        %v324 = vunpack.c.l.bf16 %v260
        %v325 = vunpack.c.l.bf16 %v261
        %v326 = vunpack.c.l.bf16 %v262
        %v327 = vunpack.c.l.bf16 %v263
        %v328 = vunpack.c.l.bf16 %v264
        %v329 = vunpack.c.l.bf16 %v265
        %v330 = vunpack.c.l.bf16 %v266
        %v331 = vunpack.c.l.bf16 %v267
        %v332 = vunpack.c.l.bf16 %v268
        %v333 = vunpack.c.l.bf16 %v269
        %v334 = vunpack.c.l.bf16 %v270
        %v335 = vunpack.c.l.bf16 %v271
        %v336 = vunpack.c.l.bf16 %v272
        %v337 = vunpack.c.l.bf16 %v273
        %v338 = vunpack.c.l.bf16 %v274
        %v339 = vunpack.c.l.bf16 %v275
        %v340 = vunpack.c.l.bf16 %v276
        %v341 = vunpack.c.l.bf16 %v277
        %v342 = vunpack.c.l.bf16 %v278
        %v343 = vunpack.c.l.bf16 %v279
        %v344 = vunpack.c.l.bf16 %v280
        %v345 = vunpack.c.l.bf16 %v281
        %v346 = vunpack.c.l.bf16 %v282
        %v347 = vunpack.c.l.bf16 %v283
        %v348 = vunpack.c.l.bf16 %v284
        %v349 = vunpack.c.l.bf16 %v285
        %v350 = vunpack.c.l.bf16 %v286
        %v351 = vunpack.c.l.bf16 %v287
        %v352 = vunpack.c.l.bf16 %v288
        %v353 = vunpack.c.l.bf16 %v289
        %v354 = vunpack.c.l.bf16 %v290
        %v355 = vunpack.c.l.bf16 %v291
        %v356 = vld [vmem:[%s223] sm:$0x1]
        %v358 = vperm.slane %v356, 0
        %v360 = vmul.f32 %v292, %v358
        %v361 = vmul.f32 %v293, %v358
        %v362 = vmul.f32 %v294, %v358
        %v363 = vmul.f32 %v295, %v358
        %v364 = vmul.f32 %v296, %v358
        %v365 = vmul.f32 %v297, %v358
        %v366 = vmul.f32 %v298, %v358
        %v367 = vmul.f32 %v299, %v358
        %v368 = vmul.f32 %v300, %v358
        %v369 = vmul.f32 %v301, %v358
        %v370 = vmul.f32 %v302, %v358
        %v371 = vmul.f32 %v303, %v358
        %v372 = vmul.f32 %v304, %v358
        %v373 = vmul.f32 %v305, %v358
        %v374 = vmul.f32 %v306, %v358
        %v375 = vmul.f32 %v307, %v358
        %v376 = vmul.f32 %v308, %v358
        %v377 = vmul.f32 %v309, %v358
        %v378 = vmul.f32 %v310, %v358
        %v379 = vmul.f32 %v311, %v358
        %v380 = vmul.f32 %v312, %v358
        %v381 = vmul.f32 %v313, %v358
        %v382 = vmul.f32 %v314, %v358
        %v383 = vmul.f32 %v315, %v358
        %v384 = vmul.f32 %v316, %v358
        %v385 = vmul.f32 %v317, %v358
        %v386 = vmul.f32 %v318, %v358
        %v387 = vmul.f32 %v319, %v358
        %v388 = vmul.f32 %v320, %v358
        %v389 = vmul.f32 %v321, %v358
        %v390 = vmul.f32 %v322, %v358
        %v391 = vmul.f32 %v323, %v358
        %v392 = vmul.f32 %v324, %v358
        %v393 = vmul.f32 %v325, %v358
        %v394 = vmul.f32 %v326, %v358
        %v395 = vmul.f32 %v327, %v358
        %v396 = vmul.f32 %v328, %v358
        %v397 = vmul.f32 %v329, %v358
        %v398 = vmul.f32 %v330, %v358
        %v399 = vmul.f32 %v331, %v358
        %v400 = vmul.f32 %v332, %v358
        %v401 = vmul.f32 %v333, %v358
        %v402 = vmul.f32 %v334, %v358
        %v403 = vmul.f32 %v335, %v358
        %v404 = vmul.f32 %v336, %v358
        %v405 = vmul.f32 %v337, %v358
        %v406 = vmul.f32 %v338, %v358
        %v407 = vmul.f32 %v339, %v358
        %v408 = vmul.f32 %v340, %v358
        %v409 = vmul.f32 %v341, %v358
        %v410 = vmul.f32 %v342, %v358
        %v411 = vmul.f32 %v343, %v358
        %v412 = vmul.f32 %v344, %v358
        %v413 = vmul.f32 %v345, %v358
        %v414 = vmul.f32 %v346, %v358
        %v415 = vmul.f32 %v347, %v358
        %v416 = vmul.f32 %v348, %v358
        %v417 = vmul.f32 %v349, %v358
        %v418 = vmul.f32 %v350, %v358
        %v419 = vmul.f32 %v351, %v358
        %v420 = vmul.f32 %v352, %v358
        %v421 = vmul.f32 %v353, %v358
        %v422 = vmul.f32 %v354, %v358
        %v423 = vmul.f32 %v355, %v358
        %v424 = vld [vmem:[%s226] sm:$0x1]
        %v426 = vperm.slane %v424, 0
        %v428 = vadd.f32 %v360, %v426
        %v429 = vadd.f32 %v361, %v426
        %v430 = vadd.f32 %v362, %v426
        %v431 = vadd.f32 %v363, %v426
        %v432 = vadd.f32 %v364, %v426
        %v433 = vadd.f32 %v365, %v426
        %v434 = vadd.f32 %v366, %v426
        %v435 = vadd.f32 %v367, %v426
        %v436 = vadd.f32 %v368, %v426
        %v437 = vadd.f32 %v369, %v426
        %v438 = vadd.f32 %v370, %v426
        %v439 = vadd.f32 %v371, %v426
        %v440 = vadd.f32 %v372, %v426
        %v441 = vadd.f32 %v373, %v426
        %v442 = vadd.f32 %v374, %v426
        %v443 = vadd.f32 %v375, %v426
        %v444 = vadd.f32 %v376, %v426
        %v445 = vadd.f32 %v377, %v426
        %v446 = vadd.f32 %v378, %v426
        %v447 = vadd.f32 %v379, %v426
        %v448 = vadd.f32 %v380, %v426
        %v449 = vadd.f32 %v381, %v426
        %v450 = vadd.f32 %v382, %v426
        %v451 = vadd.f32 %v383, %v426
        %v452 = vadd.f32 %v384, %v426
        %v453 = vadd.f32 %v385, %v426
        %v454 = vadd.f32 %v386, %v426
        %v455 = vadd.f32 %v387, %v426
        %v456 = vadd.f32 %v388, %v426
        %v457 = vadd.f32 %v389, %v426
        %v458 = vadd.f32 %v390, %v426
        %v459 = vadd.f32 %v391, %v426
        %v460 = vadd.f32 %v392, %v426
        %v461 = vadd.f32 %v393, %v426
        %v462 = vadd.f32 %v394, %v426
        %v463 = vadd.f32 %v395, %v426
        %v464 = vadd.f32 %v396, %v426
        %v465 = vadd.f32 %v397, %v426
        %v466 = vadd.f32 %v398, %v426
        %v467 = vadd.f32 %v399, %v426
        %v468 = vadd.f32 %v400, %v426
        %v469 = vadd.f32 %v401, %v426
        %v470 = vadd.f32 %v402, %v426
        %v471 = vadd.f32 %v403, %v426
        %v472 = vadd.f32 %v404, %v426
        %v473 = vadd.f32 %v405, %v426
        %v474 = vadd.f32 %v406, %v426
        %v475 = vadd.f32 %v407, %v426
        %v476 = vadd.f32 %v408, %v426
        %v477 = vadd.f32 %v409, %v426
        %v478 = vadd.f32 %v410, %v426
        %v479 = vadd.f32 %v411, %v426
        %v480 = vadd.f32 %v412, %v426
        %v481 = vadd.f32 %v413, %v426
        %v482 = vadd.f32 %v414, %v426
        %v483 = vadd.f32 %v415, %v426
        %v484 = vadd.f32 %v416, %v426
        %v485 = vadd.f32 %v417, %v426
        %v486 = vadd.f32 %v418, %v426
        %v487 = vadd.f32 %v419, %v426
        %v488 = vadd.f32 %v420, %v426
        %v489 = vadd.f32 %v421, %v426
        %v490 = vadd.f32 %v422, %v426
        %v491 = vadd.f32 %v423, %v426
        %vm492 = vcmp.ge.f32.partialorder %v428, 0.0
        %vm493 = vcmp.ge.f32.partialorder %v429, 0.0
        %vm494 = vcmp.ge.f32.partialorder %v430, 0.0
        %vm495 = vcmp.ge.f32.partialorder %v431, 0.0
        %vm496 = vcmp.ge.f32.partialorder %v432, 0.0
        %vm497 = vcmp.ge.f32.partialorder %v433, 0.0
        %vm498 = vcmp.ge.f32.partialorder %v434, 0.0
        %vm499 = vcmp.ge.f32.partialorder %v435, 0.0
        %vm500 = vcmp.ge.f32.partialorder %v436, 0.0
        %vm501 = vcmp.ge.f32.partialorder %v437, 0.0
        %vm502 = vcmp.ge.f32.partialorder %v438, 0.0
        %vm503 = vcmp.ge.f32.partialorder %v439, 0.0
        %vm504 = vcmp.ge.f32.partialorder %v440, 0.0
        %vm505 = vcmp.ge.f32.partialorder %v441, 0.0
        %vm506 = vcmp.ge.f32.partialorder %v442, 0.0
        %vm507 = vcmp.ge.f32.partialorder %v443, 0.0
        %vm508 = vcmp.ge.f32.partialorder %v444, 0.0
        %vm509 = vcmp.ge.f32.partialorder %v445, 0.0
        %vm510 = vcmp.ge.f32.partialorder %v446, 0.0
        %vm511 = vcmp.ge.f32.partialorder %v447, 0.0
        %vm512 = vcmp.ge.f32.partialorder %v448, 0.0
        %vm513 = vcmp.ge.f32.partialorder %v449, 0.0
        %vm514 = vcmp.ge.f32.partialorder %v450, 0.0
        %vm515 = vcmp.ge.f32.partialorder %v451, 0.0
        %vm516 = vcmp.ge.f32.partialorder %v452, 0.0
        %vm517 = vcmp.ge.f32.partialorder %v453, 0.0
        %vm518 = vcmp.ge.f32.partialorder %v454, 0.0
        %vm519 = vcmp.ge.f32.partialorder %v455, 0.0
        %vm520 = vcmp.ge.f32.partialorder %v456, 0.0
        %vm521 = vcmp.ge.f32.partialorder %v457, 0.0
        %vm522 = vcmp.ge.f32.partialorder %v458, 0.0
        %vm523 = vcmp.ge.f32.partialorder %v459, 0.0
        %vm524 = vcmp.ge.f32.partialorder %v460, 0.0
        %vm525 = vcmp.ge.f32.partialorder %v461, 0.0
        %vm526 = vcmp.ge.f32.partialorder %v462, 0.0
        %vm527 = vcmp.ge.f32.partialorder %v463, 0.0
        %vm528 = vcmp.ge.f32.partialorder %v464, 0.0
        %vm529 = vcmp.ge.f32.partialorder %v465, 0.0
        %vm530 = vcmp.ge.f32.partialorder %v466, 0.0
        %vm531 = vcmp.ge.f32.partialorder %v467, 0.0
        %vm532 = vcmp.ge.f32.partialorder %v468, 0.0
        %vm533 = vcmp.ge.f32.partialorder %v469, 0.0
        %vm534 = vcmp.ge.f32.partialorder %v470, 0.0
        %vm535 = vcmp.ge.f32.partialorder %v471, 0.0
        %vm536 = vcmp.ge.f32.partialorder %v472, 0.0
        %vm537 = vcmp.ge.f32.partialorder %v473, 0.0
        %vm538 = vcmp.ge.f32.partialorder %v474, 0.0
        %vm539 = vcmp.ge.f32.partialorder %v475, 0.0
        %vm540 = vcmp.ge.f32.partialorder %v476, 0.0
        %vm541 = vcmp.ge.f32.partialorder %v477, 0.0
        %vm542 = vcmp.ge.f32.partialorder %v478, 0.0
        %vm543 = vcmp.ge.f32.partialorder %v479, 0.0
        %vm544 = vcmp.ge.f32.partialorder %v480, 0.0
        %vm545 = vcmp.ge.f32.partialorder %v481, 0.0
        %vm546 = vcmp.ge.f32.partialorder %v482, 0.0
        %vm547 = vcmp.ge.f32.partialorder %v483, 0.0
        %vm548 = vcmp.ge.f32.partialorder %v484, 0.0
        %vm549 = vcmp.ge.f32.partialorder %v485, 0.0
        %vm550 = vcmp.ge.f32.partialorder %v486, 0.0
        %vm551 = vcmp.ge.f32.partialorder %v487, 0.0
        %vm552 = vcmp.ge.f32.partialorder %v488, 0.0
        %vm553 = vcmp.ge.f32.partialorder %v489, 0.0
        %vm554 = vcmp.ge.f32.partialorder %v490, 0.0
        %vm555 = vcmp.ge.f32.partialorder %v491, 0.0
        %v556 = vmul.f32 %v428, 0.01
        %v557 = vmul.f32 %v429, 0.01
        %v558 = vmul.f32 %v430, 0.01
        %v559 = vmul.f32 %v431, 0.01
        %v560 = vmul.f32 %v432, 0.01
        %v561 = vmul.f32 %v433, 0.01
        %v562 = vmul.f32 %v434, 0.01
        %v563 = vmul.f32 %v435, 0.01
        %v564 = vmul.f32 %v436, 0.01
        %v565 = vmul.f32 %v437, 0.01
        %v566 = vmul.f32 %v438, 0.01
        %v567 = vmul.f32 %v439, 0.01
        %v568 = vmul.f32 %v440, 0.01
        %v569 = vmul.f32 %v441, 0.01
        %v570 = vmul.f32 %v442, 0.01
        %v571 = vmul.f32 %v443, 0.01
        %v572 = vmul.f32 %v444, 0.01
        %v573 = vmul.f32 %v445, 0.01
        %v574 = vmul.f32 %v446, 0.01
        %v575 = vmul.f32 %v447, 0.01
        %v576 = vmul.f32 %v448, 0.01
        %v577 = vmul.f32 %v449, 0.01
        %v578 = vmul.f32 %v450, 0.01
        %v579 = vmul.f32 %v451, 0.01
        %v580 = vmul.f32 %v452, 0.01
        %v581 = vmul.f32 %v453, 0.01
        %v582 = vmul.f32 %v454, 0.01
        %v583 = vmul.f32 %v455, 0.01
        %v584 = vmul.f32 %v456, 0.01
        %v585 = vmul.f32 %v457, 0.01
        %v586 = vmul.f32 %v458, 0.01
        %v587 = vmul.f32 %v459, 0.01
        %v588 = vmul.f32 %v460, 0.01
        %v589 = vmul.f32 %v461, 0.01
        %v590 = vmul.f32 %v462, 0.01
        %v591 = vmul.f32 %v463, 0.01
        %v592 = vmul.f32 %v464, 0.01
        %v593 = vmul.f32 %v465, 0.01
        %v594 = vmul.f32 %v466, 0.01
        %v595 = vmul.f32 %v467, 0.01
        %v596 = vmul.f32 %v468, 0.01
        %v597 = vmul.f32 %v469, 0.01
        %v598 = vmul.f32 %v470, 0.01
        %v599 = vmul.f32 %v471, 0.01
        %v600 = vmul.f32 %v472, 0.01
        %v601 = vmul.f32 %v473, 0.01
        %v602 = vmul.f32 %v474, 0.01
        %v603 = vmul.f32 %v475, 0.01
        %v604 = vmul.f32 %v476, 0.01
        %v605 = vmul.f32 %v477, 0.01
        %v606 = vmul.f32 %v478, 0.01
        %v607 = vmul.f32 %v479, 0.01
        %v608 = vmul.f32 %v480, 0.01
        %v609 = vmul.f32 %v481, 0.01
        %v610 = vmul.f32 %v482, 0.01
        %v611 = vmul.f32 %v483, 0.01
        %v612 = vmul.f32 %v484, 0.01
        %v613 = vmul.f32 %v485, 0.01
        %v614 = vmul.f32 %v486, 0.01
        %v615 = vmul.f32 %v487, 0.01
        %v616 = vmul.f32 %v488, 0.01
        %v617 = vmul.f32 %v489, 0.01
        %v618 = vmul.f32 %v490, 0.01
        %v619 = vmul.f32 %v491, 0.01
        %v620 = vsel %vm492, %v428, %v556
        %v621 = vsel %vm493, %v429, %v557
        %v622 = vsel %vm494, %v430, %v558
        %v623 = vsel %vm495, %v431, %v559
        %v624 = vsel %vm496, %v432, %v560
        %v625 = vsel %vm497, %v433, %v561
        %v626 = vsel %vm498, %v434, %v562
        %v627 = vsel %vm499, %v435, %v563
        %v628 = vsel %vm500, %v436, %v564
        %v629 = vsel %vm501, %v437, %v565
        %v630 = vsel %vm502, %v438, %v566
        %v631 = vsel %vm503, %v439, %v567
        %v632 = vsel %vm504, %v440, %v568
        %v633 = vsel %vm505, %v441, %v569
        %v634 = vsel %vm506, %v442, %v570
        %v635 = vsel %vm507, %v443, %v571
        %v636 = vsel %vm508, %v444, %v572
        %v637 = vsel %vm509, %v445, %v573
        %v638 = vsel %vm510, %v446, %v574
        %v639 = vsel %vm511, %v447, %v575
        %v640 = vsel %vm512, %v448, %v576
        %v641 = vsel %vm513, %v449, %v577
        %v642 = vsel %vm514, %v450, %v578
        %v643 = vsel %vm515, %v451, %v579
        %v644 = vsel %vm516, %v452, %v580
        %v645 = vsel %vm517, %v453, %v581
        %v646 = vsel %vm518, %v454, %v582
        %v647 = vsel %vm519, %v455, %v583
        %v648 = vsel %vm520, %v456, %v584
        %v649 = vsel %vm521, %v457, %v585
        %v650 = vsel %vm522, %v458, %v586
        %v651 = vsel %vm523, %v459, %v587
        %v652 = vsel %vm524, %v460, %v588
        %v653 = vsel %vm525, %v461, %v589
        %v654 = vsel %vm526, %v462, %v590
        %v655 = vsel %vm527, %v463, %v591
        %v656 = vsel %vm528, %v464, %v592
        %v657 = vsel %vm529, %v465, %v593
        %v658 = vsel %vm530, %v466, %v594
        %v659 = vsel %vm531, %v467, %v595
        %v660 = vsel %vm532, %v468, %v596
        %v661 = vsel %vm533, %v469, %v597
        %v662 = vsel %vm534, %v470, %v598
        %v663 = vsel %vm535, %v471, %v599
        %v664 = vsel %vm536, %v472, %v600
        %v665 = vsel %vm537, %v473, %v601
        %v666 = vsel %vm538, %v474, %v602
        %v667 = vsel %vm539, %v475, %v603
        %v668 = vsel %vm540, %v476, %v604
        %v669 = vsel %vm541, %v477, %v605
        %v670 = vsel %vm542, %v478, %v606
        %v671 = vsel %vm543, %v479, %v607
        %v672 = vsel %vm544, %v480, %v608
        %v673 = vsel %vm545, %v481, %v609
        %v674 = vsel %vm546, %v482, %v610
        %v675 = vsel %vm547, %v483, %v611
        %v676 = vsel %vm548, %v484, %v612
        %v677 = vsel %vm549, %v485, %v613
        %v678 = vsel %vm550, %v486, %v614
        %v679 = vsel %vm551, %v487, %v615
        %v680 = vsel %vm552, %v488, %v616
        %v681 = vsel %vm553, %v489, %v617
        %v682 = vsel %vm554, %v490, %v618
        %v683 = vsel %vm555, %v491, %v619
        %vm684 = vcmask 261120
        %685 = vst.msk [vmem:[%s210] sm:$0xff] %vm684, %v620
        %686 = vst.msk [vmem:[%s210 + $0x8] sm:$0xff] %vm684, %v621
        %687 = vst.msk [vmem:[%s210 + $0x10] sm:$0xff] %vm684, %v622
        %688 = vst.msk [vmem:[%s210 + $0x18] sm:$0xff] %vm684, %v623
        %689 = vst.msk [vmem:[%s210 + $0x20] sm:$0xff] %vm684, %v624
        %690 = vst.msk [vmem:[%s210 + $0x28] sm:$0xff] %vm684, %v625
        %691 = vst.msk [vmem:[%s210 + $0x30] sm:$0xff] %vm684, %v626
        %692 = vst.msk [vmem:[%s210 + $0x38] sm:$0xff] %vm684, %v627
        %693 = vst.msk [vmem:[%s210 + $0x40] sm:$0xff] %vm684, %v628
        %694 = vst.msk [vmem:[%s210 + $0x48] sm:$0xff] %vm684, %v629
        %695 = vst.msk [vmem:[%s210 + $0x50] sm:$0xff] %vm684, %v630
        %696 = vst.msk [vmem:[%s210 + $0x58] sm:$0xff] %vm684, %v631
        %697 = vst.msk [vmem:[%s210 + $0x60] sm:$0xff] %vm684, %v632
        %698 = vst.msk [vmem:[%s210 + $0x68] sm:$0xff] %vm684, %v633
        %699 = vst.msk [vmem:[%s210 + $0x70] sm:$0xff] %vm684, %v634
        %700 = vst.msk [vmem:[%s210 + $0x78] sm:$0xff] %vm684, %v635
        %701 = vst.msk [vmem:[%s210 + $0x80] sm:$0xff] %vm684, %v636
        %702 = vst.msk [vmem:[%s210 + $0x88] sm:$0xff] %vm684, %v637
        %703 = vst.msk [vmem:[%s210 + $0x90] sm:$0xff] %vm684, %v638
        %704 = vst.msk [vmem:[%s210 + $0x98] sm:$0xff] %vm684, %v639
        %705 = vst.msk [vmem:[%s210 + $0xa0] sm:$0xff] %vm684, %v640
        %706 = vst.msk [vmem:[%s210 + $0xa8] sm:$0xff] %vm684, %v641
        %707 = vst.msk [vmem:[%s210 + $0xb0] sm:$0xff] %vm684, %v642
        %708 = vst.msk [vmem:[%s210 + $0xb8] sm:$0xff] %vm684, %v643
        %709 = vst.msk [vmem:[%s210 + $0xc0] sm:$0xff] %vm684, %v644
        %710 = vst.msk [vmem:[%s210 + $0xc8] sm:$0xff] %vm684, %v645
        %711 = vst.msk [vmem:[%s210 + $0xd0] sm:$0xff] %vm684, %v646
        %712 = vst.msk [vmem:[%s210 + $0xd8] sm:$0xff] %vm684, %v647
        %713 = vst.msk [vmem:[%s210 + $0xe0] sm:$0xff] %vm684, %v648
        %714 = vst.msk [vmem:[%s210 + $0xe8] sm:$0xff] %vm684, %v649
        %715 = vst.msk [vmem:[%s210 + $0xf0] sm:$0xff] %vm684, %v650
        %716 = vst.msk [vmem:[%s210 + $0xf8] sm:$0xff] %vm684, %v651
        %717 = vst.msk [vmem:[%s210 + $0x100] sm:$0xff] %vm684, %v652
        %718 = vst.msk [vmem:[%s210 + $0x108] sm:$0xff] %vm684, %v653
        %719 = vst.msk [vmem:[%s210 + $0x110] sm:$0xff] %vm684, %v654
        %720 = vst.msk [vmem:[%s210 + $0x118] sm:$0xff] %vm684, %v655
        %721 = vst.msk [vmem:[%s210 + $0x120] sm:$0xff] %vm684, %v656
        %722 = vst.msk [vmem:[%s210 + $0x128] sm:$0xff] %vm684, %v657
        %723 = vst.msk [vmem:[%s210 + $0x130] sm:$0xff] %vm684, %v658
        %724 = vst.msk [vmem:[%s210 + $0x138] sm:$0xff] %vm684, %v659
        %725 = vst.msk [vmem:[%s210 + $0x140] sm:$0xff] %vm684, %v660
        %726 = vst.msk [vmem:[%s210 + $0x148] sm:$0xff] %vm684, %v661
        %727 = vst.msk [vmem:[%s210 + $0x150] sm:$0xff] %vm684, %v662
        %728 = vst.msk [vmem:[%s210 + $0x158] sm:$0xff] %vm684, %v663
        %729 = vst.msk [vmem:[%s210 + $0x160] sm:$0xff] %vm684, %v664
        %730 = vst.msk [vmem:[%s210 + $0x168] sm:$0xff] %vm684, %v665
        %731 = vst.msk [vmem:[%s210 + $0x170] sm:$0xff] %vm684, %v666
        %732 = vst.msk [vmem:[%s210 + $0x178] sm:$0xff] %vm684, %v667
        %733 = vst.msk [vmem:[%s210 + $0x180] sm:$0xff] %vm684, %v668
        %734 = vst.msk [vmem:[%s210 + $0x188] sm:$0xff] %vm684, %v669
        %735 = vst.msk [vmem:[%s210 + $0x190] sm:$0xff] %vm684, %v670
        %736 = vst.msk [vmem:[%s210 + $0x198] sm:$0xff] %vm684, %v671
        %737 = vst.msk [vmem:[%s210 + $0x1a0] sm:$0xff] %vm684, %v672
        %738 = vst.msk [vmem:[%s210 + $0x1a8] sm:$0xff] %vm684, %v673
        %739 = vst.msk [vmem:[%s210 + $0x1b0] sm:$0xff] %vm684, %v674
        %740 = vst.msk [vmem:[%s210 + $0x1b8] sm:$0xff] %vm684, %v675
        %741 = vst.msk [vmem:[%s210 + $0x1c0] sm:$0xff] %vm684, %v676
        %742 = vst.msk [vmem:[%s210 + $0x1c8] sm:$0xff] %vm684, %v677
        %743 = vst.msk [vmem:[%s210 + $0x1d0] sm:$0xff] %vm684, %v678
        %744 = vst.msk [vmem:[%s210 + $0x1d8] sm:$0xff] %vm684, %v679
        %745 = vst.msk [vmem:[%s210 + $0x1e0] sm:$0xff] %vm684, %v680
        %746 = vst.msk [vmem:[%s210 + $0x1e8] sm:$0xff] %vm684, %v681
        %747 = vst.msk [vmem:[%s210 + $0x1f0] sm:$0xff] %vm684, %v682
        %748 = vst.msk [vmem:[%s210 + $0x1f8] sm:$0xff] %vm684, %v683
        %s749 = sand.u32 %s119, 1
        %s750 = scalar_lea.sflag [#allocation3], %s749
        %s751 = sand.u32 %s119, 1
        %s752 = smul.addr %s751, 512
        %s753 = scalar_lea.vmem [#allocation2], %s752
        // Predicated region
        $region33: #{double_conv_block_forward.7} parent=31 // pred_check
          %p754 = pneg %p129
        $region34: #{double_conv_block_forward.7} parent=31 // pred_check_branch
          %756 = sbr.rel (%p754) target = $region36
        $region35: #{double_conv_block_forward.7} parent=31 // pred_region
          %s757 = smul.u32 64, %s22
          %759 = vsyncadd %s750, 0
          %s760 = smul.addr %s21, 64
          %s761 = sadd.s32 %s757, %s760
          %s762 = smul.addr %s761, 8
          %s763 = scalar_lea.hbm %s3, %s762
          %s764 = sshll.u32 %s753, 4
          %s765 = int_to_ptr.vmem [resolvable:$true] %s764
          %s766 = sshll.u32 %s763, 4
          %s767 = int_to_ptr.hbm [resolvable:$true] %s766
          %772 = dma.vmem_to_hbm [thread:$0]  %s765, 8192, %s767, %s750, 128, 128, 8
        $region36: #{double_conv_block_forward.7} parent=31 // pred_fallthru
          _
      $region32: #{double_conv_block_forward.7} parent=5 // pred_fallthru
        _
      %p773 = scmp.le.s32.totalorder 2, %s12
      // Predicated region
      $region37: #{double_conv_block_forward.7} parent=5 // pred_check
        %p774 = pneg %p773
      $region38: #{double_conv_block_forward.7} parent=5 // pred_check_branch
        %776 = sbr.rel (%p774) target = $region40
      $region39: #{double_conv_block_forward.7} parent=5 // pred_region
        %s777 = ssub.s32 %s12, 2
        // Predicated region
        $region41: #{double_conv_block_forward.7} parent=39 // pred_check
          %p778 = pneg %p135
        $region42: #{double_conv_block_forward.7} parent=39 // pred_check_branch
          %780 = sbr.rel (%p778) target = $region44
        $region43: #{double_conv_block_forward.7} parent=39 // pred_region
          %s781 = sand.u32 %s120, 1
          %s782 = scalar_lea.sflag [#allocation3], %s781
          %s783 = sand.u32 %s120, 1
          %s784 = smul.addr %s783, 512
          %s785 = scalar_lea.vmem [#allocation2], %s784
          %787 = dma.done %s782, 8192
        $region44: #{double_conv_block_forward.7} parent=39 // pred_fallthru
          _
      $region40: #{double_conv_block_forward.7} parent=5 // pred_fallthru
        _
    $region6: #{double_conv_block_forward.7} parent=1 // loop_footer
      %s16 = sadd.s32 1, %s12
    $region7: #{double_conv_block_forward.7} parent=1 // loop_footer_branch
      %11 = sbr.rel target = $region3
    $region8: #{double_conv_block_forward.7} parent=1 // loop_exit
      _
    %788 = vsyncpa [#allocation3], 1
    %s789 = scalar_lea.sflag [#allocation3], 1
    %790 = vsyncpa %s789, 1

// kernel: double_conv_block_forward.6
$region0: #{double_conv_block_forward.6}
  #allocation0 [shape = 'u32[]', space=smem, size = 0x4, offset = 0x4, fixed_abs, tag = 'smem constant byte address 0x4 - core index']
  #allocation1 [shape = 'u32[72,128]{1,0:T(1,128)}', space=vmem, size = 0x9000, scoped, tag = 'internal scratch']
  %s0 = inlined_call_operand.vmem [shape: bf16[2,512,864], index: 0, kind: input, shape index: {}]
  %s1 = inlined_call_operand.vmem [shape: bf16[864,128], index: 1, kind: input, shape index: {}]
  %s2 = inlined_call_operand.vmem [shape: bf16[2,512,32], index: 2, kind: output, shape index: {0}]
  %s3 = inlined_call_operand.vmem [shape: f32[2,1,128], index: 3, kind: output, shape index: {1}]
  %s4 = inlined_call_operand.vmem [shape: f32[2,1,128], index: 4, kind: output, shape index: {2}]
  %5 = xla_tuple %s2, %s3, %s4
  %s6 = sld [smem:[#allocation0]]
  $region61: #{double_conv_block_forward.6} parent=0
    _
  %s8 = ssub.s32 1, %s6
  %s9 = scalar_select 0, %s8, %s6
  loop: start=0, step=1, limit=6
  $region2: #{double_conv_block_forward.6} parent=0 // loop_pre_header
    _
  $region3: #{double_conv_block_forward.6} parent=0 // loop_header
    %s11 = sphi 0, %s15
    %p12 = scmp.ge.s32.totalorder %s11, 6
    %s18 = sphi 0, %s30
    %s19 = sphi 0, %s26
    %s20 = sphi 0, %s18
    %s21 = sphi 0, %s19
    %s22 = sphi 0, %s20
    %s23 = sphi 0, %s21
    %s35 = sphi 0, %s37
    %s38 = sphi 0, %s35
    %s39 = sphi 0, %s38
    %s55 = sphi 0, %s39
    %s59 = sphi 0, %s59
    %s61 = sphi 0, %s59
    %s62 = sphi 0, %s61
    %s76 = sphi 0, %s62
    %s84 = sphi 0, %s86
    %s87 = sphi 0, %s84
    %s88 = sphi 0, %s87
    %s104 = sphi 0, %s88
    %s110 = sphi 0, %s112
    %s113 = sphi 0, %s110
    %s114 = sphi 0, %s113
    %s130 = sphi 0, %s114
    %s136 = sphi 0, %s138
    %s139 = sphi 0, %s136
    %s140 = sphi 0, %s139
    %s156 = sphi 0, %s140
  $region4: #{double_conv_block_forward.6} parent=0 // loop_header_branch
    %14 = sbr.rel (%p12) target = $region8
  $region5: #{double_conv_block_forward.6} parent=0 // loop_body
    %s16 = ssub.s32 %s11, 1
    %s17 = ssub.s32 %s11, 2
    %s24 = sadd.s32 1, %s19
    %p25 = scmp.ge.s32.totalorder %s24, 2
    %s26 = scalar_select %p25, 0, %s24
    %s27 = sadd.s32 1, %s18
    %s28 = scalar_select %p25, %s27, %s18
    %p29 = scmp.ge.s32.totalorder %s28, 2
    %s30 = scalar_select %p29, 0, %s28
    %s31 = ssub.s32 %s18, %s30
    %s32 = ssub.s32 %s19, %s26
    %s33 = sor.u32 %s31, %s32
    %p34 = scmp.eq.s32.totalorder %s33, 0
    %s36 = sadd.s32 %s35, 1
    %s37 = scalar_select %p34, %s35, %s36
    %p40 = pneg %p34
    %p41 = scmp.eq.s32.totalorder %s11, 3
    %p42 = por %p40, %p41
    %p43 = scmp.ne.s32.totalorder %s35, %s38
    %p44 = scmp.eq.s32.totalorder %s11, 0
    %p45 = por %p43, %p44
    %p46 = scmp.ne.s32.totalorder %s35, %s38
    %p47 = scmp.eq.s32.totalorder %s16, 3
    %p48 = por %p46, %p47
    %p49 = scmp.ne.s32.totalorder %s38, %s39
    %p50 = scmp.eq.s32.totalorder %s16, 0
    %p51 = por %p49, %p50
    %p52 = scmp.ne.s32.totalorder %s38, %s39
    %p53 = scmp.eq.s32.totalorder %s17, 3
    %p54 = por %p52, %p53
    %p56 = scmp.ne.s32.totalorder %s39, %s55
    %p57 = scmp.eq.s32.totalorder %s17, 0
    %p58 = por %p56, %p57
    %s60 = sadd.s32 %s59, 1
    %p63 = scmp.eq.s32.totalorder %s11, 3
    %p64 = scmp.ne.s32.totalorder %s59, %s61
    %p65 = scmp.eq.s32.totalorder %s11, 0
    %p66 = por %p64, %p65
    %p67 = scmp.ne.s32.totalorder %s59, %s61
    %p68 = scmp.eq.s32.totalorder %s16, 3
    %p69 = por %p67, %p68
    %p70 = scmp.ne.s32.totalorder %s61, %s62
    %p71 = scmp.eq.s32.totalorder %s16, 0
    %p72 = por %p70, %p71
    %p73 = scmp.ne.s32.totalorder %s61, %s62
    %p74 = scmp.eq.s32.totalorder %s17, 3
    %p75 = por %p73, %p74
    %p77 = scmp.ne.s32.totalorder %s62, %s76
    %p78 = scmp.eq.s32.totalorder %s17, 0
    %p79 = por %p77, %p78
    %s80 = ssub.s32 %s18, %s30
    %s81 = ssub.s32 %s19, %s26
    %s82 = sor.u32 %s80, %s81
    %p83 = scmp.eq.s32.totalorder %s82, 0
    %s85 = sadd.s32 %s84, 1
    %s86 = scalar_select %p83, %s84, %s85
    %p89 = pneg %p83
    %p90 = scmp.eq.s32.totalorder %s11, 3
    %p91 = por %p89, %p90
    %p92 = scmp.ne.s32.totalorder %s84, %s87
    %p93 = scmp.eq.s32.totalorder %s11, 0
    %p94 = por %p92, %p93
    %p95 = scmp.ne.s32.totalorder %s84, %s87
    %p96 = scmp.eq.s32.totalorder %s16, 3
    %p97 = por %p95, %p96
    %p98 = scmp.ne.s32.totalorder %s87, %s88
    %p99 = scmp.eq.s32.totalorder %s16, 0
    %p100 = por %p98, %p99
    %p101 = scmp.ne.s32.totalorder %s87, %s88
    %p102 = scmp.eq.s32.totalorder %s17, 3
    %p103 = por %p101, %p102
    %p105 = scmp.ne.s32.totalorder %s88, %s104
    %p106 = scmp.eq.s32.totalorder %s17, 0
    %p107 = por %p105, %p106
    %s108 = ssub.s32 %s18, %s30
    %p109 = scmp.eq.s32.totalorder %s108, 0
    %s111 = sadd.s32 %s110, 1
    %s112 = scalar_select %p109, %s110, %s111
    %p115 = pneg %p109
    %p116 = scmp.eq.s32.totalorder %s11, 3
    %p117 = por %p115, %p116
    %p118 = scmp.ne.s32.totalorder %s110, %s113
    %p119 = scmp.eq.s32.totalorder %s11, 0
    %p120 = por %p118, %p119
    %p121 = scmp.ne.s32.totalorder %s110, %s113
    %p122 = scmp.eq.s32.totalorder %s16, 3
    %p123 = por %p121, %p122
    %p124 = scmp.ne.s32.totalorder %s113, %s114
    %p125 = scmp.eq.s32.totalorder %s16, 0
    %p126 = por %p124, %p125
    %p127 = scmp.ne.s32.totalorder %s113, %s114
    %p128 = scmp.eq.s32.totalorder %s17, 3
    %p129 = por %p127, %p128
    %p131 = scmp.ne.s32.totalorder %s114, %s130
    %p132 = scmp.eq.s32.totalorder %s17, 0
    %p133 = por %p131, %p132
    %s134 = ssub.s32 %s18, %s30
    %p135 = scmp.eq.s32.totalorder %s134, 0
    %s137 = sadd.s32 %s136, 1
    %s138 = scalar_select %p135, %s136, %s137
    %p141 = pneg %p135
    %p142 = scmp.eq.s32.totalorder %s11, 3
    %p143 = por %p141, %p142
    %p144 = scmp.ne.s32.totalorder %s136, %s139
    %p145 = scmp.eq.s32.totalorder %s11, 0
    %p146 = por %p144, %p145
    %p147 = scmp.ne.s32.totalorder %s136, %s139
    %p148 = scmp.eq.s32.totalorder %s16, 3
    %p149 = por %p147, %p148
    %p150 = scmp.ne.s32.totalorder %s139, %s140
    %p151 = scmp.eq.s32.totalorder %s16, 0
    %p152 = por %p150, %p151
    %p153 = scmp.ne.s32.totalorder %s139, %s140
    %p154 = scmp.eq.s32.totalorder %s17, 3
    %p155 = por %p153, %p154
    %p157 = scmp.ne.s32.totalorder %s140, %s156
    %p158 = scmp.eq.s32.totalorder %s17, 0
    %p159 = por %p157, %p158
    %p160 = scmp.le.s32.totalorder 1, %s11
    %p161 = scmp.lt.s32.totalorder %s11, 5
    %p162 = pnand %p160, %p161
    %p163 = pneg %p162
    // Predicated region
    $region9: #{double_conv_block_forward.6} parent=5 // pred_check
      _
    $region10: #{double_conv_block_forward.6} parent=5 // pred_check_branch
      %165 = sbr.rel (%p162) target = $region12
    $region11: #{double_conv_block_forward.6} parent=5 // pred_region
      %s166 = ssub.s32 %s11, 1
      // Predicated region
      $region13: #{double_conv_block_forward.6} parent=11 // pred_check
        %p167 = pneg %p72
      $region14: #{double_conv_block_forward.6} parent=11 // pred_check_branch
        %169 = sbr.rel (%p167) target = $region16
      $region15: #{double_conv_block_forward.6} parent=11 // pred_region
        _
      $region16: #{double_conv_block_forward.6} parent=11 // pred_fallthru
        _
    $region12: #{double_conv_block_forward.6} parent=5 // pred_fallthru
      _
    %p170 = scmp.lt.s32.totalorder %s11, 4
    // Predicated region
    $region17: #{double_conv_block_forward.6} parent=5 // pred_check
      %p171 = pneg %p170
    $region18: #{double_conv_block_forward.6} parent=5 // pred_check_branch
      %173 = sbr.rel (%p171) target = $region20
    $region19: #{double_conv_block_forward.6} parent=5 // pred_region
      // Predicated region
      $region21: #{double_conv_block_forward.6} parent=19 // pred_check
        %p174 = pneg %p45
      $region22: #{double_conv_block_forward.6} parent=19 // pred_check_branch
        %176 = sbr.rel (%p174) target = $region24
      $region23: #{double_conv_block_forward.6} parent=19 // pred_region
        %s177 = smul.u32 32, %s19
        %p178 = scmp.lt.s32.totalorder %s18, 1
        %s179 = scalar_select %p178, %s18, 1
        %p180 = scmp.lt.s32.totalorder %s177, 63
        %s181 = scalar_select %p180, %s177, 63
        %s182 = smul.addr %s181, 7
        %s183 = smul.addr %s179, 448
        %s184 = sadd.s32 %s182, %s183
        %s185 = smul.addr %s184, 4
        %s186 = scalar_lea.vmem %s0, %s185
        %s187 = smul.u32 32, %s19
      $region24: #{double_conv_block_forward.6} parent=19 // pred_fallthru
        _
    $region20: #{double_conv_block_forward.6} parent=5 // pred_fallthru
      _
    %p188 = scmp.le.s32.totalorder 1, %s11
    %p189 = scmp.lt.s32.totalorder %s11, 5
    %p190 = pnand %p188, %p189
    %p191 = pneg %p190
    // Predicated region
    $region25: #{double_conv_block_forward.6} parent=5 // pred_check
      _
    $region26: #{double_conv_block_forward.6} parent=5 // pred_check_branch
      %193 = sbr.rel (%p190) target = $region28
    $region27: #{double_conv_block_forward.6} parent=5 // pred_region
      %s194 = ssub.s32 %s11, 1
      %s195 = smul.u32 32, %s21
      %p196 = scmp.lt.s32.totalorder %s20, 1
      %s197 = scalar_select %p196, %s20, 1
      %p198 = scmp.lt.s32.totalorder %s195, 63
      %s199 = scalar_select %p198, %s195, 63
      %s200 = smul.addr %s199, 7
      %s201 = smul.addr %s197, 448
      %s202 = sadd.s32 %s200, %s201
      %s203 = smul.addr %s202, 4
      %s204 = scalar_lea.vmem %s0, %s203
      %p205 = pneg %p51
      %p206 = pneg %p48
      %p207 = pneg %p72
      %p208 = pneg %p69
      %p209 = pneg %p100
      %p210 = pneg %p97
      %s211 = smul.u32 32, %s21
      %p212 = scmp.lt.s32.totalorder %s20, 1
      %s213 = scalar_select %p212, %s20, 1
      %p214 = scmp.lt.s32.totalorder %s211, 63
      %s215 = scalar_select %p214, %s211, 63
      %s216 = smul.addr %s213, 64
      %s217 = sadd.s32 %s215, %s216
      %s218 = smul.addr %s217, 4
      %s219 = scalar_lea.vmem %s2, %s218
      %p220 = pneg %p126
      %p221 = pneg %p123
      %p222 = scmp.lt.s32.totalorder %s20, 1
      %s223 = scalar_select %p222, %s20, 1
      %s224 = scalar_lea.vmem %s3, %s223
      %p225 = pneg %p152
      %p226 = pneg %p149
      %p227 = scmp.lt.s32.totalorder %s20, 1
      %s228 = scalar_select %p227, %s20, 1
      %s229 = scalar_lea.vmem %s4, %s228
      %s230 = smul.u32 32, %s21
      %p231 = scmp.lt.s32.totalorder %s20, 1
      %s232 = scalar_select %p231, %s20, 1
      %p233 = scmp.lt.s32.totalorder %s230, 63
      %s234 = scalar_select %p233, %s230, 63
      %s235 = smul.addr %s234, 7
      %s236 = smul.addr %s232, 448
      %s237 = sadd.s32 %s235, %s236
      %s238 = smul.addr %s237, 4
      %s239 = scalar_lea.vmem %s0, %s238
      %s240 = smul.u32 32, %s21
      %s241 = smul.u32 32, %s21
      %p242 = scmp.lt.s32.totalorder %s20, 1
      %s243 = scalar_select %p242, %s20, 1
      %p244 = scmp.lt.s32.totalorder %s241, 63
      %s245 = scalar_select %p244, %s241, 63
      %s246 = smul.addr %s243, 64
      %s247 = sadd.s32 %s245, %s246
      %s248 = smul.addr %s247, 4
      %s249 = scalar_lea.vmem %s2, %s248
      %s250 = smul.u32 32, %s21
      %p251 = scmp.lt.s32.totalorder %s20, 1
      %s252 = scalar_select %p251, %s20, 1
      %s253 = scalar_lea.vmem %s3, %s252
      %p254 = scmp.lt.s32.totalorder %s20, 1
      %s255 = scalar_select %p254, %s20, 1
      %s256 = scalar_lea.vmem %s4, %s255
      %p258 = scmp.eq.s32.totalorder %s21, 0
      // Predicated region
      $region29: #{double_conv_block_forward.6} parent=27 // pred_check
        %p259 = pneg %p258
      $region30: #{double_conv_block_forward.6} parent=27 // pred_check_branch
        %261 = sbr.rel (%p259) target = $region32
      $region31: #{double_conv_block_forward.6} parent=27 // pred_region
        %262 = vst [vmem:[%s253] sm:$0x1] 0.0
        %263 = vst [vmem:[%s256] sm:$0x1] 0.0
      $region32: #{double_conv_block_forward.6} parent=27 // pred_fallthru
        _
      %v264 = vld [vmem:[%s239] sm:$0xff]
      %v265 = vld [vmem:[%s239 + $0x8] sm:$0xff]
      %v266 = vld [vmem:[%s239 + $0x10] sm:$0xff]
      %v267 = vld [vmem:[%s239 + $0x18] sm:$0xf]
      %v268 = vld [vmem:[%s239 + $0x1c] sm:$0xff]
      %v269 = vld [vmem:[%s239 + $0x24] sm:$0xff]
      %v270 = vld [vmem:[%s239 + $0x2c] sm:$0xff]
      %v271 = vld [vmem:[%s239 + $0x34] sm:$0xf]
      %v272 = vld [vmem:[%s239 + $0x38] sm:$0xff]
      %v273 = vld [vmem:[%s239 + $0x40] sm:$0xff]
      %v274 = vld [vmem:[%s239 + $0x48] sm:$0xff]
      %v275 = vld [vmem:[%s239 + $0x50] sm:$0xf]
      %v276 = vld [vmem:[%s239 + $0x54] sm:$0xff]
      %v277 = vld [vmem:[%s239 + $0x5c] sm:$0xff]
      %v278 = vld [vmem:[%s239 + $0x64] sm:$0xff]
      %v279 = vld [vmem:[%s239 + $0x6c] sm:$0xf]
      %v280 = vld [vmem:[%s239 + $0x70] sm:$0xff]
      %v281 = vld [vmem:[%s239 + $0x78] sm:$0xff]
      %v282 = vld [vmem:[%s239 + $0x80] sm:$0xff]
      %v283 = vld [vmem:[%s239 + $0x88] sm:$0xf]
      %v284 = vld [vmem:[%s239 + $0x8c] sm:$0xff]
      %v285 = vld [vmem:[%s239 + $0x94] sm:$0xff]
      %v286 = vld [vmem:[%s239 + $0x9c] sm:$0xff]
      %v287 = vld [vmem:[%s239 + $0xa4] sm:$0xf]
      %v288 = vld [vmem:[%s239 + $0xa8] sm:$0xff]
      %v289 = vld [vmem:[%s239 + $0xb0] sm:$0xff]
      %v290 = vld [vmem:[%s239 + $0xb8] sm:$0xff]
      %v291 = vld [vmem:[%s239 + $0xc0] sm:$0xf]
      %v292 = vld [vmem:[%s239 + $0xc4] sm:$0xff]
      %v293 = vld [vmem:[%s239 + $0xcc] sm:$0xff]
      %v294 = vld [vmem:[%s239 + $0xd4] sm:$0xff]
      %v295 = vld [vmem:[%s239 + $0xdc] sm:$0xf]
      %v296 = vld [vmem:[%s239 + $0xe0] sm:$0xff]
      %v297 = vld [vmem:[%s239 + $0xe8] sm:$0xff]
      %v298 = vld [vmem:[%s239 + $0xf0] sm:$0xff]
      %v299 = vld [vmem:[%s239 + $0xf8] sm:$0xf]
      %v300 = vld [vmem:[%s239 + $0xfc] sm:$0xff]
      %v301 = vld [vmem:[%s239 + $0x104] sm:$0xff]
      %v302 = vld [vmem:[%s239 + $0x10c] sm:$0xff]
      %v303 = vld [vmem:[%s239 + $0x114] sm:$0xf]
      %v304 = vld [vmem:[%s239 + $0x118] sm:$0xff]
      %v305 = vld [vmem:[%s239 + $0x120] sm:$0xff]
      %v306 = vld [vmem:[%s239 + $0x128] sm:$0xff]
      %v307 = vld [vmem:[%s239 + $0x130] sm:$0xf]
      %v308 = vld [vmem:[%s239 + $0x134] sm:$0xff]
      %v309 = vld [vmem:[%s239 + $0x13c] sm:$0xff]
      %v310 = vld [vmem:[%s239 + $0x144] sm:$0xff]
      %v311 = vld [vmem:[%s239 + $0x14c] sm:$0xf]
      %v312 = vld [vmem:[%s239 + $0x150] sm:$0xff]
      %v313 = vld [vmem:[%s239 + $0x158] sm:$0xff]
      %v314 = vld [vmem:[%s239 + $0x160] sm:$0xff]
      %v315 = vld [vmem:[%s239 + $0x168] sm:$0xf]
      %v316 = vld [vmem:[%s239 + $0x16c] sm:$0xff]
      %v317 = vld [vmem:[%s239 + $0x174] sm:$0xff]
      %v318 = vld [vmem:[%s239 + $0x17c] sm:$0xff]
      %v319 = vld [vmem:[%s239 + $0x184] sm:$0xf]
      %v320 = vld [vmem:[%s239 + $0x188] sm:$0xff]
      %v321 = vld [vmem:[%s239 + $0x190] sm:$0xff]
      %v322 = vld [vmem:[%s239 + $0x198] sm:$0xff]
      %v323 = vld [vmem:[%s239 + $0x1a0] sm:$0xf]
      %v324 = vld [vmem:[%s239 + $0x1a4] sm:$0xff]
      %v325 = vld [vmem:[%s239 + $0x1ac] sm:$0xff]
      %v326 = vld [vmem:[%s239 + $0x1b4] sm:$0xff]
      %v327 = vld [vmem:[%s239 + $0x1bc] sm:$0xf]
      %v328 = vld [vmem:[%s239 + $0x1c0] sm:$0xff]
      %v329 = vld [vmem:[%s239 + $0x1c8] sm:$0xff]
      %v330 = vld [vmem:[%s239 + $0x1d0] sm:$0xff]
      %v331 = vld [vmem:[%s239 + $0x1d8] sm:$0xf]
      %v332 = vld [vmem:[%s239 + $0x1dc] sm:$0xff]
      %v333 = vld [vmem:[%s239 + $0x1e4] sm:$0xff]
      %v334 = vld [vmem:[%s239 + $0x1ec] sm:$0xff]
      %v335 = vld [vmem:[%s239 + $0x1f4] sm:$0xf]
      %v336 = vld [vmem:[%s239 + $0x1f8] sm:$0xff]
      %v337 = vld [vmem:[%s239 + $0x200] sm:$0xff]
      %v338 = vld [vmem:[%s239 + $0x208] sm:$0xff]
      %v339 = vld [vmem:[%s239 + $0x210] sm:$0xf]
      %v340 = vld [vmem:[%s239 + $0x214] sm:$0xff]
      %v341 = vld [vmem:[%s239 + $0x21c] sm:$0xff]
      %v342 = vld [vmem:[%s239 + $0x224] sm:$0xff]
      %v343 = vld [vmem:[%s239 + $0x22c] sm:$0xf]
      %v344 = vld [vmem:[%s239 + $0x230] sm:$0xff]
      %v345 = vld [vmem:[%s239 + $0x238] sm:$0xff]
      %v346 = vld [vmem:[%s239 + $0x240] sm:$0xff]
      %v347 = vld [vmem:[%s239 + $0x248] sm:$0xf]
      %v348 = vld [vmem:[%s239 + $0x24c] sm:$0xff]
      %v349 = vld [vmem:[%s239 + $0x254] sm:$0xff]
      %v350 = vld [vmem:[%s239 + $0x25c] sm:$0xff]
      %v351 = vld [vmem:[%s239 + $0x264] sm:$0xf]
      %v352 = vld [vmem:[%s239 + $0x268] sm:$0xff]
      %v353 = vld [vmem:[%s239 + $0x270] sm:$0xff]
      %v354 = vld [vmem:[%s239 + $0x278] sm:$0xff]
      %v355 = vld [vmem:[%s239 + $0x280] sm:$0xf]
      %v356 = vld [vmem:[%s239 + $0x284] sm:$0xff]
      %v357 = vld [vmem:[%s239 + $0x28c] sm:$0xff]
      %v358 = vld [vmem:[%s239 + $0x294] sm:$0xff]
      %v359 = vld [vmem:[%s239 + $0x29c] sm:$0xf]
      %v360 = vld [vmem:[%s239 + $0x2a0] sm:$0xff]
      %v361 = vld [vmem:[%s239 + $0x2a8] sm:$0xff]
      %v362 = vld [vmem:[%s239 + $0x2b0] sm:$0xff]
      %v363 = vld [vmem:[%s239 + $0x2b8] sm:$0xf]
      %v364 = vld [vmem:[%s239 + $0x2bc] sm:$0xff]
      %v365 = vld [vmem:[%s239 + $0x2c4] sm:$0xff]
      %v366 = vld [vmem:[%s239 + $0x2cc] sm:$0xff]
      %v367 = vld [vmem:[%s239 + $0x2d4] sm:$0xf]
      %v368 = vld [vmem:[%s239 + $0x2d8] sm:$0xff]
      %v369 = vld [vmem:[%s239 + $0x2e0] sm:$0xff]
      %v370 = vld [vmem:[%s239 + $0x2e8] sm:$0xff]
      %v371 = vld [vmem:[%s239 + $0x2f0] sm:$0xf]
      %v372 = vld [vmem:[%s239 + $0x2f4] sm:$0xff]
      %v373 = vld [vmem:[%s239 + $0x2fc] sm:$0xff]
      %v374 = vld [vmem:[%s239 + $0x304] sm:$0xff]
      %v375 = vld [vmem:[%s239 + $0x30c] sm:$0xf]
      %v376 = vld [vmem:[%s239 + $0x310] sm:$0xff]
      %v377 = vld [vmem:[%s239 + $0x318] sm:$0xff]
      %v378 = vld [vmem:[%s239 + $0x320] sm:$0xff]
      %v379 = vld [vmem:[%s239 + $0x328] sm:$0xf]
      %v380 = vld [vmem:[%s239 + $0x32c] sm:$0xff]
      %v381 = vld [vmem:[%s239 + $0x334] sm:$0xff]
      %v382 = vld [vmem:[%s239 + $0x33c] sm:$0xff]
      %v383 = vld [vmem:[%s239 + $0x344] sm:$0xf]
      %v384 = vld [vmem:[%s239 + $0x348] sm:$0xff]
      %v385 = vld [vmem:[%s239 + $0x350] sm:$0xff]
      %v386 = vld [vmem:[%s239 + $0x358] sm:$0xff]
      %v387 = vld [vmem:[%s239 + $0x360] sm:$0xf]
      %v388 = vld [vmem:[%s239 + $0x364] sm:$0xff]
      %v389 = vld [vmem:[%s239 + $0x36c] sm:$0xff]
      %v390 = vld [vmem:[%s239 + $0x374] sm:$0xff]
      %v391 = vld [vmem:[%s239 + $0x37c] sm:$0xf]
      %v392 = vld [vmem:[%s1] sm:$0xf]
      %v393 = vld [vmem:[%s1 + $0x4] sm:$0xf]
      %v394 = vld [vmem:[%s1 + $0x8] sm:$0xf]
      %v395 = vld [vmem:[%s1 + $0xc] sm:$0xf]
      %v396 = vld [vmem:[%s1 + $0x10] sm:$0xf]
      %v397 = vld [vmem:[%s1 + $0x14] sm:$0xf]
      %v398 = vld [vmem:[%s1 + $0x18] sm:$0xf]
      %v399 = vld [vmem:[%s1 + $0x1c] sm:$0xf]
      %v400 = vld [vmem:[%s1 + $0x20] sm:$0xf]
      %v401 = vld [vmem:[%s1 + $0x24] sm:$0xf]
      %v402 = vld [vmem:[%s1 + $0x28] sm:$0xf]
      %v403 = vld [vmem:[%s1 + $0x2c] sm:$0xf]
      %v404 = vld [vmem:[%s1 + $0x30] sm:$0xf]
      %v405 = vld [vmem:[%s1 + $0x34] sm:$0xf]
      %v406 = vld [vmem:[%s1 + $0x38] sm:$0xf]
      %v407 = vld [vmem:[%s1 + $0x3c] sm:$0xf]
      %v408 = vld [vmem:[%s1 + $0x40] sm:$0xf]
      %v409 = vld [vmem:[%s1 + $0x44] sm:$0xf]
      %v410 = vld [vmem:[%s1 + $0x48] sm:$0xf]
      %v411 = vld [vmem:[%s1 + $0x4c] sm:$0xf]
      %v412 = vld [vmem:[%s1 + $0x50] sm:$0xf]
      %v413 = vld [vmem:[%s1 + $0x54] sm:$0xf]
      %v414 = vld [vmem:[%s1 + $0x58] sm:$0xf]
      %v415 = vld [vmem:[%s1 + $0x5c] sm:$0xf]
      %v416 = vld [vmem:[%s1 + $0x60] sm:$0xf]
      %v417 = vld [vmem:[%s1 + $0x64] sm:$0xf]
      %v418 = vld [vmem:[%s1 + $0x68] sm:$0xf]
      %v419 = vld [vmem:[%s1 + $0x6c] sm:$0xf]
      %v420 = vld [vmem:[%s1 + $0x70] sm:$0xf]
      %v421 = vld [vmem:[%s1 + $0x74] sm:$0xf]
      %v422 = vld [vmem:[%s1 + $0x78] sm:$0xf]
      %v423 = vld [vmem:[%s1 + $0x7c] sm:$0xf]
      %v424 = vld [vmem:[%s1 + $0x80] sm:$0xf]
      %v425 = vld [vmem:[%s1 + $0x84] sm:$0xf]
      %v426 = vld [vmem:[%s1 + $0x88] sm:$0xf]
      %v427 = vld [vmem:[%s1 + $0x8c] sm:$0xf]
      %v428 = vld [vmem:[%s1 + $0x90] sm:$0xf]
      %v429 = vld [vmem:[%s1 + $0x94] sm:$0xf]
      %v430 = vld [vmem:[%s1 + $0x98] sm:$0xf]
      %v431 = vld [vmem:[%s1 + $0x9c] sm:$0xf]
      %v432 = vld [vmem:[%s1 + $0xa0] sm:$0xf]
      %v433 = vld [vmem:[%s1 + $0xa4] sm:$0xf]
      %v434 = vld [vmem:[%s1 + $0xa8] sm:$0xf]
      %v435 = vld [vmem:[%s1 + $0xac] sm:$0xf]
      %v436 = vld [vmem:[%s1 + $0xb0] sm:$0xf]
      %v437 = vld [vmem:[%s1 + $0xb4] sm:$0xf]
      %v438 = vld [vmem:[%s1 + $0xb8] sm:$0xf]
      %v439 = vld [vmem:[%s1 + $0xbc] sm:$0xf]
      %v440 = vld [vmem:[%s1 + $0xc0] sm:$0xf]
      %v441 = vld [vmem:[%s1 + $0xc4] sm:$0xf]
      %v442 = vld [vmem:[%s1 + $0xc8] sm:$0xf]
      %v443 = vld [vmem:[%s1 + $0xcc] sm:$0xf]
      %v444 = vld [vmem:[%s1 + $0xd0] sm:$0xf]
      %v445 = vld [vmem:[%s1 + $0xd4] sm:$0xf]
      %v446 = vld [vmem:[%s1 + $0xd8] sm:$0xf]
      %v447 = vld [vmem:[%s1 + $0xdc] sm:$0xf]
      %v448 = vld [vmem:[%s1 + $0xe0] sm:$0xf]
      %v449 = vld [vmem:[%s1 + $0xe4] sm:$0xf]
      %v450 = vld [vmem:[%s1 + $0xe8] sm:$0xf]
      %v451 = vld [vmem:[%s1 + $0xec] sm:$0xf]
      %v452 = vld [vmem:[%s1 + $0xf0] sm:$0xf]
      %v453 = vld [vmem:[%s1 + $0xf4] sm:$0xf]
      %v454 = vld [vmem:[%s1 + $0xf8] sm:$0xf]
      %v455 = vld [vmem:[%s1 + $0xfc] sm:$0xf]
      %v456 = vld [vmem:[%s1 + $0x100] sm:$0xf]
      %v457 = vld [vmem:[%s1 + $0x104] sm:$0xf]
      %v458 = vld [vmem:[%s1 + $0x108] sm:$0xf]
      %v459 = vld [vmem:[%s1 + $0x10c] sm:$0xf]
      %v460 = vld [vmem:[%s1 + $0x110] sm:$0xf]
      %v461 = vld [vmem:[%s1 + $0x114] sm:$0xf]
      %v462 = vld [vmem:[%s1 + $0x118] sm:$0xf]
      %v463 = vld [vmem:[%s1 + $0x11c] sm:$0xf]
      %v464 = vld [vmem:[%s1 + $0x120] sm:$0xf]
      %v465 = vld [vmem:[%s1 + $0x124] sm:$0xf]
      %v466 = vld [vmem:[%s1 + $0x128] sm:$0xf]
      %v467 = vld [vmem:[%s1 + $0x12c] sm:$0xf]
      %v468 = vld [vmem:[%s1 + $0x130] sm:$0xf]
      %v469 = vld [vmem:[%s1 + $0x134] sm:$0xf]
      %v470 = vld [vmem:[%s1 + $0x138] sm:$0xf]
      %v471 = vld [vmem:[%s1 + $0x13c] sm:$0xf]
      %v472 = vld [vmem:[%s1 + $0x140] sm:$0xf]
      %v473 = vld [vmem:[%s1 + $0x144] sm:$0xf]
      %v474 = vld [vmem:[%s1 + $0x148] sm:$0xf]
      %v475 = vld [vmem:[%s1 + $0x14c] sm:$0xf]
      %v476 = vld [vmem:[%s1 + $0x150] sm:$0xf]
      %v477 = vld [vmem:[%s1 + $0x154] sm:$0xf]
      %v478 = vld [vmem:[%s1 + $0x158] sm:$0xf]
      %v479 = vld [vmem:[%s1 + $0x15c] sm:$0xf]
      %v480 = vld [vmem:[%s1 + $0x160] sm:$0xf]
      %v481 = vld [vmem:[%s1 + $0x164] sm:$0xf]
      %v482 = vld [vmem:[%s1 + $0x168] sm:$0xf]
      %v483 = vld [vmem:[%s1 + $0x16c] sm:$0xf]
      %v484 = vld [vmem:[%s1 + $0x170] sm:$0xf]
      %v485 = vld [vmem:[%s1 + $0x174] sm:$0xf]
      %v486 = vld [vmem:[%s1 + $0x178] sm:$0xf]
      %v487 = vld [vmem:[%s1 + $0x17c] sm:$0xf]
      %v488 = vld [vmem:[%s1 + $0x180] sm:$0xf]
      %v489 = vld [vmem:[%s1 + $0x184] sm:$0xf]
      %v490 = vld [vmem:[%s1 + $0x188] sm:$0xf]
      %v491 = vld [vmem:[%s1 + $0x18c] sm:$0xf]
      %v492 = vld [vmem:[%s1 + $0x190] sm:$0xf]
      %v493 = vld [vmem:[%s1 + $0x194] sm:$0xf]
      %v494 = vld [vmem:[%s1 + $0x198] sm:$0xf]
      %v495 = vld [vmem:[%s1 + $0x19c] sm:$0xf]
      %v496 = vld [vmem:[%s1 + $0x1a0] sm:$0xf]
      %v497 = vld [vmem:[%s1 + $0x1a4] sm:$0xf]
      %v498 = vld [vmem:[%s1 + $0x1a8] sm:$0xf]
      %v499 = vld [vmem:[%s1 + $0x1ac] sm:$0xf]
      %v628 = vunpack.c.l.b16 %v264
      %v629 = vunpack.c.h.b16 %v264
      %v630 = vunpack.c.l.b16 %v265
      %v631 = vunpack.c.h.b16 %v265
      %v632 = vunpack.c.l.b16 %v266
      %v633 = vunpack.c.h.b16 %v266
      %v634 = vunpack.c.l.b16 %v267
      %v635 = vunpack.c.l.b16 %v268
      %v636 = vunpack.c.h.b16 %v268
      %v637 = vunpack.c.l.b16 %v269
      %v638 = vunpack.c.h.b16 %v269
      %v639 = vunpack.c.l.b16 %v270
      %v640 = vunpack.c.h.b16 %v270
      %v641 = vunpack.c.l.b16 %v271
      %v642 = vunpack.c.l.b16 %v272
      %v643 = vunpack.c.h.b16 %v272
      %v644 = vunpack.c.l.b16 %v273
      %v645 = vunpack.c.h.b16 %v273
      %v646 = vunpack.c.l.b16 %v274
      %v647 = vunpack.c.h.b16 %v274
      %v648 = vunpack.c.l.b16 %v275
      %v649 = vunpack.c.l.b16 %v276
      %v650 = vunpack.c.h.b16 %v276
      %v651 = vunpack.c.l.b16 %v277
      %v652 = vunpack.c.h.b16 %v277
      %v653 = vunpack.c.l.b16 %v278
      %v654 = vunpack.c.h.b16 %v278
      %v655 = vunpack.c.l.b16 %v279
      %v656 = vunpack.c.l.b16 %v280
      %v657 = vunpack.c.h.b16 %v280
      %v658 = vunpack.c.l.b16 %v281
      %v659 = vunpack.c.h.b16 %v281
      %v660 = vunpack.c.l.b16 %v282
      %v661 = vunpack.c.h.b16 %v282
      %v662 = vunpack.c.l.b16 %v283
      %v663 = vunpack.c.l.b16 %v284
      %v664 = vunpack.c.h.b16 %v284
      %v665 = vunpack.c.l.b16 %v285
      %v666 = vunpack.c.h.b16 %v285
      %v667 = vunpack.c.l.b16 %v286
      %v668 = vunpack.c.h.b16 %v286
      %v669 = vunpack.c.l.b16 %v287
      %v670 = vunpack.c.l.b16 %v288
      %v671 = vunpack.c.h.b16 %v288
      %v672 = vunpack.c.l.b16 %v289
      %v673 = vunpack.c.h.b16 %v289
      %v674 = vunpack.c.l.b16 %v290
      %v675 = vunpack.c.h.b16 %v290
      %v676 = vunpack.c.l.b16 %v291
      %v677 = vunpack.c.l.b16 %v292
      %v678 = vunpack.c.h.b16 %v292
      %v679 = vunpack.c.l.b16 %v293
      %v680 = vunpack.c.h.b16 %v293
      %v681 = vunpack.c.l.b16 %v294
      %v682 = vunpack.c.h.b16 %v294
      %v683 = vunpack.c.l.b16 %v295
      %v684 = vunpack.c.l.b16 %v296
      %v685 = vunpack.c.h.b16 %v296
      %v686 = vunpack.c.l.b16 %v297
      %v687 = vunpack.c.h.b16 %v297
      %v688 = vunpack.c.l.b16 %v298
      %v689 = vunpack.c.h.b16 %v298
      %v690 = vunpack.c.l.b16 %v299
      %v691 = vunpack.c.l.b16 %v300
      %v692 = vunpack.c.h.b16 %v300
      %v693 = vunpack.c.l.b16 %v301
      %v694 = vunpack.c.h.b16 %v301
      %v695 = vunpack.c.l.b16 %v302
      %v696 = vunpack.c.h.b16 %v302
      %v697 = vunpack.c.l.b16 %v303
      %v698 = vunpack.c.l.b16 %v304
      %v699 = vunpack.c.h.b16 %v304
      %v700 = vunpack.c.l.b16 %v305
      %v701 = vunpack.c.h.b16 %v305
      %v702 = vunpack.c.l.b16 %v306
      %v703 = vunpack.c.h.b16 %v306
      %v704 = vunpack.c.l.b16 %v307
      %v705 = vunpack.c.l.b16 %v308
      %v706 = vunpack.c.h.b16 %v308
      %v707 = vunpack.c.l.b16 %v309
      %v708 = vunpack.c.h.b16 %v309
      %v709 = vunpack.c.l.b16 %v310
      %v710 = vunpack.c.h.b16 %v310
      %v711 = vunpack.c.l.b16 %v311
      %v712 = vunpack.c.l.b16 %v312
      %v713 = vunpack.c.h.b16 %v312
      %v714 = vunpack.c.l.b16 %v313
      %v715 = vunpack.c.h.b16 %v313
      %v716 = vunpack.c.l.b16 %v314
      %v717 = vunpack.c.h.b16 %v314
      %v718 = vunpack.c.l.b16 %v315
      %v719 = vunpack.c.l.b16 %v316
      %v720 = vunpack.c.h.b16 %v316
      %v721 = vunpack.c.l.b16 %v317
      %v722 = vunpack.c.h.b16 %v317
      %v723 = vunpack.c.l.b16 %v318
      %v724 = vunpack.c.h.b16 %v318
      %v725 = vunpack.c.l.b16 %v319
      %v726 = vunpack.c.l.b16 %v320
      %v727 = vunpack.c.h.b16 %v320
      %v728 = vunpack.c.l.b16 %v321
      %v729 = vunpack.c.h.b16 %v321
      %v730 = vunpack.c.l.b16 %v322
      %v731 = vunpack.c.h.b16 %v322
      %v732 = vunpack.c.l.b16 %v323
      %v733 = vunpack.c.l.b16 %v324
      %v734 = vunpack.c.h.b16 %v324
      %v735 = vunpack.c.l.b16 %v325
      %v736 = vunpack.c.h.b16 %v325
      %v737 = vunpack.c.l.b16 %v326
      %v738 = vunpack.c.h.b16 %v326
      %v739 = vunpack.c.l.b16 %v327
      %v740 = vunpack.c.l.b16 %v328
      %v741 = vunpack.c.h.b16 %v328
      %v742 = vunpack.c.l.b16 %v329
      %v743 = vunpack.c.h.b16 %v329
      %v744 = vunpack.c.l.b16 %v330
      %v745 = vunpack.c.h.b16 %v330
      %v746 = vunpack.c.l.b16 %v331
      %v747 = vunpack.c.l.b16 %v332
      %v748 = vunpack.c.h.b16 %v332
      %v749 = vunpack.c.l.b16 %v333
      %v750 = vunpack.c.h.b16 %v333
      %v751 = vunpack.c.l.b16 %v334
      %v752 = vunpack.c.h.b16 %v334
      %v753 = vunpack.c.l.b16 %v335
      %v754 = vunpack.c.l.b16 %v336
      %v755 = vunpack.c.h.b16 %v336
      %v756 = vunpack.c.l.b16 %v337
      %v757 = vunpack.c.h.b16 %v337
      %v758 = vunpack.c.l.b16 %v338
      %v759 = vunpack.c.h.b16 %v338
      %v760 = vunpack.c.l.b16 %v339
      %v761 = vunpack.c.l.b16 %v340
      %v762 = vunpack.c.h.b16 %v340
      %v763 = vunpack.c.l.b16 %v341
      %v764 = vunpack.c.h.b16 %v341
      %v765 = vunpack.c.l.b16 %v342
      %v766 = vunpack.c.h.b16 %v342
      %v767 = vunpack.c.l.b16 %v343
      %v768 = vunpack.c.l.b16 %v344
      %v769 = vunpack.c.h.b16 %v344
      %v770 = vunpack.c.l.b16 %v345
      %v771 = vunpack.c.h.b16 %v345
      %v772 = vunpack.c.l.b16 %v346
      %v773 = vunpack.c.h.b16 %v346
      %v774 = vunpack.c.l.b16 %v347
      %v775 = vunpack.c.l.b16 %v348
      %v776 = vunpack.c.h.b16 %v348
      %v777 = vunpack.c.l.b16 %v349
      %v778 = vunpack.c.h.b16 %v349
      %v779 = vunpack.c.l.b16 %v350
      %v780 = vunpack.c.h.b16 %v350
      %v781 = vunpack.c.l.b16 %v351
      %v782 = vunpack.c.l.b16 %v352
      %v783 = vunpack.c.h.b16 %v352
      %v784 = vunpack.c.l.b16 %v353
      %v785 = vunpack.c.h.b16 %v353
      %v786 = vunpack.c.l.b16 %v354
      %v787 = vunpack.c.h.b16 %v354
      %v788 = vunpack.c.l.b16 %v355
      %v789 = vunpack.c.l.b16 %v356
      %v790 = vunpack.c.h.b16 %v356
      %v791 = vunpack.c.l.b16 %v357
      %v792 = vunpack.c.h.b16 %v357
      %v793 = vunpack.c.l.b16 %v358
      %v794 = vunpack.c.h.b16 %v358
      %v795 = vunpack.c.l.b16 %v359
      %v796 = vunpack.c.l.b16 %v360
      %v797 = vunpack.c.h.b16 %v360
      %v798 = vunpack.c.l.b16 %v361
      %v799 = vunpack.c.h.b16 %v361
      %v800 = vunpack.c.l.b16 %v362
      %v801 = vunpack.c.h.b16 %v362
      %v802 = vunpack.c.l.b16 %v363
      %v803 = vunpack.c.l.b16 %v364
      %v804 = vunpack.c.h.b16 %v364
      %v805 = vunpack.c.l.b16 %v365
      %v806 = vunpack.c.h.b16 %v365
      %v807 = vunpack.c.l.b16 %v366
      %v808 = vunpack.c.h.b16 %v366
      %v809 = vunpack.c.l.b16 %v367
      %v810 = vunpack.c.l.b16 %v368
      %v811 = vunpack.c.h.b16 %v368
      %v812 = vunpack.c.l.b16 %v369
      %v813 = vunpack.c.h.b16 %v369
      %v814 = vunpack.c.l.b16 %v370
      %v815 = vunpack.c.h.b16 %v370
      %v816 = vunpack.c.l.b16 %v371
      %v817 = vunpack.c.l.b16 %v372
      %v818 = vunpack.c.h.b16 %v372
      %v819 = vunpack.c.l.b16 %v373
      %v820 = vunpack.c.h.b16 %v373
      %v821 = vunpack.c.l.b16 %v374
      %v822 = vunpack.c.h.b16 %v374
      %v823 = vunpack.c.l.b16 %v375
      %v824 = vunpack.c.l.b16 %v376
      %v825 = vunpack.c.h.b16 %v376
      %v826 = vunpack.c.l.b16 %v377
      %v827 = vunpack.c.h.b16 %v377
      %v828 = vunpack.c.l.b16 %v378
      %v829 = vunpack.c.h.b16 %v378
      %v830 = vunpack.c.l.b16 %v379
      %v831 = vunpack.c.l.b16 %v380
      %v832 = vunpack.c.h.b16 %v380
      %v833 = vunpack.c.l.b16 %v381
      %v834 = vunpack.c.h.b16 %v381
      %v835 = vunpack.c.l.b16 %v382
      %v836 = vunpack.c.h.b16 %v382
      %v837 = vunpack.c.l.b16 %v383
      %v838 = vunpack.c.l.b16 %v384
      %v839 = vunpack.c.h.b16 %v384
      %v840 = vunpack.c.l.b16 %v385
      %v841 = vunpack.c.h.b16 %v385
      %v842 = vunpack.c.l.b16 %v386
      %v843 = vunpack.c.h.b16 %v386
      %v844 = vunpack.c.l.b16 %v387
      %v845 = vunpack.c.l.b16 %v388
      %v846 = vunpack.c.h.b16 %v388
      %v847 = vunpack.c.l.b16 %v389
      %v848 = vunpack.c.h.b16 %v389
      %v849 = vunpack.c.l.b16 %v390
      %v850 = vunpack.c.h.b16 %v390
      %v851 = vunpack.c.l.b16 %v391
      %v852 = vpack.c.b16 %v635, %v628
      %v853 = vpack.c.b16 %v636, %v629
      %v854 = vpack.c.b16 %v637, %v630
      %v855 = vpack.c.b16 %v638, %v631
      %v856 = vpack.c.b16 %v639, %v632
      %v857 = vpack.c.b16 %v640, %v633
      %v858 = vpack.c.b16 %v641, %v634
      %v859 = vpack.c.b16 %v649, %v642
      %v860 = vpack.c.b16 %v650, %v643
      %v861 = vpack.c.b16 %v651, %v644
      %v862 = vpack.c.b16 %v652, %v645
      %v863 = vpack.c.b16 %v653, %v646
      %v864 = vpack.c.b16 %v654, %v647
      %v865 = vpack.c.b16 %v655, %v648
      %v866 = vpack.c.b16 %v663, %v656
      %v867 = vpack.c.b16 %v664, %v657
      %v868 = vpack.c.b16 %v665, %v658
      %v869 = vpack.c.b16 %v666, %v659
      %v870 = vpack.c.b16 %v667, %v660
      %v871 = vpack.c.b16 %v668, %v661
      %v872 = vpack.c.b16 %v669, %v662
      %v873 = vpack.c.b16 %v677, %v670
      %v874 = vpack.c.b16 %v678, %v671
      %v875 = vpack.c.b16 %v679, %v672
      %v876 = vpack.c.b16 %v680, %v673
      %v877 = vpack.c.b16 %v681, %v674
      %v878 = vpack.c.b16 %v682, %v675
      %v879 = vpack.c.b16 %v683, %v676
      %v880 = vpack.c.b16 %v691, %v684
      %v881 = vpack.c.b16 %v692, %v685
      %v882 = vpack.c.b16 %v693, %v686
      %v883 = vpack.c.b16 %v694, %v687
      %v884 = vpack.c.b16 %v695, %v688
      %v885 = vpack.c.b16 %v696, %v689
      %v886 = vpack.c.b16 %v697, %v690
      %v887 = vpack.c.b16 %v705, %v698
      %v888 = vpack.c.b16 %v706, %v699
      %v889 = vpack.c.b16 %v707, %v700
      %v890 = vpack.c.b16 %v708, %v701
      %v891 = vpack.c.b16 %v709, %v702
      %v892 = vpack.c.b16 %v710, %v703
      %v893 = vpack.c.b16 %v711, %v704
      %v894 = vpack.c.b16 %v719, %v712
      %v895 = vpack.c.b16 %v720, %v713
      %v896 = vpack.c.b16 %v721, %v714
      %v897 = vpack.c.b16 %v722, %v715
      %v898 = vpack.c.b16 %v723, %v716
      %v899 = vpack.c.b16 %v724, %v717
      %v900 = vpack.c.b16 %v725, %v718
      %v901 = vpack.c.b16 %v733, %v726
      %v902 = vpack.c.b16 %v734, %v727
      %v903 = vpack.c.b16 %v735, %v728
      %v904 = vpack.c.b16 %v736, %v729
      %v905 = vpack.c.b16 %v737, %v730
      %v906 = vpack.c.b16 %v738, %v731
      %v907 = vpack.c.b16 %v739, %v732
      %v908 = vpack.c.b16 %v747, %v740
      %v909 = vpack.c.b16 %v748, %v741
      %v910 = vpack.c.b16 %v749, %v742
      %v911 = vpack.c.b16 %v750, %v743
      %v912 = vpack.c.b16 %v751, %v744
      %v913 = vpack.c.b16 %v752, %v745
      %v914 = vpack.c.b16 %v753, %v746
      %v915 = vpack.c.b16 %v761, %v754
      %v916 = vpack.c.b16 %v762, %v755
      %v917 = vpack.c.b16 %v763, %v756
      %v918 = vpack.c.b16 %v764, %v757
      %v919 = vpack.c.b16 %v765, %v758
      %v920 = vpack.c.b16 %v766, %v759
      %v921 = vpack.c.b16 %v767, %v760
      %v922 = vpack.c.b16 %v775, %v768
      %v923 = vpack.c.b16 %v776, %v769
      %v924 = vpack.c.b16 %v777, %v770
      %v925 = vpack.c.b16 %v778, %v771
      %v926 = vpack.c.b16 %v779, %v772
      %v927 = vpack.c.b16 %v780, %v773
      %v928 = vpack.c.b16 %v781, %v774
      %v929 = vpack.c.b16 %v789, %v782
      %v930 = vpack.c.b16 %v790, %v783
      %v931 = vpack.c.b16 %v791, %v784
      %v932 = vpack.c.b16 %v792, %v785
      %v933 = vpack.c.b16 %v793, %v786
      %v934 = vpack.c.b16 %v794, %v787
      %v935 = vpack.c.b16 %v795, %v788
      %v936 = vpack.c.b16 %v803, %v796
      %v937 = vpack.c.b16 %v804, %v797
      %v938 = vpack.c.b16 %v805, %v798
      %v939 = vpack.c.b16 %v806, %v799
      %v940 = vpack.c.b16 %v807, %v800
      %v941 = vpack.c.b16 %v808, %v801
      %v942 = vpack.c.b16 %v809, %v802
      %v943 = vpack.c.b16 %v817, %v810
      %v944 = vpack.c.b16 %v818, %v811
      %v945 = vpack.c.b16 %v819, %v812
      %v946 = vpack.c.b16 %v820, %v813
      %v947 = vpack.c.b16 %v821, %v814
      %v948 = vpack.c.b16 %v822, %v815
      %v949 = vpack.c.b16 %v823, %v816
      %v950 = vpack.c.b16 %v831, %v824
      %v951 = vpack.c.b16 %v832, %v825
      %v952 = vpack.c.b16 %v833, %v826
      %v953 = vpack.c.b16 %v834, %v827
      %v954 = vpack.c.b16 %v835, %v828
      %v955 = vpack.c.b16 %v836, %v829
      %v956 = vpack.c.b16 %v837, %v830
      %v957 = vpack.c.b16 %v845, %v838
      %v958 = vpack.c.b16 %v846, %v839
      %v959 = vpack.c.b16 %v847, %v840
      %v960 = vpack.c.b16 %v848, %v841
      %v961 = vpack.c.b16 %v849, %v842
      %v962 = vpack.c.b16 %v850, %v843
      %v963 = vpack.c.b16 %v851, %v844
      %v1168 = vunpack.c.l.b16 %v392
      %v1169 = vunpack.c.l.b16 %v393
      %v1170 = vunpack.c.l.b16 %v394
      %v1171 = vunpack.c.l.b16 %v395
      %v1172 = vunpack.c.l.b16 %v396
      %v1173 = vunpack.c.l.b16 %v397
      %v1174 = vunpack.c.l.b16 %v398
      %v1175 = vunpack.c.l.b16 %v399
      %v1176 = vunpack.c.l.b16 %v400
      %v1177 = vunpack.c.l.b16 %v401
      %v1178 = vunpack.c.l.b16 %v402
      %v1179 = vunpack.c.l.b16 %v403
      %v1180 = vunpack.c.l.b16 %v404
      %v1181 = vunpack.c.l.b16 %v405
      %v1182 = vunpack.c.l.b16 %v406
      %v1183 = vunpack.c.l.b16 %v407
      %v1184 = vunpack.c.l.b16 %v408
      %v1185 = vunpack.c.l.b16 %v409
      %v1186 = vunpack.c.l.b16 %v410
      %v1187 = vunpack.c.l.b16 %v411
      %v1188 = vunpack.c.l.b16 %v412
      %v1189 = vunpack.c.l.b16 %v413
      %v1190 = vunpack.c.l.b16 %v414
      %v1191 = vunpack.c.l.b16 %v415
      %v1192 = vunpack.c.l.b16 %v416
      %v1193 = vunpack.c.l.b16 %v417
      %v1194 = vunpack.c.l.b16 %v418
      %v1195 = vunpack.c.l.b16 %v419
      %v1196 = vunpack.c.l.b16 %v420
      %v1197 = vunpack.c.l.b16 %v421
      %v1198 = vunpack.c.l.b16 %v422
      %v1199 = vunpack.c.l.b16 %v423
      %v1200 = vunpack.c.l.b16 %v424
      %v1201 = vunpack.c.l.b16 %v425
      %v1202 = vunpack.c.l.b16 %v426
      %v1203 = vunpack.c.l.b16 %v427
      %v1204 = vunpack.c.l.b16 %v428
      %v1205 = vunpack.c.l.b16 %v429
      %v1206 = vunpack.c.l.b16 %v430
      %v1207 = vunpack.c.l.b16 %v431
      %v1208 = vunpack.c.l.b16 %v432
      %v1209 = vunpack.c.l.b16 %v433
      %v1210 = vunpack.c.l.b16 %v434
      %v1211 = vunpack.c.l.b16 %v435
      %v1212 = vunpack.c.l.b16 %v436
      %v1213 = vunpack.c.l.b16 %v437
      %v1214 = vunpack.c.l.b16 %v438
      %v1215 = vunpack.c.l.b16 %v439
      %v1216 = vunpack.c.l.b16 %v440
      %v1217 = vunpack.c.l.b16 %v441
      %v1218 = vunpack.c.l.b16 %v442
      %v1219 = vunpack.c.l.b16 %v443
      %v1220 = vunpack.c.l.b16 %v444
      %v1221 = vunpack.c.l.b16 %v445
      %v1222 = vunpack.c.l.b16 %v446
      %v1223 = vunpack.c.l.b16 %v447
      %v1224 = vunpack.c.l.b16 %v448
      %v1225 = vunpack.c.l.b16 %v449
      %v1226 = vunpack.c.l.b16 %v450
      %v1227 = vunpack.c.l.b16 %v451
      %v1228 = vunpack.c.l.b16 %v452
      %v1229 = vunpack.c.l.b16 %v453
      %v1230 = vunpack.c.l.b16 %v454
      %v1231 = vunpack.c.l.b16 %v455
      %v1232 = vunpack.c.l.b16 %v456
      %v1233 = vunpack.c.l.b16 %v457
      %v1234 = vunpack.c.l.b16 %v458
      %v1235 = vunpack.c.l.b16 %v459
      %v1236 = vunpack.c.l.b16 %v460
      %v1237 = vunpack.c.l.b16 %v461
      %v1238 = vunpack.c.l.b16 %v462
      %v1239 = vunpack.c.l.b16 %v463
      %v1240 = vunpack.c.l.b16 %v464
      %v1241 = vunpack.c.l.b16 %v465
      %v1242 = vunpack.c.l.b16 %v466
      %v1243 = vunpack.c.l.b16 %v467
      %v1244 = vunpack.c.l.b16 %v468
      %v1245 = vunpack.c.l.b16 %v469
      %v1246 = vunpack.c.l.b16 %v470
      %v1247 = vunpack.c.l.b16 %v471
      %v1248 = vunpack.c.l.b16 %v472
      %v1249 = vunpack.c.l.b16 %v473
      %v1250 = vunpack.c.l.b16 %v474
      %v1251 = vunpack.c.l.b16 %v475
      %v1252 = vunpack.c.l.b16 %v476
      %v1253 = vunpack.c.l.b16 %v477
      %v1254 = vunpack.c.l.b16 %v478
      %v1255 = vunpack.c.l.b16 %v479
      %v1256 = vunpack.c.l.b16 %v480
      %v1257 = vunpack.c.l.b16 %v481
      %v1258 = vunpack.c.l.b16 %v482
      %v1259 = vunpack.c.l.b16 %v483
      %v1260 = vunpack.c.l.b16 %v484
      %v1261 = vunpack.c.l.b16 %v485
      %v1262 = vunpack.c.l.b16 %v486
      %v1263 = vunpack.c.l.b16 %v487
      %v1264 = vunpack.c.l.b16 %v488
      %v1265 = vunpack.c.l.b16 %v489
      %v1266 = vunpack.c.l.b16 %v490
      %v1267 = vunpack.c.l.b16 %v491
      %v1268 = vunpack.c.l.b16 %v492
      %v1269 = vunpack.c.l.b16 %v493
      %v1270 = vunpack.c.l.b16 %v494
      %v1271 = vunpack.c.l.b16 %v495
      %v1272 = vunpack.c.l.b16 %v496
      %v1273 = vunpack.c.l.b16 %v497
      %v1274 = vunpack.c.l.b16 %v498
      %v1275 = vunpack.c.l.b16 %v499
      %v1276 = vpack.c.b16 %v1169, %v1168
      %v1277 = vpack.c.b16 %v1171, %v1170
      %v1278 = vpack.c.b16 %v1173, %v1172
      %v1279 = vpack.c.b16 %v1175, %v1174
      %v1280 = vpack.c.b16 %v1177, %v1176
      %v1281 = vpack.c.b16 %v1179, %v1178
      %v1282 = vpack.c.b16 %v1181, %v1180
      %v1283 = vpack.c.b16 %v1183, %v1182
      %v1284 = vpack.c.b16 %v1185, %v1184
      %v1285 = vpack.c.b16 %v1187, %v1186
      %v1286 = vpack.c.b16 %v1189, %v1188
      %v1287 = vpack.c.b16 %v1191, %v1190
      %v1288 = vpack.c.b16 %v1193, %v1192
      %v1289 = vpack.c.b16 %v1195, %v1194
      %v1290 = vpack.c.b16 %v1197, %v1196
      %v1291 = vpack.c.b16 %v1199, %v1198
      %v1292 = vpack.c.b16 %v1201, %v1200
      %v1293 = vpack.c.b16 %v1203, %v1202
      %v1294 = vpack.c.b16 %v1205, %v1204
      %v1295 = vpack.c.b16 %v1207, %v1206
      %v1296 = vpack.c.b16 %v1209, %v1208
      %v1297 = vpack.c.b16 %v1211, %v1210
      %v1298 = vpack.c.b16 %v1213, %v1212
      %v1299 = vpack.c.b16 %v1215, %v1214
      %v1300 = vpack.c.b16 %v1217, %v1216
      %v1301 = vpack.c.b16 %v1219, %v1218
      %v1302 = vpack.c.b16 %v1221, %v1220
      %v1303 = vpack.c.b16 %v1223, %v1222
      %v1304 = vpack.c.b16 %v1225, %v1224
      %v1305 = vpack.c.b16 %v1227, %v1226
      %v1306 = vpack.c.b16 %v1229, %v1228
      %v1307 = vpack.c.b16 %v1231, %v1230
      %v1308 = vpack.c.b16 %v1233, %v1232
      %v1309 = vpack.c.b16 %v1235, %v1234
      %v1310 = vpack.c.b16 %v1237, %v1236
      %v1311 = vpack.c.b16 %v1239, %v1238
      %v1312 = vpack.c.b16 %v1241, %v1240
      %v1313 = vpack.c.b16 %v1243, %v1242
      %v1314 = vpack.c.b16 %v1245, %v1244
      %v1315 = vpack.c.b16 %v1247, %v1246
      %v1316 = vpack.c.b16 %v1249, %v1248
      %v1317 = vpack.c.b16 %v1251, %v1250
      %v1318 = vpack.c.b16 %v1253, %v1252
      %v1319 = vpack.c.b16 %v1255, %v1254
      %v1320 = vpack.c.b16 %v1257, %v1256
      %v1321 = vpack.c.b16 %v1259, %v1258
      %v1322 = vpack.c.b16 %v1261, %v1260
      %v1323 = vpack.c.b16 %v1263, %v1262
      %v1324 = vpack.c.b16 %v1265, %v1264
      %v1325 = vpack.c.b16 %v1267, %v1266
      %v1326 = vpack.c.b16 %v1269, %v1268
      %v1327 = vpack.c.b16 %v1271, %v1270
      %v1328 = vpack.c.b16 %v1273, %v1272
      %v1329 = vpack.c.b16 %v1275, %v1274
      %vm1384 = vcmask 785408
      %v1386 = vsel %vm1384, %v858, 0
      %v1389 = vsel %vm1384, %v865, 0
      %v1392 = vsel %vm1384, %v872, 0
      %v1395 = vsel %vm1384, %v879, 0
      %v1398 = vsel %vm1384, %v886, 0
      %v1401 = vsel %vm1384, %v893, 0
      %v1404 = vsel %vm1384, %v900, 0
      %v1407 = vsel %vm1384, %v907, 0
      %v1410 = vsel %vm1384, %v914, 0
      %v1413 = vsel %vm1384, %v921, 0
      %v1416 = vsel %vm1384, %v928, 0
      %v1419 = vsel %vm1384, %v935, 0
      %v1422 = vsel %vm1384, %v942, 0
      %v1425 = vsel %vm1384, %v949, 0
      %v1428 = vsel %vm1384, %v956, 0
      %v1431 = vsel %vm1384, %v963, 0
      %1433 = vmatpush.bf16.msra.mxu0 %v1283
      %1434 = vmatpush.bf16.msra.mxu0 %v1282
      %1435 = vmatpush.bf16.msra.mxu0 %v1281
      %1436 = vmatpush.bf16.msra.mxu0 %v1280
      %1437 = vmatpush.bf16.msra.mxu0 %v1279
      %1438 = vmatpush.bf16.msra.mxu0 %v1278
      %1439 = vmatpush.bf16.msra.mxu0 %v1277
      %1440 = vmatpush.bf16.msra.mxu0 %v1276
      %1441 = vmatmul.bf16.gmra.mxu0 %v852
      %v1442 = vpop.f32.mrf.mxu0
      %v1443 = vadd.f32 0.0, %v1442
      %v1444 = vpop.f32.mrf.mxu0
      %v1445 = vadd.f32 0.0, %v1444
      %1446 = vmatmul.bf16.gmra.mxu0 %v859
      %v1447 = vpop.f32.mrf.mxu0
      %v1448 = vadd.f32 0.0, %v1447
      %v1449 = vpop.f32.mrf.mxu0
      %v1450 = vadd.f32 0.0, %v1449
      %1451 = vmatmul.bf16.gmra.mxu0 %v866
      %v1452 = vpop.f32.mrf.mxu0
      %v1453 = vadd.f32 0.0, %v1452
      %v1454 = vpop.f32.mrf.mxu0
      %v1455 = vadd.f32 0.0, %v1454
      %1456 = vmatmul.bf16.gmra.mxu0 %v873
      %v1457 = vpop.f32.mrf.mxu0
      %v1458 = vadd.f32 0.0, %v1457
      %v1459 = vpop.f32.mrf.mxu0
      %v1460 = vadd.f32 0.0, %v1459
      %1461 = vmatmul.bf16.gmra.mxu0 %v880
      %v1462 = vpop.f32.mrf.mxu0
      %v1463 = vadd.f32 0.0, %v1462
      %v1464 = vpop.f32.mrf.mxu0
      %v1465 = vadd.f32 0.0, %v1464
      %1466 = vmatmul.bf16.gmra.mxu0 %v887
      %v1467 = vpop.f32.mrf.mxu0
      %v1468 = vadd.f32 0.0, %v1467
      %v1469 = vpop.f32.mrf.mxu0
      %v1470 = vadd.f32 0.0, %v1469
      %1471 = vmatmul.bf16.gmra.mxu0 %v894
      %v1472 = vpop.f32.mrf.mxu0
      %v1473 = vadd.f32 0.0, %v1472
      %v1474 = vpop.f32.mrf.mxu0
      %v1475 = vadd.f32 0.0, %v1474
      %1476 = vmatmul.bf16.gmra.mxu0 %v901
      %v1477 = vpop.f32.mrf.mxu0
      %v1478 = vadd.f32 0.0, %v1477
      %v1479 = vpop.f32.mrf.mxu0
      %v1480 = vadd.f32 0.0, %v1479
      %1481 = vmatmul.bf16.gmra.mxu0 %v908
      %v1482 = vpop.f32.mrf.mxu0
      %v1483 = vadd.f32 0.0, %v1482
      %v1484 = vpop.f32.mrf.mxu0
      %v1485 = vadd.f32 0.0, %v1484
      %1486 = vmatmul.bf16.gmra.mxu0 %v915
      %v1487 = vpop.f32.mrf.mxu0
      %v1488 = vadd.f32 0.0, %v1487
      %v1489 = vpop.f32.mrf.mxu0
      %v1490 = vadd.f32 0.0, %v1489
      %1491 = vmatmul.bf16.gmra.mxu0 %v922
      %v1492 = vpop.f32.mrf.mxu0
      %v1493 = vadd.f32 0.0, %v1492
      %v1494 = vpop.f32.mrf.mxu0
      %v1495 = vadd.f32 0.0, %v1494
      %1496 = vmatmul.bf16.gmra.mxu0 %v929
      %v1497 = vpop.f32.mrf.mxu0
      %v1498 = vadd.f32 0.0, %v1497
      %v1499 = vpop.f32.mrf.mxu0
      %v1500 = vadd.f32 0.0, %v1499
      %1501 = vmatmul.bf16.gmra.mxu0 %v936
      %v1502 = vpop.f32.mrf.mxu0
      %v1503 = vadd.f32 0.0, %v1502
      %v1504 = vpop.f32.mrf.mxu0
      %v1505 = vadd.f32 0.0, %v1504
      %1506 = vmatmul.bf16.gmra.mxu0 %v943
      %v1507 = vpop.f32.mrf.mxu0
      %v1508 = vadd.f32 0.0, %v1507
      %v1509 = vpop.f32.mrf.mxu0
      %v1510 = vadd.f32 0.0, %v1509
      %1511 = vmatmul.bf16.gmra.mxu0 %v950
      %v1512 = vpop.f32.mrf.mxu0
      %v1513 = vadd.f32 0.0, %v1512
      %v1514 = vpop.f32.mrf.mxu0
      %v1515 = vadd.f32 0.0, %v1514
      %1516 = vmatmul.bf16.gmra.mxu0 %v957
      %v1517 = vpop.f32.mrf.mxu0
      %v1518 = vadd.f32 0.0, %v1517
      %v1519 = vpop.f32.mrf.mxu0
      %v1520 = vadd.f32 0.0, %v1519
      %1521 = vdwg.mxu0
      %1522 = vmatpush.bf16.msra.mxu0 %v1291
      %1523 = vmatpush.bf16.msra.mxu0 %v1290
      %1524 = vmatpush.bf16.msra.mxu0 %v1289
      %1525 = vmatpush.bf16.msra.mxu0 %v1288
      %1526 = vmatpush.bf16.msra.mxu0 %v1287
      %1527 = vmatpush.bf16.msra.mxu0 %v1286
      %1528 = vmatpush.bf16.msra.mxu0 %v1285
      %1529 = vmatpush.bf16.msra.mxu0 %v1284
      %1530 = vmatmul.bf16.gmra.mxu0 %v853
      %v1531 = vpop.f32.mrf.mxu0
      %v1532 = vadd.f32 %v1443, %v1531
      %v1533 = vpop.f32.mrf.mxu0
      %v1534 = vadd.f32 %v1445, %v1533
      %1535 = vmatmul.bf16.gmra.mxu0 %v860
      %v1536 = vpop.f32.mrf.mxu0
      %v1537 = vadd.f32 %v1448, %v1536
      %v1538 = vpop.f32.mrf.mxu0
      %v1539 = vadd.f32 %v1450, %v1538
      %1540 = vmatmul.bf16.gmra.mxu0 %v867
      %v1541 = vpop.f32.mrf.mxu0
      %v1542 = vadd.f32 %v1453, %v1541
      %v1543 = vpop.f32.mrf.mxu0
      %v1544 = vadd.f32 %v1455, %v1543
      %1545 = vmatmul.bf16.gmra.mxu0 %v874
      %v1546 = vpop.f32.mrf.mxu0
      %v1547 = vadd.f32 %v1458, %v1546
      %v1548 = vpop.f32.mrf.mxu0
      %v1549 = vadd.f32 %v1460, %v1548
      %1550 = vmatmul.bf16.gmra.mxu0 %v881
      %v1551 = vpop.f32.mrf.mxu0
      %v1552 = vadd.f32 %v1463, %v1551
      %v1553 = vpop.f32.mrf.mxu0
      %v1554 = vadd.f32 %v1465, %v1553
      %1555 = vmatmul.bf16.gmra.mxu0 %v888
      %v1556 = vpop.f32.mrf.mxu0
      %v1557 = vadd.f32 %v1468, %v1556
      %v1558 = vpop.f32.mrf.mxu0
      %v1559 = vadd.f32 %v1470, %v1558
      %1560 = vmatmul.bf16.gmra.mxu0 %v895
      %v1561 = vpop.f32.mrf.mxu0
      %v1562 = vadd.f32 %v1473, %v1561
      %v1563 = vpop.f32.mrf.mxu0
      %v1564 = vadd.f32 %v1475, %v1563
      %1565 = vmatmul.bf16.gmra.mxu0 %v902
      %v1566 = vpop.f32.mrf.mxu0
      %v1567 = vadd.f32 %v1478, %v1566
      %v1568 = vpop.f32.mrf.mxu0
      %v1569 = vadd.f32 %v1480, %v1568
      %1570 = vmatmul.bf16.gmra.mxu0 %v909
      %v1571 = vpop.f32.mrf.mxu0
      %v1572 = vadd.f32 %v1483, %v1571
      %v1573 = vpop.f32.mrf.mxu0
      %v1574 = vadd.f32 %v1485, %v1573
      %1575 = vmatmul.bf16.gmra.mxu0 %v916
      %v1576 = vpop.f32.mrf.mxu0
      %v1577 = vadd.f32 %v1488, %v1576
      %v1578 = vpop.f32.mrf.mxu0
      %v1579 = vadd.f32 %v1490, %v1578
      %1580 = vmatmul.bf16.gmra.mxu0 %v923
      %v1581 = vpop.f32.mrf.mxu0
      %v1582 = vadd.f32 %v1493, %v1581
      %v1583 = vpop.f32.mrf.mxu0
      %v1584 = vadd.f32 %v1495, %v1583
      %1585 = vmatmul.bf16.gmra.mxu0 %v930
      %v1586 = vpop.f32.mrf.mxu0
      %v1587 = vadd.f32 %v1498, %v1586
      %v1588 = vpop.f32.mrf.mxu0
      %v1589 = vadd.f32 %v1500, %v1588
      %1590 = vmatmul.bf16.gmra.mxu0 %v937
      %v1591 = vpop.f32.mrf.mxu0
      %v1592 = vadd.f32 %v1503, %v1591
      %v1593 = vpop.f32.mrf.mxu0
      %v1594 = vadd.f32 %v1505, %v1593
      %1595 = vmatmul.bf16.gmra.mxu0 %v944
      %v1596 = vpop.f32.mrf.mxu0
      %v1597 = vadd.f32 %v1508, %v1596
      %v1598 = vpop.f32.mrf.mxu0
      %v1599 = vadd.f32 %v1510, %v1598
      %1600 = vmatmul.bf16.gmra.mxu0 %v951
      %v1601 = vpop.f32.mrf.mxu0
      %v1602 = vadd.f32 %v1513, %v1601
      %v1603 = vpop.f32.mrf.mxu0
      %v1604 = vadd.f32 %v1515, %v1603
      %1605 = vmatmul.bf16.gmra.mxu0 %v958
      %v1606 = vpop.f32.mrf.mxu0
      %v1607 = vadd.f32 %v1518, %v1606
      %v1608 = vpop.f32.mrf.mxu0
      %v1609 = vadd.f32 %v1520, %v1608
      %1610 = vdwg.mxu0
      %1611 = vmatpush.bf16.msra.mxu0 %v1299
      %1612 = vmatpush.bf16.msra.mxu0 %v1298
      %1613 = vmatpush.bf16.msra.mxu0 %v1297
      %1614 = vmatpush.bf16.msra.mxu0 %v1296
      %1615 = vmatpush.bf16.msra.mxu0 %v1295
      %1616 = vmatpush.bf16.msra.mxu0 %v1294
      %1617 = vmatpush.bf16.msra.mxu0 %v1293
      %1618 = vmatpush.bf16.msra.mxu0 %v1292
      %1619 = vmatmul.bf16.gmra.mxu0 %v854
      %v1620 = vpop.f32.mrf.mxu0
      %v1621 = vadd.f32 %v1532, %v1620
      %v1622 = vpop.f32.mrf.mxu0
      %v1623 = vadd.f32 %v1534, %v1622
      %1624 = vmatmul.bf16.gmra.mxu0 %v861
      %v1625 = vpop.f32.mrf.mxu0
      %v1626 = vadd.f32 %v1537, %v1625
      %v1627 = vpop.f32.mrf.mxu0
      %v1628 = vadd.f32 %v1539, %v1627
      %1629 = vmatmul.bf16.gmra.mxu0 %v868
      %v1630 = vpop.f32.mrf.mxu0
      %v1631 = vadd.f32 %v1542, %v1630
      %v1632 = vpop.f32.mrf.mxu0
      %v1633 = vadd.f32 %v1544, %v1632
      %1634 = vmatmul.bf16.gmra.mxu0 %v875
      %v1635 = vpop.f32.mrf.mxu0
      %v1636 = vadd.f32 %v1547, %v1635
      %v1637 = vpop.f32.mrf.mxu0
      %v1638 = vadd.f32 %v1549, %v1637
      %1639 = vmatmul.bf16.gmra.mxu0 %v882
      %v1640 = vpop.f32.mrf.mxu0
      %v1641 = vadd.f32 %v1552, %v1640
      %v1642 = vpop.f32.mrf.mxu0
      %v1643 = vadd.f32 %v1554, %v1642
      %1644 = vmatmul.bf16.gmra.mxu0 %v889
      %v1645 = vpop.f32.mrf.mxu0
      %v1646 = vadd.f32 %v1557, %v1645
      %v1647 = vpop.f32.mrf.mxu0
      %v1648 = vadd.f32 %v1559, %v1647
      %1649 = vmatmul.bf16.gmra.mxu0 %v896
      %v1650 = vpop.f32.mrf.mxu0
      %v1651 = vadd.f32 %v1562, %v1650
      %v1652 = vpop.f32.mrf.mxu0
      %v1653 = vadd.f32 %v1564, %v1652
      %1654 = vmatmul.bf16.gmra.mxu0 %v903
      %v1655 = vpop.f32.mrf.mxu0
      %v1656 = vadd.f32 %v1567, %v1655
      %v1657 = vpop.f32.mrf.mxu0
      %v1658 = vadd.f32 %v1569, %v1657
      %1659 = vmatmul.bf16.gmra.mxu0 %v910
      %v1660 = vpop.f32.mrf.mxu0
      %v1661 = vadd.f32 %v1572, %v1660
      %v1662 = vpop.f32.mrf.mxu0
      %v1663 = vadd.f32 %v1574, %v1662
      %1664 = vmatmul.bf16.gmra.mxu0 %v917
      %v1665 = vpop.f32.mrf.mxu0
      %v1666 = vadd.f32 %v1577, %v1665
      %v1667 = vpop.f32.mrf.mxu0
      %v1668 = vadd.f32 %v1579, %v1667
      %1669 = vmatmul.bf16.gmra.mxu0 %v924
      %v1670 = vpop.f32.mrf.mxu0
      %v1671 = vadd.f32 %v1582, %v1670
      %v1672 = vpop.f32.mrf.mxu0
      %v1673 = vadd.f32 %v1584, %v1672
      %1674 = vmatmul.bf16.gmra.mxu0 %v931
      %v1675 = vpop.f32.mrf.mxu0
      %v1676 = vadd.f32 %v1587, %v1675
      %v1677 = vpop.f32.mrf.mxu0
      %v1678 = vadd.f32 %v1589, %v1677
      %1679 = vmatmul.bf16.gmra.mxu0 %v938
      %v1680 = vpop.f32.mrf.mxu0
      %v1681 = vadd.f32 %v1592, %v1680
      %v1682 = vpop.f32.mrf.mxu0
      %v1683 = vadd.f32 %v1594, %v1682
      %1684 = vmatmul.bf16.gmra.mxu0 %v945
      %v1685 = vpop.f32.mrf.mxu0
      %v1686 = vadd.f32 %v1597, %v1685
      %v1687 = vpop.f32.mrf.mxu0
      %v1688 = vadd.f32 %v1599, %v1687
      %1689 = vmatmul.bf16.gmra.mxu0 %v952
      %v1690 = vpop.f32.mrf.mxu0
      %v1691 = vadd.f32 %v1602, %v1690
      %v1692 = vpop.f32.mrf.mxu0
      %v1693 = vadd.f32 %v1604, %v1692
      %1694 = vmatmul.bf16.gmra.mxu0 %v959
      %v1695 = vpop.f32.mrf.mxu0
      %v1696 = vadd.f32 %v1607, %v1695
      %v1697 = vpop.f32.mrf.mxu0
      %v1698 = vadd.f32 %v1609, %v1697
      %1699 = vdwg.mxu0
      %1700 = vmatpush.bf16.msra.mxu0 %v1307
      %1701 = vmatpush.bf16.msra.mxu0 %v1306
      %1702 = vmatpush.bf16.msra.mxu0 %v1305
      %1703 = vmatpush.bf16.msra.mxu0 %v1304
      %1704 = vmatpush.bf16.msra.mxu0 %v1303
      %1705 = vmatpush.bf16.msra.mxu0 %v1302
      %1706 = vmatpush.bf16.msra.mxu0 %v1301
      %1707 = vmatpush.bf16.msra.mxu0 %v1300
      %1708 = vmatmul.bf16.gmra.mxu0 %v855
      %v1709 = vpop.f32.mrf.mxu0
      %v1710 = vadd.f32 %v1621, %v1709
      %v1711 = vpop.f32.mrf.mxu0
      %v1712 = vadd.f32 %v1623, %v1711
      %1713 = vmatmul.bf16.gmra.mxu0 %v862
      %v1714 = vpop.f32.mrf.mxu0
      %v1715 = vadd.f32 %v1626, %v1714
      %v1716 = vpop.f32.mrf.mxu0
      %v1717 = vadd.f32 %v1628, %v1716
      %1718 = vmatmul.bf16.gmra.mxu0 %v869
      %v1719 = vpop.f32.mrf.mxu0
      %v1720 = vadd.f32 %v1631, %v1719
      %v1721 = vpop.f32.mrf.mxu0
      %v1722 = vadd.f32 %v1633, %v1721
      %1723 = vmatmul.bf16.gmra.mxu0 %v876
      %v1724 = vpop.f32.mrf.mxu0
      %v1725 = vadd.f32 %v1636, %v1724
      %v1726 = vpop.f32.mrf.mxu0
      %v1727 = vadd.f32 %v1638, %v1726
      %1728 = vmatmul.bf16.gmra.mxu0 %v883
      %v1729 = vpop.f32.mrf.mxu0
      %v1730 = vadd.f32 %v1641, %v1729
      %v1731 = vpop.f32.mrf.mxu0
      %v1732 = vadd.f32 %v1643, %v1731
      %1733 = vmatmul.bf16.gmra.mxu0 %v890
      %v1734 = vpop.f32.mrf.mxu0
      %v1735 = vadd.f32 %v1646, %v1734
      %v1736 = vpop.f32.mrf.mxu0
      %v1737 = vadd.f32 %v1648, %v1736
      %1738 = vmatmul.bf16.gmra.mxu0 %v897
      %v1739 = vpop.f32.mrf.mxu0
      %v1740 = vadd.f32 %v1651, %v1739
      %v1741 = vpop.f32.mrf.mxu0
      %v1742 = vadd.f32 %v1653, %v1741
      %1743 = vmatmul.bf16.gmra.mxu0 %v904
      %v1744 = vpop.f32.mrf.mxu0
      %v1745 = vadd.f32 %v1656, %v1744
      %v1746 = vpop.f32.mrf.mxu0
      %v1747 = vadd.f32 %v1658, %v1746
      %1748 = vmatmul.bf16.gmra.mxu0 %v911
      %v1749 = vpop.f32.mrf.mxu0
      %v1750 = vadd.f32 %v1661, %v1749
      %v1751 = vpop.f32.mrf.mxu0
      %v1752 = vadd.f32 %v1663, %v1751
      %1753 = vmatmul.bf16.gmra.mxu0 %v918
      %v1754 = vpop.f32.mrf.mxu0
      %v1755 = vadd.f32 %v1666, %v1754
      %v1756 = vpop.f32.mrf.mxu0
      %v1757 = vadd.f32 %v1668, %v1756
      %1758 = vmatmul.bf16.gmra.mxu0 %v925
      %v1759 = vpop.f32.mrf.mxu0
      %v1760 = vadd.f32 %v1671, %v1759
      %v1761 = vpop.f32.mrf.mxu0
      %v1762 = vadd.f32 %v1673, %v1761
      %1763 = vmatmul.bf16.gmra.mxu0 %v932
      %v1764 = vpop.f32.mrf.mxu0
      %v1765 = vadd.f32 %v1676, %v1764
      %v1766 = vpop.f32.mrf.mxu0
      %v1767 = vadd.f32 %v1678, %v1766
      %1768 = vmatmul.bf16.gmra.mxu0 %v939
      %v1769 = vpop.f32.mrf.mxu0
      %v1770 = vadd.f32 %v1681, %v1769
      %v1771 = vpop.f32.mrf.mxu0
      %v1772 = vadd.f32 %v1683, %v1771
      %1773 = vmatmul.bf16.gmra.mxu0 %v946
      %v1774 = vpop.f32.mrf.mxu0
      %v1775 = vadd.f32 %v1686, %v1774
      %v1776 = vpop.f32.mrf.mxu0
      %v1777 = vadd.f32 %v1688, %v1776
      %1778 = vmatmul.bf16.gmra.mxu0 %v953
      %v1779 = vpop.f32.mrf.mxu0
      %v1780 = vadd.f32 %v1691, %v1779
      %v1781 = vpop.f32.mrf.mxu0
      %v1782 = vadd.f32 %v1693, %v1781
      %1783 = vmatmul.bf16.gmra.mxu0 %v960
      %v1784 = vpop.f32.mrf.mxu0
      %v1785 = vadd.f32 %v1696, %v1784
      %v1786 = vpop.f32.mrf.mxu0
      %v1787 = vadd.f32 %v1698, %v1786
      %1788 = vdwg.mxu0
      %1789 = vmatpush.bf16.msra.mxu0 %v1315
      %1790 = vmatpush.bf16.msra.mxu0 %v1314
      %1791 = vmatpush.bf16.msra.mxu0 %v1313
      %1792 = vmatpush.bf16.msra.mxu0 %v1312
      %1793 = vmatpush.bf16.msra.mxu0 %v1311
      %1794 = vmatpush.bf16.msra.mxu0 %v1310
      %1795 = vmatpush.bf16.msra.mxu0 %v1309
      %1796 = vmatpush.bf16.msra.mxu0 %v1308
      %1797 = vmatmul.bf16.gmra.mxu0 %v856
      %v1798 = vpop.f32.mrf.mxu0
      %v1799 = vadd.f32 %v1710, %v1798
      %v1800 = vpop.f32.mrf.mxu0
      %v1801 = vadd.f32 %v1712, %v1800
      %1802 = vmatmul.bf16.gmra.mxu0 %v863
      %v1803 = vpop.f32.mrf.mxu0
      %v1804 = vadd.f32 %v1715, %v1803
      %v1805 = vpop.f32.mrf.mxu0
      %v1806 = vadd.f32 %v1717, %v1805
      %1807 = vmatmul.bf16.gmra.mxu0 %v870
      %v1808 = vpop.f32.mrf.mxu0
      %v1809 = vadd.f32 %v1720, %v1808
      %v1810 = vpop.f32.mrf.mxu0
      %v1811 = vadd.f32 %v1722, %v1810
      %1812 = vmatmul.bf16.gmra.mxu0 %v877
      %v1813 = vpop.f32.mrf.mxu0
      %v1814 = vadd.f32 %v1725, %v1813
      %v1815 = vpop.f32.mrf.mxu0
      %v1816 = vadd.f32 %v1727, %v1815
      %1817 = vmatmul.bf16.gmra.mxu0 %v884
      %v1818 = vpop.f32.mrf.mxu0
      %v1819 = vadd.f32 %v1730, %v1818
      %v1820 = vpop.f32.mrf.mxu0
      %v1821 = vadd.f32 %v1732, %v1820
      %1822 = vmatmul.bf16.gmra.mxu0 %v891
      %v1823 = vpop.f32.mrf.mxu0
      %v1824 = vadd.f32 %v1735, %v1823
      %v1825 = vpop.f32.mrf.mxu0
      %v1826 = vadd.f32 %v1737, %v1825
      %1827 = vmatmul.bf16.gmra.mxu0 %v898
      %v1828 = vpop.f32.mrf.mxu0
      %v1829 = vadd.f32 %v1740, %v1828
      %v1830 = vpop.f32.mrf.mxu0
      %v1831 = vadd.f32 %v1742, %v1830
      %1832 = vmatmul.bf16.gmra.mxu0 %v905
      %v1833 = vpop.f32.mrf.mxu0
      %v1834 = vadd.f32 %v1745, %v1833
      %v1835 = vpop.f32.mrf.mxu0
      %v1836 = vadd.f32 %v1747, %v1835
      %1837 = vmatmul.bf16.gmra.mxu0 %v912
      %v1838 = vpop.f32.mrf.mxu0
      %v1839 = vadd.f32 %v1750, %v1838
      %v1840 = vpop.f32.mrf.mxu0
      %v1841 = vadd.f32 %v1752, %v1840
      %1842 = vmatmul.bf16.gmra.mxu0 %v919
      %v1843 = vpop.f32.mrf.mxu0
      %v1844 = vadd.f32 %v1755, %v1843
      %v1845 = vpop.f32.mrf.mxu0
      %v1846 = vadd.f32 %v1757, %v1845
      %1847 = vmatmul.bf16.gmra.mxu0 %v926
      %v1848 = vpop.f32.mrf.mxu0
      %v1849 = vadd.f32 %v1760, %v1848
      %v1850 = vpop.f32.mrf.mxu0
      %v1851 = vadd.f32 %v1762, %v1850
      %1852 = vmatmul.bf16.gmra.mxu0 %v933
      %v1853 = vpop.f32.mrf.mxu0
      %v1854 = vadd.f32 %v1765, %v1853
      %v1855 = vpop.f32.mrf.mxu0
      %v1856 = vadd.f32 %v1767, %v1855
      %1857 = vmatmul.bf16.gmra.mxu0 %v940
      %v1858 = vpop.f32.mrf.mxu0
      %v1859 = vadd.f32 %v1770, %v1858
      %v1860 = vpop.f32.mrf.mxu0
      %v1861 = vadd.f32 %v1772, %v1860
      %1862 = vmatmul.bf16.gmra.mxu0 %v947
      %v1863 = vpop.f32.mrf.mxu0
      %v1864 = vadd.f32 %v1775, %v1863
      %v1865 = vpop.f32.mrf.mxu0
      %v1866 = vadd.f32 %v1777, %v1865
      %1867 = vmatmul.bf16.gmra.mxu0 %v954
      %v1868 = vpop.f32.mrf.mxu0
      %v1869 = vadd.f32 %v1780, %v1868
      %v1870 = vpop.f32.mrf.mxu0
      %v1871 = vadd.f32 %v1782, %v1870
      %1872 = vmatmul.bf16.gmra.mxu0 %v961
      %v1873 = vpop.f32.mrf.mxu0
      %v1874 = vadd.f32 %v1785, %v1873
      %v1875 = vpop.f32.mrf.mxu0
      %v1876 = vadd.f32 %v1787, %v1875
      %1877 = vdwg.mxu0
      %1878 = vmatpush.bf16.msra.mxu0 %v1323
      %1879 = vmatpush.bf16.msra.mxu0 %v1322
      %1880 = vmatpush.bf16.msra.mxu0 %v1321
      %1881 = vmatpush.bf16.msra.mxu0 %v1320
      %1882 = vmatpush.bf16.msra.mxu0 %v1319
      %1883 = vmatpush.bf16.msra.mxu0 %v1318
      %1884 = vmatpush.bf16.msra.mxu0 %v1317
      %1885 = vmatpush.bf16.msra.mxu0 %v1316
      %1886 = vmatmul.bf16.gmra.mxu0 %v857
      %v1887 = vpop.f32.mrf.mxu0
      %v1888 = vadd.f32 %v1799, %v1887
      %v1889 = vpop.f32.mrf.mxu0
      %v1890 = vadd.f32 %v1801, %v1889
      %1891 = vmatmul.bf16.gmra.mxu0 %v864
      %v1892 = vpop.f32.mrf.mxu0
      %v1893 = vadd.f32 %v1804, %v1892
      %v1894 = vpop.f32.mrf.mxu0
      %v1895 = vadd.f32 %v1806, %v1894
      %1896 = vmatmul.bf16.gmra.mxu0 %v871
      %v1897 = vpop.f32.mrf.mxu0
      %v1898 = vadd.f32 %v1809, %v1897
      %v1899 = vpop.f32.mrf.mxu0
      %v1900 = vadd.f32 %v1811, %v1899
      %1901 = vmatmul.bf16.gmra.mxu0 %v878
      %v1902 = vpop.f32.mrf.mxu0
      %v1903 = vadd.f32 %v1814, %v1902
      %v1904 = vpop.f32.mrf.mxu0
      %v1905 = vadd.f32 %v1816, %v1904
      %1906 = vmatmul.bf16.gmra.mxu0 %v885
      %v1907 = vpop.f32.mrf.mxu0
      %v1908 = vadd.f32 %v1819, %v1907
      %v1909 = vpop.f32.mrf.mxu0
      %v1910 = vadd.f32 %v1821, %v1909
      %1911 = vmatmul.bf16.gmra.mxu0 %v892
      %v1912 = vpop.f32.mrf.mxu0
      %v1913 = vadd.f32 %v1824, %v1912
      %v1914 = vpop.f32.mrf.mxu0
      %v1915 = vadd.f32 %v1826, %v1914
      %1916 = vmatmul.bf16.gmra.mxu0 %v899
      %v1917 = vpop.f32.mrf.mxu0
      %v1918 = vadd.f32 %v1829, %v1917
      %v1919 = vpop.f32.mrf.mxu0
      %v1920 = vadd.f32 %v1831, %v1919
      %1921 = vmatmul.bf16.gmra.mxu0 %v906
      %v1922 = vpop.f32.mrf.mxu0
      %v1923 = vadd.f32 %v1834, %v1922
      %v1924 = vpop.f32.mrf.mxu0
      %v1925 = vadd.f32 %v1836, %v1924
      %1926 = vmatmul.bf16.gmra.mxu0 %v913
      %v1927 = vpop.f32.mrf.mxu0
      %v1928 = vadd.f32 %v1839, %v1927
      %v1929 = vpop.f32.mrf.mxu0
      %v1930 = vadd.f32 %v1841, %v1929
      %1931 = vmatmul.bf16.gmra.mxu0 %v920
      %v1932 = vpop.f32.mrf.mxu0
      %v1933 = vadd.f32 %v1844, %v1932
      %v1934 = vpop.f32.mrf.mxu0
      %v1935 = vadd.f32 %v1846, %v1934
      %1936 = vmatmul.bf16.gmra.mxu0 %v927
      %v1937 = vpop.f32.mrf.mxu0
      %v1938 = vadd.f32 %v1849, %v1937
      %v1939 = vpop.f32.mrf.mxu0
      %v1940 = vadd.f32 %v1851, %v1939
      %1941 = vmatmul.bf16.gmra.mxu0 %v934
      %v1942 = vpop.f32.mrf.mxu0
      %v1943 = vadd.f32 %v1854, %v1942
      %v1944 = vpop.f32.mrf.mxu0
      %v1945 = vadd.f32 %v1856, %v1944
      %1946 = vmatmul.bf16.gmra.mxu0 %v941
      %v1947 = vpop.f32.mrf.mxu0
      %v1948 = vadd.f32 %v1859, %v1947
      %v1949 = vpop.f32.mrf.mxu0
      %v1950 = vadd.f32 %v1861, %v1949
      %1951 = vmatmul.bf16.gmra.mxu0 %v948
      %v1952 = vpop.f32.mrf.mxu0
      %v1953 = vadd.f32 %v1864, %v1952
      %v1954 = vpop.f32.mrf.mxu0
      %v1955 = vadd.f32 %v1866, %v1954
      %1956 = vmatmul.bf16.gmra.mxu0 %v955
      %v1957 = vpop.f32.mrf.mxu0
      %v1958 = vadd.f32 %v1869, %v1957
      %v1959 = vpop.f32.mrf.mxu0
      %v1960 = vadd.f32 %v1871, %v1959
      %1961 = vmatmul.bf16.gmra.mxu0 %v962
      %v1962 = vpop.f32.mrf.mxu0
      %v1963 = vadd.f32 %v1874, %v1962
      %v1964 = vpop.f32.mrf.mxu0
      %v1965 = vadd.f32 %v1876, %v1964
      %1966 = vdwg.mxu0
      %1967 = vmatpush.bf16.msra.mxu0 0
      %1968 = vmatpush.bf16.msra.mxu0 0
      %1969 = vmatpush.bf16.msra.mxu0 %v1329
      %1970 = vmatpush.bf16.msra.mxu0 %v1328
      %1971 = vmatpush.bf16.msra.mxu0 %v1327
      %1972 = vmatpush.bf16.msra.mxu0 %v1326
      %1973 = vmatpush.bf16.msra.mxu0 %v1325
      %1974 = vmatpush.bf16.msra.mxu0 %v1324
      %1975 = vmatmul.bf16.gmra.mxu0 %v1386
      %v1976 = vpop.f32.mrf.mxu0
      %v1977 = vadd.f32 %v1888, %v1976
      %v1978 = vpop.f32.mrf.mxu0
      %v1979 = vadd.f32 %v1890, %v1978
      %1980 = vmatmul.bf16.gmra.mxu0 %v1389
      %v1981 = vpop.f32.mrf.mxu0
      %v1982 = vadd.f32 %v1893, %v1981
      %v1983 = vpop.f32.mrf.mxu0
      %v1984 = vadd.f32 %v1895, %v1983
      %1985 = vmatmul.bf16.gmra.mxu0 %v1392
      %v1986 = vpop.f32.mrf.mxu0
      %v1987 = vadd.f32 %v1898, %v1986
      %v1988 = vpop.f32.mrf.mxu0
      %v1989 = vadd.f32 %v1900, %v1988
      %1990 = vmatmul.bf16.gmra.mxu0 %v1395
      %v1991 = vpop.f32.mrf.mxu0
      %v1992 = vadd.f32 %v1903, %v1991
      %v1993 = vpop.f32.mrf.mxu0
      %v1994 = vadd.f32 %v1905, %v1993
      %1995 = vmatmul.bf16.gmra.mxu0 %v1398
      %v1996 = vpop.f32.mrf.mxu0
      %v1997 = vadd.f32 %v1908, %v1996
      %v1998 = vpop.f32.mrf.mxu0
      %v1999 = vadd.f32 %v1910, %v1998
      %2000 = vmatmul.bf16.gmra.mxu0 %v1401
      %v2001 = vpop.f32.mrf.mxu0
      %v2002 = vadd.f32 %v1913, %v2001
      %v2003 = vpop.f32.mrf.mxu0
      %v2004 = vadd.f32 %v1915, %v2003
      %2005 = vmatmul.bf16.gmra.mxu0 %v1404
      %v2006 = vpop.f32.mrf.mxu0
      %v2007 = vadd.f32 %v1918, %v2006
      %v2008 = vpop.f32.mrf.mxu0
      %v2009 = vadd.f32 %v1920, %v2008
      %2010 = vmatmul.bf16.gmra.mxu0 %v1407
      %v2011 = vpop.f32.mrf.mxu0
      %v2012 = vadd.f32 %v1923, %v2011
      %v2013 = vpop.f32.mrf.mxu0
      %v2014 = vadd.f32 %v1925, %v2013
      %2015 = vmatmul.bf16.gmra.mxu0 %v1410
      %v2016 = vpop.f32.mrf.mxu0
      %v2017 = vadd.f32 %v1928, %v2016
      %v2018 = vpop.f32.mrf.mxu0
      %v2019 = vadd.f32 %v1930, %v2018
      %2020 = vmatmul.bf16.gmra.mxu0 %v1413
      %v2021 = vpop.f32.mrf.mxu0
      %v2022 = vadd.f32 %v1933, %v2021
      %v2023 = vpop.f32.mrf.mxu0
      %v2024 = vadd.f32 %v1935, %v2023
      %2025 = vmatmul.bf16.gmra.mxu0 %v1416
      %v2026 = vpop.f32.mrf.mxu0
      %v2027 = vadd.f32 %v1938, %v2026
      %v2028 = vpop.f32.mrf.mxu0
      %v2029 = vadd.f32 %v1940, %v2028
      %2030 = vmatmul.bf16.gmra.mxu0 %v1419
      %v2031 = vpop.f32.mrf.mxu0
      %v2032 = vadd.f32 %v1943, %v2031
      %v2033 = vpop.f32.mrf.mxu0
      %v2034 = vadd.f32 %v1945, %v2033
      %2035 = vmatmul.bf16.gmra.mxu0 %v1422
      %v2036 = vpop.f32.mrf.mxu0
      %v2037 = vadd.f32 %v1948, %v2036
      %v2038 = vpop.f32.mrf.mxu0
      %v2039 = vadd.f32 %v1950, %v2038
      %2040 = vmatmul.bf16.gmra.mxu0 %v1425
      %v2041 = vpop.f32.mrf.mxu0
      %v2042 = vadd.f32 %v1953, %v2041
      %v2043 = vpop.f32.mrf.mxu0
      %v2044 = vadd.f32 %v1955, %v2043
      %2045 = vmatmul.bf16.gmra.mxu0 %v1428
      %v2046 = vpop.f32.mrf.mxu0
      %v2047 = vadd.f32 %v1958, %v2046
      %v2048 = vpop.f32.mrf.mxu0
      %v2049 = vadd.f32 %v1960, %v2048
      %2050 = vmatmul.bf16.gmra.mxu0 %v1431
      %v2051 = vpop.f32.mrf.mxu0
      %v2052 = vadd.f32 %v1963, %v2051
      %v2053 = vpop.f32.mrf.mxu0
      %v2054 = vadd.f32 %v1965, %v2053
      %2055 = vdwg.mxu0
      %v2056 = vpack.c.bf16 %v1977, %v1977
      %v2057 = vpack.c.bf16 %v1979, %v1979
      %v2058 = vpack.c.bf16 %v1982, %v1982
      %v2059 = vpack.c.bf16 %v1984, %v1984
      %v2060 = vpack.c.bf16 %v1987, %v1987
      %v2061 = vpack.c.bf16 %v1989, %v1989
      %v2062 = vpack.c.bf16 %v1992, %v1992
      %v2063 = vpack.c.bf16 %v1994, %v1994
      %v2064 = vpack.c.bf16 %v1997, %v1997
      %v2065 = vpack.c.bf16 %v1999, %v1999
      %v2066 = vpack.c.bf16 %v2002, %v2002
      %v2067 = vpack.c.bf16 %v2004, %v2004
      %v2068 = vpack.c.bf16 %v2007, %v2007
      %v2069 = vpack.c.bf16 %v2009, %v2009
      %v2070 = vpack.c.bf16 %v2012, %v2012
      %v2071 = vpack.c.bf16 %v2014, %v2014
      %v2072 = vpack.c.bf16 %v2017, %v2017
      %v2073 = vpack.c.bf16 %v2019, %v2019
      %v2074 = vpack.c.bf16 %v2022, %v2022
      %v2075 = vpack.c.bf16 %v2024, %v2024
      %v2076 = vpack.c.bf16 %v2027, %v2027
      %v2077 = vpack.c.bf16 %v2029, %v2029
      %v2078 = vpack.c.bf16 %v2032, %v2032
      %v2079 = vpack.c.bf16 %v2034, %v2034
      %v2080 = vpack.c.bf16 %v2037, %v2037
      %v2081 = vpack.c.bf16 %v2039, %v2039
      %v2082 = vpack.c.bf16 %v2042, %v2042
      %v2083 = vpack.c.bf16 %v2044, %v2044
      %v2084 = vpack.c.bf16 %v2047, %v2047
      %v2085 = vpack.c.bf16 %v2049, %v2049
      %v2086 = vpack.c.bf16 %v2052, %v2052
      %v2087 = vpack.c.bf16 %v2054, %v2054
      %vm2088 = vcmask 257024
      %2089 = vst.msk [vmem:[%s249] sm:$0xf] %vm2088, %v2056
      %2090 = vst.msk [vmem:[%s249 + $0x4] sm:$0xf] %vm2088, %v2057
      %2091 = vst.msk [vmem:[%s249 + $0x8] sm:$0xf] %vm2088, %v2058
      %2092 = vst.msk [vmem:[%s249 + $0xc] sm:$0xf] %vm2088, %v2059
      %2093 = vst.msk [vmem:[%s249 + $0x10] sm:$0xf] %vm2088, %v2060
      %2094 = vst.msk [vmem:[%s249 + $0x14] sm:$0xf] %vm2088, %v2061
      %2095 = vst.msk [vmem:[%s249 + $0x18] sm:$0xf] %vm2088, %v2062
      %2096 = vst.msk [vmem:[%s249 + $0x1c] sm:$0xf] %vm2088, %v2063
      %2097 = vst.msk [vmem:[%s249 + $0x20] sm:$0xf] %vm2088, %v2064
      %2098 = vst.msk [vmem:[%s249 + $0x24] sm:$0xf] %vm2088, %v2065
      %2099 = vst.msk [vmem:[%s249 + $0x28] sm:$0xf] %vm2088, %v2066
      %2100 = vst.msk [vmem:[%s249 + $0x2c] sm:$0xf] %vm2088, %v2067
      %2101 = vst.msk [vmem:[%s249 + $0x30] sm:$0xf] %vm2088, %v2068
      %2102 = vst.msk [vmem:[%s249 + $0x34] sm:$0xf] %vm2088, %v2069
      %2103 = vst.msk [vmem:[%s249 + $0x38] sm:$0xf] %vm2088, %v2070
      %2104 = vst.msk [vmem:[%s249 + $0x3c] sm:$0xf] %vm2088, %v2071
      %2105 = vst.msk [vmem:[%s249 + $0x40] sm:$0xf] %vm2088, %v2072
      %2106 = vst.msk [vmem:[%s249 + $0x44] sm:$0xf] %vm2088, %v2073
      %2107 = vst.msk [vmem:[%s249 + $0x48] sm:$0xf] %vm2088, %v2074
      %2108 = vst.msk [vmem:[%s249 + $0x4c] sm:$0xf] %vm2088, %v2075
      %2109 = vst.msk [vmem:[%s249 + $0x50] sm:$0xf] %vm2088, %v2076
      %2110 = vst.msk [vmem:[%s249 + $0x54] sm:$0xf] %vm2088, %v2077
      %2111 = vst.msk [vmem:[%s249 + $0x58] sm:$0xf] %vm2088, %v2078
      %2112 = vst.msk [vmem:[%s249 + $0x5c] sm:$0xf] %vm2088, %v2079
      %2113 = vst.msk [vmem:[%s249 + $0x60] sm:$0xf] %vm2088, %v2080
      %2114 = vst.msk [vmem:[%s249 + $0x64] sm:$0xf] %vm2088, %v2081
      %2115 = vst.msk [vmem:[%s249 + $0x68] sm:$0xf] %vm2088, %v2082
      %2116 = vst.msk [vmem:[%s249 + $0x6c] sm:$0xf] %vm2088, %v2083
      %2117 = vst.msk [vmem:[%s249 + $0x70] sm:$0xf] %vm2088, %v2084
      %2118 = vst.msk [vmem:[%s249 + $0x74] sm:$0xf] %vm2088, %v2085
      %2119 = vst.msk [vmem:[%s249 + $0x78] sm:$0xf] %vm2088, %v2086
      %2120 = vst.msk [vmem:[%s249 + $0x7c] sm:$0xf] %vm2088, %v2087
      %v2121 = vld [vmem:[%s253] sm:$0x1]
      %v2122 = vadd.f32 %v1977, %v1979
      %v2123 = vadd.f32 %v2122, %v1982
      %v2124 = vadd.f32 %v2123, %v1984
      %v2125 = vadd.f32 %v2124, %v1987
      %v2126 = vadd.f32 %v2125, %v1989
      %v2127 = vadd.f32 %v2126, %v1992
      %v2128 = vadd.f32 %v2127, %v1994
      %v2129 = vadd.f32 %v2128, %v1997
      %v2130 = vadd.f32 %v2129, %v1999
      %v2131 = vadd.f32 %v2130, %v2002
      %v2132 = vadd.f32 %v2131, %v2004
      %v2133 = vadd.f32 %v2132, %v2007
      %v2134 = vadd.f32 %v2133, %v2009
      %v2135 = vadd.f32 %v2134, %v2012
      %v2136 = vadd.f32 %v2135, %v2014
      %v2137 = vadd.f32 %v2136, %v2017
      %v2138 = vadd.f32 %v2137, %v2019
      %v2139 = vadd.f32 %v2138, %v2022
      %v2140 = vadd.f32 %v2139, %v2024
      %v2141 = vadd.f32 %v2140, %v2027
      %v2142 = vadd.f32 %v2141, %v2029
      %v2143 = vadd.f32 %v2142, %v2032
      %v2144 = vadd.f32 %v2143, %v2034
      %v2145 = vadd.f32 %v2144, %v2037
      %v2146 = vadd.f32 %v2145, %v2039
      %v2147 = vadd.f32 %v2146, %v2042
      %v2148 = vadd.f32 %v2147, %v2044
      %v2149 = vadd.f32 %v2148, %v2047
      %v2150 = vadd.f32 %v2149, %v2049
      %v2151 = vadd.f32 %v2150, %v2052
      %v2152 = vadd.f32 %v2151, %v2054
      %v2153 = vrot.slane %v2152, 4
      %v2154 = vadd.f32 %v2152, %v2153
      %v2155 = vrot.slane %v2154, 2
      %v2156 = vadd.f32 %v2154, %v2155
      %v2157 = vrot.slane %v2156, 1
      %v2158 = vadd.f32 %v2156, %v2157
      %v2159 = vadd.f32 %v2121, %v2158
      %2160 = vst [vmem:[%s253] sm:$0x1] %v2159
      %v2161 = vld [vmem:[%s256] sm:$0x1]
      %v2162 = vmul.f32 %v1977, %v1977
      %v2163 = vmul.f32 %v1979, %v1979
      %v2164 = vmul.f32 %v1982, %v1982
      %v2165 = vmul.f32 %v1984, %v1984
      %v2166 = vmul.f32 %v1987, %v1987
      %v2167 = vmul.f32 %v1989, %v1989
      %v2168 = vmul.f32 %v1992, %v1992
      %v2169 = vmul.f32 %v1994, %v1994
      %v2170 = vmul.f32 %v1997, %v1997
      %v2171 = vmul.f32 %v1999, %v1999
      %v2172 = vmul.f32 %v2002, %v2002
      %v2173 = vmul.f32 %v2004, %v2004
      %v2174 = vmul.f32 %v2007, %v2007
      %v2175 = vmul.f32 %v2009, %v2009
      %v2176 = vmul.f32 %v2012, %v2012
      %v2177 = vmul.f32 %v2014, %v2014
      %v2178 = vmul.f32 %v2017, %v2017
      %v2179 = vmul.f32 %v2019, %v2019
      %v2180 = vmul.f32 %v2022, %v2022
      %v2181 = vmul.f32 %v2024, %v2024
      %v2182 = vmul.f32 %v2027, %v2027
      %v2183 = vmul.f32 %v2029, %v2029
      %v2184 = vmul.f32 %v2032, %v2032
      %v2185 = vmul.f32 %v2034, %v2034
      %v2186 = vmul.f32 %v2037, %v2037
      %v2187 = vmul.f32 %v2039, %v2039
      %v2188 = vmul.f32 %v2042, %v2042
      %v2189 = vmul.f32 %v2044, %v2044
      %v2190 = vmul.f32 %v2047, %v2047
      %v2191 = vmul.f32 %v2049, %v2049
      %v2192 = vmul.f32 %v2052, %v2052
      %v2193 = vmul.f32 %v2054, %v2054
      %v2194 = vadd.f32 %v2162, %v2163
      %v2195 = vadd.f32 %v2194, %v2164
      %v2196 = vadd.f32 %v2195, %v2165
      %v2197 = vadd.f32 %v2196, %v2166
      %v2198 = vadd.f32 %v2197, %v2167
      %v2199 = vadd.f32 %v2198, %v2168
      %v2200 = vadd.f32 %v2199, %v2169
      %v2201 = vadd.f32 %v2200, %v2170
      %v2202 = vadd.f32 %v2201, %v2171
      %v2203 = vadd.f32 %v2202, %v2172
      %v2204 = vadd.f32 %v2203, %v2173
      %v2205 = vadd.f32 %v2204, %v2174
      %v2206 = vadd.f32 %v2205, %v2175
      %v2207 = vadd.f32 %v2206, %v2176
      %v2208 = vadd.f32 %v2207, %v2177
      %v2209 = vadd.f32 %v2208, %v2178
      %v2210 = vadd.f32 %v2209, %v2179
      %v2211 = vadd.f32 %v2210, %v2180
      %v2212 = vadd.f32 %v2211, %v2181
      %v2213 = vadd.f32 %v2212, %v2182
      %v2214 = vadd.f32 %v2213, %v2183
      %v2215 = vadd.f32 %v2214, %v2184
      %v2216 = vadd.f32 %v2215, %v2185
      %v2217 = vadd.f32 %v2216, %v2186
      %v2218 = vadd.f32 %v2217, %v2187
      %v2219 = vadd.f32 %v2218, %v2188
      %v2220 = vadd.f32 %v2219, %v2189
      %v2221 = vadd.f32 %v2220, %v2190
      %v2222 = vadd.f32 %v2221, %v2191
      %v2223 = vadd.f32 %v2222, %v2192
      %v2224 = vadd.f32 %v2223, %v2193
      %v2225 = vrot.slane %v2224, 4
      %v2226 = vadd.f32 %v2224, %v2225
      %v2227 = vrot.slane %v2226, 2
      %v2228 = vadd.f32 %v2226, %v2227
      %v2229 = vrot.slane %v2228, 1
      %v2230 = vadd.f32 %v2228, %v2229
      %v2231 = vadd.f32 %v2161, %v2230
      %2232 = vst [vmem:[%s256] sm:$0x1] %v2231
      %s2233 = smul.u32 32, %s21
      %p2234 = scmp.lt.s32.totalorder %s20, 1
      %s2235 = scalar_select %p2234, %s20, 1
      %p2236 = scmp.lt.s32.totalorder %s2233, 63
      %s2237 = scalar_select %p2236, %s2233, 63
      %s2238 = smul.addr %s2235, 64
      %s2239 = sadd.s32 %s2237, %s2238
      %s2240 = smul.addr %s2239, 4
      %s2241 = scalar_lea.vmem %s2, %s2240
      %p2242 = scmp.lt.s32.totalorder %s20, 1
      %s2243 = scalar_select %p2242, %s20, 1
      %s2244 = scalar_lea.vmem %s3, %s2243
      %p2245 = scmp.lt.s32.totalorder %s20, 1
      %s2246 = scalar_select %p2245, %s20, 1
      %s2247 = scalar_lea.vmem %s4, %s2246
      // Predicated region
      $region33: #{double_conv_block_forward.6} parent=27 // pred_check
        %p2248 = pneg %p97
      $region34: #{double_conv_block_forward.6} parent=27 // pred_check_branch
        %2250 = sbr.rel (%p2248) target = $region36
      $region35: #{double_conv_block_forward.6} parent=27 // pred_region
        %s2251 = smul.u32 32, %s21
      $region36: #{double_conv_block_forward.6} parent=27 // pred_fallthru
        _
      // Predicated region
      $region37: #{double_conv_block_forward.6} parent=27 // pred_check
        %p2252 = pneg %p123
      $region38: #{double_conv_block_forward.6} parent=27 // pred_check_branch
        %2254 = sbr.rel (%p2252) target = $region40
      $region39: #{double_conv_block_forward.6} parent=27 // pred_region
        _
      $region40: #{double_conv_block_forward.6} parent=27 // pred_fallthru
        _
      // Predicated region
      $region41: #{double_conv_block_forward.6} parent=27 // pred_check
        %p2255 = pneg %p149
      $region42: #{double_conv_block_forward.6} parent=27 // pred_check_branch
        %2257 = sbr.rel (%p2255) target = $region44
      $region43: #{double_conv_block_forward.6} parent=27 // pred_region
        _
      $region44: #{double_conv_block_forward.6} parent=27 // pred_fallthru
        _
    $region28: #{double_conv_block_forward.6} parent=5 // pred_fallthru
      _
    %p2258 = scmp.le.s32.totalorder 2, %s11
    // Predicated region
    $region45: #{double_conv_block_forward.6} parent=5 // pred_check
      %p2259 = pneg %p2258
    $region46: #{double_conv_block_forward.6} parent=5 // pred_check_branch
      %2261 = sbr.rel (%p2259) target = $region48
    $region47: #{double_conv_block_forward.6} parent=5 // pred_region
      %s2262 = ssub.s32 %s11, 2
      // Predicated region
      $region49: #{double_conv_block_forward.6} parent=47 // pred_check
        %p2263 = pneg %p103
      $region50: #{double_conv_block_forward.6} parent=47 // pred_check_branch
        %2265 = sbr.rel (%p2263) target = $region52
      $region51: #{double_conv_block_forward.6} parent=47 // pred_region
        %s2266 = smul.u32 32, %s23
        %p2267 = scmp.lt.s32.totalorder %s22, 1
        %s2268 = scalar_select %p2267, %s22, 1
        %p2269 = scmp.lt.s32.totalorder %s2266, 63
        %s2270 = scalar_select %p2269, %s2266, 63
        %s2271 = smul.addr %s2268, 64
        %s2272 = sadd.s32 %s2270, %s2271
        %s2273 = smul.addr %s2272, 4
        %s2274 = scalar_lea.vmem %s2, %s2273
      $region52: #{double_conv_block_forward.6} parent=47 // pred_fallthru
        _
      // Predicated region
      $region53: #{double_conv_block_forward.6} parent=47 // pred_check
        %p2275 = pneg %p129
      $region54: #{double_conv_block_forward.6} parent=47 // pred_check_branch
        %2277 = sbr.rel (%p2275) target = $region56
      $region55: #{double_conv_block_forward.6} parent=47 // pred_region
        %p2278 = scmp.lt.s32.totalorder %s22, 1
        %s2279 = scalar_select %p2278, %s22, 1
        %s2280 = scalar_lea.vmem %s3, %s2279
      $region56: #{double_conv_block_forward.6} parent=47 // pred_fallthru
        _
      // Predicated region
      $region57: #{double_conv_block_forward.6} parent=47 // pred_check
        %p2281 = pneg %p155
      $region58: #{double_conv_block_forward.6} parent=47 // pred_check_branch
        %2283 = sbr.rel (%p2281) target = $region60
      $region59: #{double_conv_block_forward.6} parent=47 // pred_region
        %p2284 = scmp.lt.s32.totalorder %s22, 1
        %s2285 = scalar_select %p2284, %s22, 1
        %s2286 = scalar_lea.vmem %s4, %s2285
      $region60: #{double_conv_block_forward.6} parent=47 // pred_fallthru
        _
    $region48: #{double_conv_block_forward.6} parent=5 // pred_fallthru
      _
  $region6: #{double_conv_block_forward.6} parent=0 // loop_footer
    %s15 = sadd.s32 1, %s11
  $region7: #{double_conv_block_forward.6} parent=0 // loop_footer_branch
    %10 = sbr.rel target = $region3
  $region8: #{double_conv_block_forward.6} parent=0 // loop_exit
    _

</llo_original>
